<compile_context>
chip_gen: v5e
topology: v5e:2x2
jax: 0.10.0
libtpu: 0.0.40
codegen_flags: <defaults>
</compile_context>

<pallas_src>
import jax
import jax.numpy as jnp
from jax.experimental import pallas as pl
from jax.experimental.pallas import tpu as pltpu


def _rotary_freqs_kernel(inv_row_ref, out_ref):
    """Writes one (tile_rows, half_dim) tile of freqs = outer(t, inv_freq)."""
    tile_rows, half_dim = out_ref.shape
    base = pl.program_id(0) * tile_rows
    row = jax.lax.broadcasted_iota(jnp.int32, (tile_rows, half_dim), 0) + base
    t = row.astype(jnp.float32)                      # exact for indices < 2**24
    out_ref[...] = t * inv_row_ref[...]              # broadcast over sublanes (VPU)


def rotary_embedding_freqs(seq_len: int, dim: int, *,
                           target_block_bytes: int = 4 * 1024 * 1024,
                           min_pallas_out_bytes: int = 4 * 1024 * 1024,
                           min_tiles: int = 4) -> jax.Array:
    """Pallas equivalent of RotaryEmbedding(dim).forward(seq_len, device)."""
    assert dim >= 2 and dim % 2 == 0
    half_dim = dim // 2
    # Deterministic "buffer" init, exactly as in the PyTorch __init__.
    inv_freq = 1.0 / (10000.0 ** (jnp.arange(0, dim, 2, dtype=jnp.float32) / dim))

    out_bytes = seq_len * half_dim * 4
    if out_bytes <= min_pallas_out_bytes or seq_len < 8:
        # Small outputs: launch + per-grid-step overhead dwarfs the work and XLA's
        # fused broadcast-multiply is already at the HBM roofline here.
        t = jnp.arange(seq_len, dtype=jnp.float32)
        return t[:, None] * inv_freq[None, :]

    # ---- Tile sizing (store-bound: big blocks, but >= min_tiles for v7x megacore) --
    lane_width = ((half_dim + 127) // 128) * 128     # VMEM rows pad to 128 lanes
    row_bytes = lane_width * 4
    tile_rows = max(8, min(seq_len, target_block_bytes // row_bytes) // 8 * 8)
    num_tiles = pl.cdiv(seq_len, tile_rows)
    if num_tiles < min_tiles and seq_len >= min_tiles * 8:
        tile_rows = max(8, (pl.cdiv(seq_len, min_tiles) + 7) // 8 * 8)
        num_tiles = pl.cdiv(seq_len, tile_rows)

    block_bytes = tile_rows * row_bytes
    # Double-buffered output + tiny input + headroom; set explicitly so v5e's 16 MiB
    # scoped default is never the silent limiter and the larger blocks stay legal.
    vmem_limit = int(min(2 * block_bytes + (2 << 20), 96 << 20))

    inv_row = inv_freq.reshape(1, half_dim)

    return pl.pallas_call(
        _rotary_freqs_kernel,
        out_shape=jax.ShapeDtypeStruct((seq_len, half_dim), jnp.float32),
        grid=(num_tiles,),
        in_specs=[pl.BlockSpec((1, half_dim), lambda i: (0, 0))],
        out_specs=pl.BlockSpec((tile_rows, half_dim), lambda i: (i, 0)),
        compiler_params=pltpu.CompilerParams(
            dimension_semantics=("parallel",),
            vmem_limit_bytes=vmem_limit),
    )(inv_row)


def _reference(seq_len: int, dim: int) -> jax.Array:
    inv_freq = 1.0 / (10000.0 ** (jnp.arange(0, dim, 2, dtype=jnp.float32) / dim))
    t = jnp.arange(seq_len, dtype=jnp.float32)
    return jnp.einsum("i,j->ij", t, inv_freq)


if __name__ == "__main__":
    # The module's forward has no tensor inputs (only seq_len); the PRNG key is
    # created for determinism-convention only — nothing random is consumed.
    _ = jax.random.PRNGKey(0)

    # Small shape implied by the module (seq=8, dim=32) -> jnp fast path.
    out_small = jax.block_until_ready(rotary_embedding_freqs(8, 32))
    assert out_small.shape == (8, 16)
    assert out_small.dtype == jnp.float32
    assert jnp.allclose(out_small, _reference(8, 32), atol=1e-6, rtol=1e-6)

    # Larger shapes that exercise the Pallas path:
    #   (65536, 128): 16 MiB output, half_dim < 128 (padded-lane stores), 8 tiles
    #   (40000,  64): ragged last tile (seq not a multiple of tile_rows)
    #   (16384, 256): half_dim == 128 dense lanes, min-tiles rebalance path (4 tiles)
    for seq_len, dim in ((65536, 128), (40000, 64), (16384, 256)):
        out = jax.block_until_ready(rotary_embedding_freqs(seq_len, dim))
        ref = _reference(seq_len, dim)
        assert out.shape == ref.shape
        assert out.dtype == jnp.float32
        assert jnp.allclose(out, ref, atol=1e-6, rtol=1e-6)

    print("KERNEL_OK")
</pallas_src>

<mosaic_0001>
module attributes {stable_mosaic.version = 11 : i64} {
  func.func @_rotary_freqs_kernel(%arg0: i32, %arg1: memref<1x64xf32, #tpu.memory_space<vmem>>, %arg2: memref<8192x64xf32, #tpu.memory_space<vmem>>) attributes {dimension_semantics = [#tpu.dimension_semantics<parallel>], iteration_bounds = array<i64: 8>, scalar_prefetch = 0 : i64, scratch_operands = 0 : i64, tpu.core_type = #tpu.core_type<tc>, window_params = [{pipeline_mode = #tpu.pipeline_mode<synchronous>, transform_indices = @transform_0, window_bounds = array<i64: 1, 64>}, {transform_indices = @transform_1, window_bounds = array<i64: 8192, 64>}]} {
    %c8192_i32 = arith.constant 8192 : i32
    %0 = arith.muli %arg0, %c8192_i32 : i32
    %1 = tpu.iota {dimensions = array<i32: 0>} : vector<8192x64xi32>
    %2 = vector.broadcast %0 : i32 to vector<8192x64xi32>
    %3 = arith.addi %1, %2 : vector<8192x64xi32>
    %4 = arith.sitofp %3 : vector<8192x64xi32> to vector<8192x64xf32>
    %c0 = arith.constant 0 : index
    %c0_0 = arith.constant 0 : index
    %5 = vector.load %arg1[%c0, %c0_0] : memref<1x64xf32, #tpu.memory_space<vmem>>, vector<1x64xf32>
    %6 = vector.broadcast %5 : vector<1x64xf32> to vector<8192x64xf32>
    %7 = arith.mulf %4, %6 : vector<8192x64xf32>
    %c0_1 = arith.constant 0 : index
    %c0_2 = arith.constant 0 : index
    %8 = vector.load %arg2[%c0_1, %c0_2] : memref<8192x64xf32, #tpu.memory_space<vmem>>, vector<8192x64xf32>
    tpu.vector_store %arg2[%c0_1, %c0_2], %7 {strides = array<i32>} : memref<8192x64xf32, #tpu.memory_space<vmem>>, vector<8192x64xf32>,
    return
  }
  func.func @transform_0(%arg0: i32) -> (i32, i32) {
    %c0_i32 = arith.constant 0 : i32
    %c0_i32_0 = arith.constant 0 : i32
    %c0_i32_1 = arith.constant 0 : i32
    return %c0_i32, %c0_i32_0 : i32, i32
  }
  func.func @transform_1(%arg0: i32) -> (i32, i32) {
    %c0_i32 = arith.constant 0 : i32
    %c0_i32_0 = arith.constant 0 : i32
    return %arg0, %c0_i32 : i32, i32
  }
}

</mosaic_0001>

<llo_original>
// kernel: tpu_custom_call.1
$region0: #{tpu_custom_call.1}
  #allocation0 [shape = 'u32[]', space=smem, size = 0x4, offset = 0x4, fixed_abs, tag = 'smem constant byte address 0x4 - core index']
  #allocation1 [shape = 'u32[72,128]{1,0:T(1,128)}', space=vmem, size = 0x9000, scoped, tag = 'internal scratch']
  %s0 = inlined_call_operand.hbm [shape: f32[1,64], index: 0, kind: input, shape index: {}]
  %s1 = inlined_call_operand.vmem [shape: f32[65536,64], index: 1, kind: output, shape index: {}]
  %s2 = sld [smem:[#allocation0]]
  $region41: #{tpu_custom_call.1} parent=0
    _
  %s4 = ssub.s32 1, %s2
  %s5 = scalar_select 0, %s4, %s2
  $region1: #{tpu_custom_call.1} parent=0
    #allocation2 [shape = 'u8[512]{0}', space=vmem, size = 0x400, scoped, tag = 'input window, operand 0, single buffered']
    #allocation3 [shape = 's32[2]{0}', space=sflag, size = 0x8, scoped, tag = 'scoped memory for tpu_custom_call.1']
    %6 = vsyncpa [#allocation3], 0
    loop: start=0, step=1, limit=10
    $region2: #{tpu_custom_call.1} parent=1 // loop_pre_header
      _
    $region3: #{tpu_custom_call.1} parent=1 // loop_header
      %s8 = sphi 0, %s12
      %p9 = scmp.ge.s32.totalorder %s8, 10
      %s16 = sphi 0, %s16
      %s18 = sphi 0, %s16
      %s19 = sphi 0, %s18
      %s33 = sphi 0, %s19
      %s39 = sphi 0, %s41
      %s42 = sphi 0, %s39
      %s43 = sphi 0, %s42
      %s59 = sphi 0, %s43
    $region4: #{tpu_custom_call.1} parent=1 // loop_header_branch
      %11 = sbr.rel (%p9) target = $region8
    $region5: #{tpu_custom_call.1} parent=1 // loop_body
      %s13 = ssub.s32 %s8, 1
      %s14 = ssub.s32 %s8, 2
      %s15 = sadd.s32 %s8, 1
      %s17 = sadd.s32 %s16, 1
      %p20 = scmp.eq.s32.totalorder %s8, 7
      %p21 = scmp.ne.s32.totalorder %s16, %s18
      %p22 = scmp.eq.s32.totalorder %s8, 0
      %p23 = por %p21, %p22
      %p24 = scmp.ne.s32.totalorder %s16, %s18
      %p25 = scmp.eq.s32.totalorder %s13, 7
      %p26 = por %p24, %p25
      %p27 = scmp.ne.s32.totalorder %s18, %s19
      %p28 = scmp.eq.s32.totalorder %s13, 0
      %p29 = por %p27, %p28
      %p30 = scmp.ne.s32.totalorder %s18, %s19
      %p31 = scmp.eq.s32.totalorder %s14, 7
      %p32 = por %p30, %p31
      %p34 = scmp.ne.s32.totalorder %s19, %s33
      %p35 = scmp.eq.s32.totalorder %s14, 0
      %p36 = por %p34, %p35
      %s37 = ssub.s32 %s8, %s15
      %p38 = scmp.eq.s32.totalorder %s37, 0
      %s40 = sadd.s32 %s39, 1
      %s41 = scalar_select %p38, %s39, %s40
      %p44 = pneg %p38
      %p45 = scmp.eq.s32.totalorder %s8, 7
      %p46 = por %p44, %p45
      %p47 = scmp.ne.s32.totalorder %s39, %s42
      %p48 = scmp.eq.s32.totalorder %s8, 0
      %p49 = por %p47, %p48
      %p50 = scmp.ne.s32.totalorder %s39, %s42
      %p51 = scmp.eq.s32.totalorder %s13, 7
      %p52 = por %p50, %p51
      %p53 = scmp.ne.s32.totalorder %s42, %s43
      %p54 = scmp.eq.s32.totalorder %s13, 0
      %p55 = por %p53, %p54
      %p56 = scmp.ne.s32.totalorder %s42, %s43
      %p57 = scmp.eq.s32.totalorder %s14, 7
      %p58 = por %p56, %p57
      %p60 = scmp.ne.s32.totalorder %s43, %s59
      %p61 = scmp.eq.s32.totalorder %s14, 0
      %p62 = por %p60, %p61
      %p63 = scmp.le.s32.totalorder 1, %s8
      %p64 = scmp.lt.s32.totalorder %s8, 9
      %p65 = pnand %p63, %p64
      %p66 = pneg %p65
      // Predicated region
      $region9: #{tpu_custom_call.1} parent=5 // pred_check
        _
      $region10: #{tpu_custom_call.1} parent=5 // pred_check_branch
        %68 = sbr.rel (%p65) target = $region12
      $region11: #{tpu_custom_call.1} parent=5 // pred_region
        %s69 = ssub.s32 %s8, 1
        // Predicated region
        $region13: #{tpu_custom_call.1} parent=11 // pred_check
          %p70 = pneg %p29
        $region14: #{tpu_custom_call.1} parent=11 // pred_check_branch
          %72 = sbr.rel (%p70) target = $region16
        $region15: #{tpu_custom_call.1} parent=11 // pred_region
          %74 = vsyncadd [#allocation3], 0
          %s76 = sshll.u32 %s0, 4
          %s77 = int_to_ptr.hbm [resolvable:$true] %s76
          %s78 = sshll.u32 [#allocation2], 4
          %s79 = int_to_ptr.vmem [resolvable:$true] %s78
          %81 = dma.hbm_to_vmem [thread:$0]  %s77, 16, %s79, [#allocation3]
        $region16: #{tpu_custom_call.1} parent=11 // pred_fallthru
          _
      $region12: #{tpu_custom_call.1} parent=5 // pred_fallthru
        _
      %p82 = scmp.lt.s32.totalorder %s8, 8
      // Predicated region
      $region17: #{tpu_custom_call.1} parent=5 // pred_check
        %p83 = pneg %p82
      $region18: #{tpu_custom_call.1} parent=5 // pred_check_branch
        %85 = sbr.rel (%p83) target = $region20
      $region19: #{tpu_custom_call.1} parent=5 // pred_region
        _
      $region20: #{tpu_custom_call.1} parent=5 // pred_fallthru
        _
      %p86 = scmp.le.s32.totalorder 1, %s8
      %p87 = scmp.lt.s32.totalorder %s8, 9
      %p88 = pnand %p86, %p87
      %p89 = pneg %p88
      // Predicated region
      $region21: #{tpu_custom_call.1} parent=5 // pred_check
        _
      $region22: #{tpu_custom_call.1} parent=5 // pred_check_branch
        %91 = sbr.rel (%p88) target = $region24
      $region23: #{tpu_custom_call.1} parent=5 // pred_region
        %s92 = ssub.s32 %s8, 1
        // Predicated region
        $region25: #{tpu_custom_call.1} parent=23 // pred_check
          %p93 = pneg %p29
        $region26: #{tpu_custom_call.1} parent=23 // pred_check_branch
          %95 = sbr.rel (%p93) target = $region28
        $region27: #{tpu_custom_call.1} parent=23 // pred_region
          %97 = dma.done [#allocation3], 16
        $region28: #{tpu_custom_call.1} parent=23 // pred_fallthru
          _
        %p98 = pneg %p29
        %p99 = pneg %p26
        %p100 = pneg %p55
        %p101 = pneg %p52
        %s102 = smul.u32 1024, %s13
        %p103 = scmp.lt.s32.totalorder %s102, 8191
        %s104 = scalar_select %p103, %s102, 8191
        %s105 = smul.addr %s104, 8
        %s106 = scalar_lea.vmem %s1, %s105
        %s107 = smul.u32 1024, %s13
        %p108 = scmp.lt.s32.totalorder %s107, 8191
        %s109 = scalar_select %p108, %s107, 8191
        %s110 = smul.addr %s109, 8
        %s111 = scalar_lea.vmem %s1, %s110
        %s112 = smul.u32 1024, %s13
        %s113 = smul.u32 %s13, 8192
        %v114 = vlaneseq
        %v115 = vshrl.u32 %v114, 7
        %v116 = vadd.s32 %v115, 8
        %v117 = vadd.s32 %v115, 16
        %v118 = vadd.s32 %v115, 24
        %v119 = vadd.s32 %v115, 32
        %v120 = vadd.s32 %v115, 40
        %v121 = vadd.s32 %v115, 48
        %v122 = vadd.s32 %v115, 56
        %v123 = vadd.s32 %v115, 64
        %v124 = vadd.s32 %v115, 72
        %v125 = vadd.s32 %v115, 80
        %v126 = vadd.s32 %v115, 88
        %v127 = vadd.s32 %v115, 96
        %v128 = vadd.s32 %v115, 104
        %v129 = vadd.s32 %v115, 112
        %v130 = vadd.s32 %v115, 120
        %v131 = vadd.s32 %v115, 128
        %v132 = vadd.s32 %v115, 136
        %v133 = vadd.s32 %v115, 144
        %v134 = vadd.s32 %v115, 152
        %v135 = vadd.s32 %v115, 160
        %v136 = vadd.s32 %v115, 168
        %v137 = vadd.s32 %v115, 176
        %v138 = vadd.s32 %v115, 184
        %v139 = vadd.s32 %v115, 192
        %v140 = vadd.s32 %v115, 200
        %v141 = vadd.s32 %v115, 208
        %v142 = vadd.s32 %v115, 216
        %v143 = vadd.s32 %v115, 224
        %v144 = vadd.s32 %v115, 232
        %v145 = vadd.s32 %v115, 240
        %v146 = vadd.s32 %v115, 248
        %v147 = vadd.s32 %v115, 256
        %v148 = vadd.s32 %v115, 264
        %v149 = vadd.s32 %v115, 272
        %v150 = vadd.s32 %v115, 280
        %v151 = vadd.s32 %v115, 288
        %v152 = vadd.s32 %v115, 296
        %v153 = vadd.s32 %v115, 304
        %v154 = vadd.s32 %v115, 312
        %v155 = vadd.s32 %v115, 320
        %v156 = vadd.s32 %v115, 328
        %v157 = vadd.s32 %v115, 336
        %v158 = vadd.s32 %v115, 344
        %v159 = vadd.s32 %v115, 352
        %v160 = vadd.s32 %v115, 360
        %v161 = vadd.s32 %v115, 368
        %v162 = vadd.s32 %v115, 376
        %v163 = vadd.s32 %v115, 384
        %v164 = vadd.s32 %v115, 392
        %v165 = vadd.s32 %v115, 400
        %v166 = vadd.s32 %v115, 408
        %v167 = vadd.s32 %v115, 416
        %v168 = vadd.s32 %v115, 424
        %v169 = vadd.s32 %v115, 432
        %v170 = vadd.s32 %v115, 440
        %v171 = vadd.s32 %v115, 448
        %v172 = vadd.s32 %v115, 456
        %v173 = vadd.s32 %v115, 464
        %v174 = vadd.s32 %v115, 472
        %v175 = vadd.s32 %v115, 480
        %v176 = vadd.s32 %v115, 488
        %v177 = vadd.s32 %v115, 496
        %v178 = vadd.s32 %v115, 504
        %v179 = vadd.s32 %v115, 512
        %v180 = vadd.s32 %v115, 520
        %v181 = vadd.s32 %v115, 528
        %v182 = vadd.s32 %v115, 536
        %v183 = vadd.s32 %v115, 544
        %v184 = vadd.s32 %v115, 552
        %v185 = vadd.s32 %v115, 560
        %v186 = vadd.s32 %v115, 568
        %v187 = vadd.s32 %v115, 576
        %v188 = vadd.s32 %v115, 584
        %v189 = vadd.s32 %v115, 592
        %v190 = vadd.s32 %v115, 600
        %v191 = vadd.s32 %v115, 608
        %v192 = vadd.s32 %v115, 616
        %v193 = vadd.s32 %v115, 624
        %v194 = vadd.s32 %v115, 632
        %v195 = vadd.s32 %v115, 640
        %v196 = vadd.s32 %v115, 648
        %v197 = vadd.s32 %v115, 656
        %v198 = vadd.s32 %v115, 664
        %v199 = vadd.s32 %v115, 672
        %v200 = vadd.s32 %v115, 680
        %v201 = vadd.s32 %v115, 688
        %v202 = vadd.s32 %v115, 696
        %v203 = vadd.s32 %v115, 704
        %v204 = vadd.s32 %v115, 712
        %v205 = vadd.s32 %v115, 720
        %v206 = vadd.s32 %v115, 728
        %v207 = vadd.s32 %v115, 736
        %v208 = vadd.s32 %v115, 744
        %v209 = vadd.s32 %v115, 752
        %v210 = vadd.s32 %v115, 760
        %v211 = vadd.s32 %v115, 768
        %v212 = vadd.s32 %v115, 776
        %v213 = vadd.s32 %v115, 784
        %v214 = vadd.s32 %v115, 792
        %v215 = vadd.s32 %v115, 800
        %v216 = vadd.s32 %v115, 808
        %v217 = vadd.s32 %v115, 816
        %v218 = vadd.s32 %v115, 824
        %v219 = vadd.s32 %v115, 832
        %v220 = vadd.s32 %v115, 840
        %v221 = vadd.s32 %v115, 848
        %v222 = vadd.s32 %v115, 856
        %v223 = vadd.s32 %v115, 864
        %v224 = vadd.s32 %v115, 872
        %v225 = vadd.s32 %v115, 880
        %v226 = vadd.s32 %v115, 888
        %v227 = vadd.s32 %v115, 896
        %v228 = vadd.s32 %v115, 904
        %v229 = vadd.s32 %v115, 912
        %v230 = vadd.s32 %v115, 920
        %v231 = vadd.s32 %v115, 928
        %v232 = vadd.s32 %v115, 936
        %v233 = vadd.s32 %v115, 944
        %v234 = vadd.s32 %v115, 952
        %v235 = vadd.s32 %v115, 960
        %v236 = vadd.s32 %v115, 968
        %v237 = vadd.s32 %v115, 976
        %v238 = vadd.s32 %v115, 984
        %v239 = vadd.s32 %v115, 992
        %v240 = vadd.s32 %v115, 1000
        %v241 = vadd.s32 %v115, 1008
        %v242 = vadd.s32 %v115, 1016
        %v243 = vadd.s32 %v115, 1024
        %v244 = vadd.s32 %v115, 1032
        %v245 = vadd.s32 %v115, 1040
        %v246 = vadd.s32 %v115, 1048
        %v247 = vadd.s32 %v115, 1056
        %v248 = vadd.s32 %v115, 1064
        %v249 = vadd.s32 %v115, 1072
        %v250 = vadd.s32 %v115, 1080
        %v251 = vadd.s32 %v115, 1088
        %v252 = vadd.s32 %v115, 1096
        %v253 = vadd.s32 %v115, 1104
        %v254 = vadd.s32 %v115, 1112
        %v255 = vadd.s32 %v115, 1120
        %v256 = vadd.s32 %v115, 1128
        %v257 = vadd.s32 %v115, 1136
        %v258 = vadd.s32 %v115, 1144
        %v259 = vadd.s32 %v115, 1152
        %v260 = vadd.s32 %v115, 1160
        %v261 = vadd.s32 %v115, 1168
        %v262 = vadd.s32 %v115, 1176
        %v263 = vadd.s32 %v115, 1184
        %v264 = vadd.s32 %v115, 1192
        %v265 = vadd.s32 %v115, 1200
        %v266 = vadd.s32 %v115, 1208
        %v267 = vadd.s32 %v115, 1216
        %v268 = vadd.s32 %v115, 1224
        %v269 = vadd.s32 %v115, 1232
        %v270 = vadd.s32 %v115, 1240
        %v271 = vadd.s32 %v115, 1248
        %v272 = vadd.s32 %v115, 1256
        %v273 = vadd.s32 %v115, 1264
        %v274 = vadd.s32 %v115, 1272
        %v275 = vadd.s32 %v115, 1280
        %v276 = vadd.s32 %v115, 1288
        %v277 = vadd.s32 %v115, 1296
        %v278 = vadd.s32 %v115, 1304
        %v279 = vadd.s32 %v115, 1312
        %v280 = vadd.s32 %v115, 1320
        %v281 = vadd.s32 %v115, 1328
        %v282 = vadd.s32 %v115, 1336
        %v283 = vadd.s32 %v115, 1344
        %v284 = vadd.s32 %v115, 1352
        %v285 = vadd.s32 %v115, 1360
        %v286 = vadd.s32 %v115, 1368
        %v287 = vadd.s32 %v115, 1376
        %v288 = vadd.s32 %v115, 1384
        %v289 = vadd.s32 %v115, 1392
        %v290 = vadd.s32 %v115, 1400
        %v291 = vadd.s32 %v115, 1408
        %v292 = vadd.s32 %v115, 1416
        %v293 = vadd.s32 %v115, 1424
        %v294 = vadd.s32 %v115, 1432
        %v295 = vadd.s32 %v115, 1440
        %v296 = vadd.s32 %v115, 1448
        %v297 = vadd.s32 %v115, 1456
        %v298 = vadd.s32 %v115, 1464
        %v299 = vadd.s32 %v115, 1472
        %v300 = vadd.s32 %v115, 1480
        %v301 = vadd.s32 %v115, 1488
        %v302 = vadd.s32 %v115, 1496
        %v303 = vadd.s32 %v115, 1504
        %v304 = vadd.s32 %v115, 1512
        %v305 = vadd.s32 %v115, 1520
        %v306 = vadd.s32 %v115, 1528
        %v307 = vadd.s32 %v115, 1536
        %v308 = vadd.s32 %v115, 1544
        %v309 = vadd.s32 %v115, 1552
        %v310 = vadd.s32 %v115, 1560
        %v311 = vadd.s32 %v115, 1568
        %v312 = vadd.s32 %v115, 1576
        %v313 = vadd.s32 %v115, 1584
        %v314 = vadd.s32 %v115, 1592
        %v315 = vadd.s32 %v115, 1600
        %v316 = vadd.s32 %v115, 1608
        %v317 = vadd.s32 %v115, 1616
        %v318 = vadd.s32 %v115, 1624
        %v319 = vadd.s32 %v115, 1632
        %v320 = vadd.s32 %v115, 1640
        %v321 = vadd.s32 %v115, 1648
        %v322 = vadd.s32 %v115, 1656
        %v323 = vadd.s32 %v115, 1664
        %v324 = vadd.s32 %v115, 1672
        %v325 = vadd.s32 %v115, 1680
        %v326 = vadd.s32 %v115, 1688
        %v327 = vadd.s32 %v115, 1696
        %v328 = vadd.s32 %v115, 1704
        %v329 = vadd.s32 %v115, 1712
        %v330 = vadd.s32 %v115, 1720
        %v331 = vadd.s32 %v115, 1728
        %v332 = vadd.s32 %v115, 1736
        %v333 = vadd.s32 %v115, 1744
        %v334 = vadd.s32 %v115, 1752
        %v335 = vadd.s32 %v115, 1760
        %v336 = vadd.s32 %v115, 1768
        %v337 = vadd.s32 %v115, 1776
        %v338 = vadd.s32 %v115, 1784
        %v339 = vadd.s32 %v115, 1792
        %v340 = vadd.s32 %v115, 1800
        %v341 = vadd.s32 %v115, 1808
        %v342 = vadd.s32 %v115, 1816
        %v343 = vadd.s32 %v115, 1824
        %v344 = vadd.s32 %v115, 1832
        %v345 = vadd.s32 %v115, 1840
        %v346 = vadd.s32 %v115, 1848
        %v347 = vadd.s32 %v115, 1856
        %v348 = vadd.s32 %v115, 1864
        %v349 = vadd.s32 %v115, 1872
        %v350 = vadd.s32 %v115, 1880
        %v351 = vadd.s32 %v115, 1888
        %v352 = vadd.s32 %v115, 1896
        %v353 = vadd.s32 %v115, 1904
        %v354 = vadd.s32 %v115, 1912
        %v355 = vadd.s32 %v115, 1920
        %v356 = vadd.s32 %v115, 1928
        %v357 = vadd.s32 %v115, 1936
        %v358 = vadd.s32 %v115, 1944
        %v359 = vadd.s32 %v115, 1952
        %v360 = vadd.s32 %v115, 1960
        %v361 = vadd.s32 %v115, 1968
        %v362 = vadd.s32 %v115, 1976
        %v363 = vadd.s32 %v115, 1984
        %v364 = vadd.s32 %v115, 1992
        %v365 = vadd.s32 %v115, 2000
        %v366 = vadd.s32 %v115, 2008
        %v367 = vadd.s32 %v115, 2016
        %v368 = vadd.s32 %v115, 2024
        %v369 = vadd.s32 %v115, 2032
        %v370 = vadd.s32 %v115, 2040
        %v371 = vadd.s32 %v115, 2048
        %v372 = vadd.s32 %v115, 2056
        %v373 = vadd.s32 %v115, 2064
        %v374 = vadd.s32 %v115, 2072
        %v375 = vadd.s32 %v115, 2080
        %v376 = vadd.s32 %v115, 2088
        %v377 = vadd.s32 %v115, 2096
        %v378 = vadd.s32 %v115, 2104
        %v379 = vadd.s32 %v115, 2112
        %v380 = vadd.s32 %v115, 2120
        %v381 = vadd.s32 %v115, 2128
        %v382 = vadd.s32 %v115, 2136
        %v383 = vadd.s32 %v115, 2144
        %v384 = vadd.s32 %v115, 2152
        %v385 = vadd.s32 %v115, 2160
        %v386 = vadd.s32 %v115, 2168
        %v387 = vadd.s32 %v115, 2176
        %v388 = vadd.s32 %v115, 2184
        %v389 = vadd.s32 %v115, 2192
        %v390 = vadd.s32 %v115, 2200
        %v391 = vadd.s32 %v115, 2208
        %v392 = vadd.s32 %v115, 2216
        %v393 = vadd.s32 %v115, 2224
        %v394 = vadd.s32 %v115, 2232
        %v395 = vadd.s32 %v115, 2240
        %v396 = vadd.s32 %v115, 2248
        %v397 = vadd.s32 %v115, 2256
        %v398 = vadd.s32 %v115, 2264
        %v399 = vadd.s32 %v115, 2272
        %v400 = vadd.s32 %v115, 2280
        %v401 = vadd.s32 %v115, 2288
        %v402 = vadd.s32 %v115, 2296
        %v403 = vadd.s32 %v115, 2304
        %v404 = vadd.s32 %v115, 2312
        %v405 = vadd.s32 %v115, 2320
        %v406 = vadd.s32 %v115, 2328
        %v407 = vadd.s32 %v115, 2336
        %v408 = vadd.s32 %v115, 2344
        %v409 = vadd.s32 %v115, 2352
        %v410 = vadd.s32 %v115, 2360
        %v411 = vadd.s32 %v115, 2368
        %v412 = vadd.s32 %v115, 2376
        %v413 = vadd.s32 %v115, 2384
        %v414 = vadd.s32 %v115, 2392
        %v415 = vadd.s32 %v115, 2400
        %v416 = vadd.s32 %v115, 2408
        %v417 = vadd.s32 %v115, 2416
        %v418 = vadd.s32 %v115, 2424
        %v419 = vadd.s32 %v115, 2432
        %v420 = vadd.s32 %v115, 2440
        %v421 = vadd.s32 %v115, 2448
        %v422 = vadd.s32 %v115, 2456
        %v423 = vadd.s32 %v115, 2464
        %v424 = vadd.s32 %v115, 2472
        %v425 = vadd.s32 %v115, 2480
        %v426 = vadd.s32 %v115, 2488
        %v427 = vadd.s32 %v115, 2496
        %v428 = vadd.s32 %v115, 2504
        %v429 = vadd.s32 %v115, 2512
        %v430 = vadd.s32 %v115, 2520
        %v431 = vadd.s32 %v115, 2528
        %v432 = vadd.s32 %v115, 2536
        %v433 = vadd.s32 %v115, 2544
        %v434 = vadd.s32 %v115, 2552
        %v435 = vadd.s32 %v115, 2560
        %v436 = vadd.s32 %v115, 2568
        %v437 = vadd.s32 %v115, 2576
        %v438 = vadd.s32 %v115, 2584
        %v439 = vadd.s32 %v115, 2592
        %v440 = vadd.s32 %v115, 2600
        %v441 = vadd.s32 %v115, 2608
        %v442 = vadd.s32 %v115, 2616
        %v443 = vadd.s32 %v115, 2624
        %v444 = vadd.s32 %v115, 2632
        %v445 = vadd.s32 %v115, 2640
        %v446 = vadd.s32 %v115, 2648
        %v447 = vadd.s32 %v115, 2656
        %v448 = vadd.s32 %v115, 2664
        %v449 = vadd.s32 %v115, 2672
        %v450 = vadd.s32 %v115, 2680
        %v451 = vadd.s32 %v115, 2688
        %v452 = vadd.s32 %v115, 2696
        %v453 = vadd.s32 %v115, 2704
        %v454 = vadd.s32 %v115, 2712
        %v455 = vadd.s32 %v115, 2720
        %v456 = vadd.s32 %v115, 2728
        %v457 = vadd.s32 %v115, 2736
        %v458 = vadd.s32 %v115, 2744
        %v459 = vadd.s32 %v115, 2752
        %v460 = vadd.s32 %v115, 2760
        %v461 = vadd.s32 %v115, 2768
        %v462 = vadd.s32 %v115, 2776
        %v463 = vadd.s32 %v115, 2784
        %v464 = vadd.s32 %v115, 2792
        %v465 = vadd.s32 %v115, 2800
        %v466 = vadd.s32 %v115, 2808
        %v467 = vadd.s32 %v115, 2816
        %v468 = vadd.s32 %v115, 2824
        %v469 = vadd.s32 %v115, 2832
        %v470 = vadd.s32 %v115, 2840
        %v471 = vadd.s32 %v115, 2848
        %v472 = vadd.s32 %v115, 2856
        %v473 = vadd.s32 %v115, 2864
        %v474 = vadd.s32 %v115, 2872
        %v475 = vadd.s32 %v115, 2880
        %v476 = vadd.s32 %v115, 2888
        %v477 = vadd.s32 %v115, 2896
        %v478 = vadd.s32 %v115, 2904
        %v479 = vadd.s32 %v115, 2912
        %v480 = vadd.s32 %v115, 2920
        %v481 = vadd.s32 %v115, 2928
        %v482 = vadd.s32 %v115, 2936
        %v483 = vadd.s32 %v115, 2944
        %v484 = vadd.s32 %v115, 2952
        %v485 = vadd.s32 %v115, 2960
        %v486 = vadd.s32 %v115, 2968
        %v487 = vadd.s32 %v115, 2976
        %v488 = vadd.s32 %v115, 2984
        %v489 = vadd.s32 %v115, 2992
        %v490 = vadd.s32 %v115, 3000
        %v491 = vadd.s32 %v115, 3008
        %v492 = vadd.s32 %v115, 3016
        %v493 = vadd.s32 %v115, 3024
        %v494 = vadd.s32 %v115, 3032
        %v495 = vadd.s32 %v115, 3040
        %v496 = vadd.s32 %v115, 3048
        %v497 = vadd.s32 %v115, 3056
        %v498 = vadd.s32 %v115, 3064
        %v499 = vadd.s32 %v115, 3072
        %v500 = vadd.s32 %v115, 3080
        %v501 = vadd.s32 %v115, 3088
        %v502 = vadd.s32 %v115, 3096
        %v503 = vadd.s32 %v115, 3104
        %v504 = vadd.s32 %v115, 3112
        %v505 = vadd.s32 %v115, 3120
        %v506 = vadd.s32 %v115, 3128
        %v507 = vadd.s32 %v115, 3136
        %v508 = vadd.s32 %v115, 3144
        %v509 = vadd.s32 %v115, 3152
        %v510 = vadd.s32 %v115, 3160
        %v511 = vadd.s32 %v115, 3168
        %v512 = vadd.s32 %v115, 3176
        %v513 = vadd.s32 %v115, 3184
        %v514 = vadd.s32 %v115, 3192
        %v515 = vadd.s32 %v115, 3200
        %v516 = vadd.s32 %v115, 3208
        %v517 = vadd.s32 %v115, 3216
        %v518 = vadd.s32 %v115, 3224
        %v519 = vadd.s32 %v115, 3232
        %v520 = vadd.s32 %v115, 3240
        %v521 = vadd.s32 %v115, 3248
        %v522 = vadd.s32 %v115, 3256
        %v523 = vadd.s32 %v115, 3264
        %v524 = vadd.s32 %v115, 3272
        %v525 = vadd.s32 %v115, 3280
        %v526 = vadd.s32 %v115, 3288
        %v527 = vadd.s32 %v115, 3296
        %v528 = vadd.s32 %v115, 3304
        %v529 = vadd.s32 %v115, 3312
        %v530 = vadd.s32 %v115, 3320
        %v531 = vadd.s32 %v115, 3328
        %v532 = vadd.s32 %v115, 3336
        %v533 = vadd.s32 %v115, 3344
        %v534 = vadd.s32 %v115, 3352
        %v535 = vadd.s32 %v115, 3360
        %v536 = vadd.s32 %v115, 3368
        %v537 = vadd.s32 %v115, 3376
        %v538 = vadd.s32 %v115, 3384
        %v539 = vadd.s32 %v115, 3392
        %v540 = vadd.s32 %v115, 3400
        %v541 = vadd.s32 %v115, 3408
        %v542 = vadd.s32 %v115, 3416
        %v543 = vadd.s32 %v115, 3424
        %v544 = vadd.s32 %v115, 3432
        %v545 = vadd.s32 %v115, 3440
        %v546 = vadd.s32 %v115, 3448
        %v547 = vadd.s32 %v115, 3456
        %v548 = vadd.s32 %v115, 3464
        %v549 = vadd.s32 %v115, 3472
        %v550 = vadd.s32 %v115, 3480
        %v551 = vadd.s32 %v115, 3488
        %v552 = vadd.s32 %v115, 3496
        %v553 = vadd.s32 %v115, 3504
        %v554 = vadd.s32 %v115, 3512
        %v555 = vadd.s32 %v115, 3520
        %v556 = vadd.s32 %v115, 3528
        %v557 = vadd.s32 %v115, 3536
        %v558 = vadd.s32 %v115, 3544
        %v559 = vadd.s32 %v115, 3552
        %v560 = vadd.s32 %v115, 3560
        %v561 = vadd.s32 %v115, 3568
        %v562 = vadd.s32 %v115, 3576
        %v563 = vadd.s32 %v115, 3584
        %v564 = vadd.s32 %v115, 3592
        %v565 = vadd.s32 %v115, 3600
        %v566 = vadd.s32 %v115, 3608
        %v567 = vadd.s32 %v115, 3616
        %v568 = vadd.s32 %v115, 3624
        %v569 = vadd.s32 %v115, 3632
        %v570 = vadd.s32 %v115, 3640
        %v571 = vadd.s32 %v115, 3648
        %v572 = vadd.s32 %v115, 3656
        %v573 = vadd.s32 %v115, 3664
        %v574 = vadd.s32 %v115, 3672
        %v575 = vadd.s32 %v115, 3680
        %v576 = vadd.s32 %v115, 3688
        %v577 = vadd.s32 %v115, 3696
        %v578 = vadd.s32 %v115, 3704
        %v579 = vadd.s32 %v115, 3712
        %v580 = vadd.s32 %v115, 3720
        %v581 = vadd.s32 %v115, 3728
        %v582 = vadd.s32 %v115, 3736
        %v583 = vadd.s32 %v115, 3744
        %v584 = vadd.s32 %v115, 3752
        %v585 = vadd.s32 %v115, 3760
        %v586 = vadd.s32 %v115, 3768
        %v587 = vadd.s32 %v115, 3776
        %v588 = vadd.s32 %v115, 3784
        %v589 = vadd.s32 %v115, 3792
        %v590 = vadd.s32 %v115, 3800
        %v591 = vadd.s32 %v115, 3808
        %v592 = vadd.s32 %v115, 3816
        %v593 = vadd.s32 %v115, 3824
        %v594 = vadd.s32 %v115, 3832
        %v595 = vadd.s32 %v115, 3840
        %v596 = vadd.s32 %v115, 3848
        %v597 = vadd.s32 %v115, 3856
        %v598 = vadd.s32 %v115, 3864
        %v599 = vadd.s32 %v115, 3872
        %v600 = vadd.s32 %v115, 3880
        %v601 = vadd.s32 %v115, 3888
        %v602 = vadd.s32 %v115, 3896
        %v603 = vadd.s32 %v115, 3904
        %v604 = vadd.s32 %v115, 3912
        %v605 = vadd.s32 %v115, 3920
        %v606 = vadd.s32 %v115, 3928
        %v607 = vadd.s32 %v115, 3936
        %v608 = vadd.s32 %v115, 3944
        %v609 = vadd.s32 %v115, 3952
        %v610 = vadd.s32 %v115, 3960
        %v611 = vadd.s32 %v115, 3968
        %v612 = vadd.s32 %v115, 3976
        %v613 = vadd.s32 %v115, 3984
        %v614 = vadd.s32 %v115, 3992
        %v615 = vadd.s32 %v115, 4000
        %v616 = vadd.s32 %v115, 4008
        %v617 = vadd.s32 %v115, 4016
        %v618 = vadd.s32 %v115, 4024
        %v619 = vadd.s32 %v115, 4032
        %v620 = vadd.s32 %v115, 4040
        %v621 = vadd.s32 %v115, 4048
        %v622 = vadd.s32 %v115, 4056
        %v623 = vadd.s32 %v115, 4064
        %v624 = vadd.s32 %v115, 4072
        %v625 = vadd.s32 %v115, 4080
        %v626 = vadd.s32 %v115, 4088
        %v627 = vadd.s32 %v115, 4096
        %v628 = vadd.s32 %v115, 4104
        %v629 = vadd.s32 %v115, 4112
        %v630 = vadd.s32 %v115, 4120
        %v631 = vadd.s32 %v115, 4128
        %v632 = vadd.s32 %v115, 4136
        %v633 = vadd.s32 %v115, 4144
        %v634 = vadd.s32 %v115, 4152
        %v635 = vadd.s32 %v115, 4160
        %v636 = vadd.s32 %v115, 4168
        %v637 = vadd.s32 %v115, 4176
        %v638 = vadd.s32 %v115, 4184
        %v639 = vadd.s32 %v115, 4192
        %v640 = vadd.s32 %v115, 4200
        %v641 = vadd.s32 %v115, 4208
        %v642 = vadd.s32 %v115, 4216
        %v643 = vadd.s32 %v115, 4224
        %v644 = vadd.s32 %v115, 4232
        %v645 = vadd.s32 %v115, 4240
        %v646 = vadd.s32 %v115, 4248
        %v647 = vadd.s32 %v115, 4256
        %v648 = vadd.s32 %v115, 4264
        %v649 = vadd.s32 %v115, 4272
        %v650 = vadd.s32 %v115, 4280
        %v651 = vadd.s32 %v115, 4288
        %v652 = vadd.s32 %v115, 4296
        %v653 = vadd.s32 %v115, 4304
        %v654 = vadd.s32 %v115, 4312
        %v655 = vadd.s32 %v115, 4320
        %v656 = vadd.s32 %v115, 4328
        %v657 = vadd.s32 %v115, 4336
        %v658 = vadd.s32 %v115, 4344
        %v659 = vadd.s32 %v115, 4352
        %v660 = vadd.s32 %v115, 4360
        %v661 = vadd.s32 %v115, 4368
        %v662 = vadd.s32 %v115, 4376
        %v663 = vadd.s32 %v115, 4384
        %v664 = vadd.s32 %v115, 4392
        %v665 = vadd.s32 %v115, 4400
        %v666 = vadd.s32 %v115, 4408
        %v667 = vadd.s32 %v115, 4416
        %v668 = vadd.s32 %v115, 4424
        %v669 = vadd.s32 %v115, 4432
        %v670 = vadd.s32 %v115, 4440
        %v671 = vadd.s32 %v115, 4448
        %v672 = vadd.s32 %v115, 4456
        %v673 = vadd.s32 %v115, 4464
        %v674 = vadd.s32 %v115, 4472
        %v675 = vadd.s32 %v115, 4480
        %v676 = vadd.s32 %v115, 4488
        %v677 = vadd.s32 %v115, 4496
        %v678 = vadd.s32 %v115, 4504
        %v679 = vadd.s32 %v115, 4512
        %v680 = vadd.s32 %v115, 4520
        %v681 = vadd.s32 %v115, 4528
        %v682 = vadd.s32 %v115, 4536
        %v683 = vadd.s32 %v115, 4544
        %v684 = vadd.s32 %v115, 4552
        %v685 = vadd.s32 %v115, 4560
        %v686 = vadd.s32 %v115, 4568
        %v687 = vadd.s32 %v115, 4576
        %v688 = vadd.s32 %v115, 4584
        %v689 = vadd.s32 %v115, 4592
        %v690 = vadd.s32 %v115, 4600
        %v691 = vadd.s32 %v115, 4608
        %v692 = vadd.s32 %v115, 4616
        %v693 = vadd.s32 %v115, 4624
        %v694 = vadd.s32 %v115, 4632
        %v695 = vadd.s32 %v115, 4640
        %v696 = vadd.s32 %v115, 4648
        %v697 = vadd.s32 %v115, 4656
        %v698 = vadd.s32 %v115, 4664
        %v699 = vadd.s32 %v115, 4672
        %v700 = vadd.s32 %v115, 4680
        %v701 = vadd.s32 %v115, 4688
        %v702 = vadd.s32 %v115, 4696
        %v703 = vadd.s32 %v115, 4704
        %v704 = vadd.s32 %v115, 4712
        %v705 = vadd.s32 %v115, 4720
        %v706 = vadd.s32 %v115, 4728
        %v707 = vadd.s32 %v115, 4736
        %v708 = vadd.s32 %v115, 4744
        %v709 = vadd.s32 %v115, 4752
        %v710 = vadd.s32 %v115, 4760
        %v711 = vadd.s32 %v115, 4768
        %v712 = vadd.s32 %v115, 4776
        %v713 = vadd.s32 %v115, 4784
        %v714 = vadd.s32 %v115, 4792
        %v715 = vadd.s32 %v115, 4800
        %v716 = vadd.s32 %v115, 4808
        %v717 = vadd.s32 %v115, 4816
        %v718 = vadd.s32 %v115, 4824
        %v719 = vadd.s32 %v115, 4832
        %v720 = vadd.s32 %v115, 4840
        %v721 = vadd.s32 %v115, 4848
        %v722 = vadd.s32 %v115, 4856
        %v723 = vadd.s32 %v115, 4864
        %v724 = vadd.s32 %v115, 4872
        %v725 = vadd.s32 %v115, 4880
        %v726 = vadd.s32 %v115, 4888
        %v727 = vadd.s32 %v115, 4896
        %v728 = vadd.s32 %v115, 4904
        %v729 = vadd.s32 %v115, 4912
        %v730 = vadd.s32 %v115, 4920
        %v731 = vadd.s32 %v115, 4928
        %v732 = vadd.s32 %v115, 4936
        %v733 = vadd.s32 %v115, 4944
        %v734 = vadd.s32 %v115, 4952
        %v735 = vadd.s32 %v115, 4960
        %v736 = vadd.s32 %v115, 4968
        %v737 = vadd.s32 %v115, 4976
        %v738 = vadd.s32 %v115, 4984
        %v739 = vadd.s32 %v115, 4992
        %v740 = vadd.s32 %v115, 5000
        %v741 = vadd.s32 %v115, 5008
        %v742 = vadd.s32 %v115, 5016
        %v743 = vadd.s32 %v115, 5024
        %v744 = vadd.s32 %v115, 5032
        %v745 = vadd.s32 %v115, 5040
        %v746 = vadd.s32 %v115, 5048
        %v747 = vadd.s32 %v115, 5056
        %v748 = vadd.s32 %v115, 5064
        %v749 = vadd.s32 %v115, 5072
        %v750 = vadd.s32 %v115, 5080
        %v751 = vadd.s32 %v115, 5088
        %v752 = vadd.s32 %v115, 5096
        %v753 = vadd.s32 %v115, 5104
        %v754 = vadd.s32 %v115, 5112
        %v755 = vadd.s32 %v115, 5120
        %v756 = vadd.s32 %v115, 5128
        %v757 = vadd.s32 %v115, 5136
        %v758 = vadd.s32 %v115, 5144
        %v759 = vadd.s32 %v115, 5152
        %v760 = vadd.s32 %v115, 5160
        %v761 = vadd.s32 %v115, 5168
        %v762 = vadd.s32 %v115, 5176
        %v763 = vadd.s32 %v115, 5184
        %v764 = vadd.s32 %v115, 5192
        %v765 = vadd.s32 %v115, 5200
        %v766 = vadd.s32 %v115, 5208
        %v767 = vadd.s32 %v115, 5216
        %v768 = vadd.s32 %v115, 5224
        %v769 = vadd.s32 %v115, 5232
        %v770 = vadd.s32 %v115, 5240
        %v771 = vadd.s32 %v115, 5248
        %v772 = vadd.s32 %v115, 5256
        %v773 = vadd.s32 %v115, 5264
        %v774 = vadd.s32 %v115, 5272
        %v775 = vadd.s32 %v115, 5280
        %v776 = vadd.s32 %v115, 5288
        %v777 = vadd.s32 %v115, 5296
        %v778 = vadd.s32 %v115, 5304
        %v779 = vadd.s32 %v115, 5312
        %v780 = vadd.s32 %v115, 5320
        %v781 = vadd.s32 %v115, 5328
        %v782 = vadd.s32 %v115, 5336
        %v783 = vadd.s32 %v115, 5344
        %v784 = vadd.s32 %v115, 5352
        %v785 = vadd.s32 %v115, 5360
        %v786 = vadd.s32 %v115, 5368
        %v787 = vadd.s32 %v115, 5376
        %v788 = vadd.s32 %v115, 5384
        %v789 = vadd.s32 %v115, 5392
        %v790 = vadd.s32 %v115, 5400
        %v791 = vadd.s32 %v115, 5408
        %v792 = vadd.s32 %v115, 5416
        %v793 = vadd.s32 %v115, 5424
        %v794 = vadd.s32 %v115, 5432
        %v795 = vadd.s32 %v115, 5440
        %v796 = vadd.s32 %v115, 5448
        %v797 = vadd.s32 %v115, 5456
        %v798 = vadd.s32 %v115, 5464
        %v799 = vadd.s32 %v115, 5472
        %v800 = vadd.s32 %v115, 5480
        %v801 = vadd.s32 %v115, 5488
        %v802 = vadd.s32 %v115, 5496
        %v803 = vadd.s32 %v115, 5504
        %v804 = vadd.s32 %v115, 5512
        %v805 = vadd.s32 %v115, 5520
        %v806 = vadd.s32 %v115, 5528
        %v807 = vadd.s32 %v115, 5536
        %v808 = vadd.s32 %v115, 5544
        %v809 = vadd.s32 %v115, 5552
        %v810 = vadd.s32 %v115, 5560
        %v811 = vadd.s32 %v115, 5568
        %v812 = vadd.s32 %v115, 5576
        %v813 = vadd.s32 %v115, 5584
        %v814 = vadd.s32 %v115, 5592
        %v815 = vadd.s32 %v115, 5600
        %v816 = vadd.s32 %v115, 5608
        %v817 = vadd.s32 %v115, 5616
        %v818 = vadd.s32 %v115, 5624
        %v819 = vadd.s32 %v115, 5632
        %v820 = vadd.s32 %v115, 5640
        %v821 = vadd.s32 %v115, 5648
        %v822 = vadd.s32 %v115, 5656
        %v823 = vadd.s32 %v115, 5664
        %v824 = vadd.s32 %v115, 5672
        %v825 = vadd.s32 %v115, 5680
        %v826 = vadd.s32 %v115, 5688
        %v827 = vadd.s32 %v115, 5696
        %v828 = vadd.s32 %v115, 5704
        %v829 = vadd.s32 %v115, 5712
        %v830 = vadd.s32 %v115, 5720
        %v831 = vadd.s32 %v115, 5728
        %v832 = vadd.s32 %v115, 5736
        %v833 = vadd.s32 %v115, 5744
        %v834 = vadd.s32 %v115, 5752
        %v835 = vadd.s32 %v115, 5760
        %v836 = vadd.s32 %v115, 5768
        %v837 = vadd.s32 %v115, 5776
        %v838 = vadd.s32 %v115, 5784
        %v839 = vadd.s32 %v115, 5792
        %v840 = vadd.s32 %v115, 5800
        %v841 = vadd.s32 %v115, 5808
        %v842 = vadd.s32 %v115, 5816
        %v843 = vadd.s32 %v115, 5824
        %v844 = vadd.s32 %v115, 5832
        %v845 = vadd.s32 %v115, 5840
        %v846 = vadd.s32 %v115, 5848
        %v847 = vadd.s32 %v115, 5856
        %v848 = vadd.s32 %v115, 5864
        %v849 = vadd.s32 %v115, 5872
        %v850 = vadd.s32 %v115, 5880
        %v851 = vadd.s32 %v115, 5888
        %v852 = vadd.s32 %v115, 5896
        %v853 = vadd.s32 %v115, 5904
        %v854 = vadd.s32 %v115, 5912
        %v855 = vadd.s32 %v115, 5920
        %v856 = vadd.s32 %v115, 5928
        %v857 = vadd.s32 %v115, 5936
        %v858 = vadd.s32 %v115, 5944
        %v859 = vadd.s32 %v115, 5952
        %v860 = vadd.s32 %v115, 5960
        %v861 = vadd.s32 %v115, 5968
        %v862 = vadd.s32 %v115, 5976
        %v863 = vadd.s32 %v115, 5984
        %v864 = vadd.s32 %v115, 5992
        %v865 = vadd.s32 %v115, 6000
        %v866 = vadd.s32 %v115, 6008
        %v867 = vadd.s32 %v115, 6016
        %v868 = vadd.s32 %v115, 6024
        %v869 = vadd.s32 %v115, 6032
        %v870 = vadd.s32 %v115, 6040
        %v871 = vadd.s32 %v115, 6048
        %v872 = vadd.s32 %v115, 6056
        %v873 = vadd.s32 %v115, 6064
        %v874 = vadd.s32 %v115, 6072
        %v875 = vadd.s32 %v115, 6080
        %v876 = vadd.s32 %v115, 6088
        %v877 = vadd.s32 %v115, 6096
        %v878 = vadd.s32 %v115, 6104
        %v879 = vadd.s32 %v115, 6112
        %v880 = vadd.s32 %v115, 6120
        %v881 = vadd.s32 %v115, 6128
        %v882 = vadd.s32 %v115, 6136
        %v883 = vadd.s32 %v115, 6144
        %v884 = vadd.s32 %v115, 6152
        %v885 = vadd.s32 %v115, 6160
        %v886 = vadd.s32 %v115, 6168
        %v887 = vadd.s32 %v115, 6176
        %v888 = vadd.s32 %v115, 6184
        %v889 = vadd.s32 %v115, 6192
        %v890 = vadd.s32 %v115, 6200
        %v891 = vadd.s32 %v115, 6208
        %v892 = vadd.s32 %v115, 6216
        %v893 = vadd.s32 %v115, 6224
        %v894 = vadd.s32 %v115, 6232
        %v895 = vadd.s32 %v115, 6240
        %v896 = vadd.s32 %v115, 6248
        %v897 = vadd.s32 %v115, 6256
        %v898 = vadd.s32 %v115, 6264
        %v899 = vadd.s32 %v115, 6272
        %v900 = vadd.s32 %v115, 6280
        %v901 = vadd.s32 %v115, 6288
        %v902 = vadd.s32 %v115, 6296
        %v903 = vadd.s32 %v115, 6304
        %v904 = vadd.s32 %v115, 6312
        %v905 = vadd.s32 %v115, 6320
        %v906 = vadd.s32 %v115, 6328
        %v907 = vadd.s32 %v115, 6336
        %v908 = vadd.s32 %v115, 6344
        %v909 = vadd.s32 %v115, 6352
        %v910 = vadd.s32 %v115, 6360
        %v911 = vadd.s32 %v115, 6368
        %v912 = vadd.s32 %v115, 6376
        %v913 = vadd.s32 %v115, 6384
        %v914 = vadd.s32 %v115, 6392
        %v915 = vadd.s32 %v115, 6400
        %v916 = vadd.s32 %v115, 6408
        %v917 = vadd.s32 %v115, 6416
        %v918 = vadd.s32 %v115, 6424
        %v919 = vadd.s32 %v115, 6432
        %v920 = vadd.s32 %v115, 6440
        %v921 = vadd.s32 %v115, 6448
        %v922 = vadd.s32 %v115, 6456
        %v923 = vadd.s32 %v115, 6464
        %v924 = vadd.s32 %v115, 6472
        %v925 = vadd.s32 %v115, 6480
        %v926 = vadd.s32 %v115, 6488
        %v927 = vadd.s32 %v115, 6496
        %v928 = vadd.s32 %v115, 6504
        %v929 = vadd.s32 %v115, 6512
        %v930 = vadd.s32 %v115, 6520
        %v931 = vadd.s32 %v115, 6528
        %v932 = vadd.s32 %v115, 6536
        %v933 = vadd.s32 %v115, 6544
        %v934 = vadd.s32 %v115, 6552
        %v935 = vadd.s32 %v115, 6560
        %v936 = vadd.s32 %v115, 6568
        %v937 = vadd.s32 %v115, 6576
        %v938 = vadd.s32 %v115, 6584
        %v939 = vadd.s32 %v115, 6592
        %v940 = vadd.s32 %v115, 6600
        %v941 = vadd.s32 %v115, 6608
        %v942 = vadd.s32 %v115, 6616
        %v943 = vadd.s32 %v115, 6624
        %v944 = vadd.s32 %v115, 6632
        %v945 = vadd.s32 %v115, 6640
        %v946 = vadd.s32 %v115, 6648
        %v947 = vadd.s32 %v115, 6656
        %v948 = vadd.s32 %v115, 6664
        %v949 = vadd.s32 %v115, 6672
        %v950 = vadd.s32 %v115, 6680
        %v951 = vadd.s32 %v115, 6688
        %v952 = vadd.s32 %v115, 6696
        %v953 = vadd.s32 %v115, 6704
        %v954 = vadd.s32 %v115, 6712
        %v955 = vadd.s32 %v115, 6720
        %v956 = vadd.s32 %v115, 6728
        %v957 = vadd.s32 %v115, 6736
        %v958 = vadd.s32 %v115, 6744
        %v959 = vadd.s32 %v115, 6752
        %v960 = vadd.s32 %v115, 6760
        %v961 = vadd.s32 %v115, 6768
        %v962 = vadd.s32 %v115, 6776
        %v963 = vadd.s32 %v115, 6784
        %v964 = vadd.s32 %v115, 6792
        %v965 = vadd.s32 %v115, 6800
        %v966 = vadd.s32 %v115, 6808
        %v967 = vadd.s32 %v115, 6816
        %v968 = vadd.s32 %v115, 6824
        %v969 = vadd.s32 %v115, 6832
        %v970 = vadd.s32 %v115, 6840
        %v971 = vadd.s32 %v115, 6848
        %v972 = vadd.s32 %v115, 6856
        %v973 = vadd.s32 %v115, 6864
        %v974 = vadd.s32 %v115, 6872
        %v975 = vadd.s32 %v115, 6880
        %v976 = vadd.s32 %v115, 6888
        %v977 = vadd.s32 %v115, 6896
        %v978 = vadd.s32 %v115, 6904
        %v979 = vadd.s32 %v115, 6912
        %v980 = vadd.s32 %v115, 6920
        %v981 = vadd.s32 %v115, 6928
        %v982 = vadd.s32 %v115, 6936
        %v983 = vadd.s32 %v115, 6944
        %v984 = vadd.s32 %v115, 6952
        %v985 = vadd.s32 %v115, 6960
        %v986 = vadd.s32 %v115, 6968
        %v987 = vadd.s32 %v115, 6976
        %v988 = vadd.s32 %v115, 6984
        %v989 = vadd.s32 %v115, 6992
        %v990 = vadd.s32 %v115, 7000
        %v991 = vadd.s32 %v115, 7008
        %v992 = vadd.s32 %v115, 7016
        %v993 = vadd.s32 %v115, 7024
        %v994 = vadd.s32 %v115, 7032
        %v995 = vadd.s32 %v115, 7040
        %v996 = vadd.s32 %v115, 7048
        %v997 = vadd.s32 %v115, 7056
        %v998 = vadd.s32 %v115, 7064
        %v999 = vadd.s32 %v115, 7072
        %v1000 = vadd.s32 %v115, 7080
        %v1001 = vadd.s32 %v115, 7088
        %v1002 = vadd.s32 %v115, 7096
        %v1003 = vadd.s32 %v115, 7104
        %v1004 = vadd.s32 %v115, 7112
        %v1005 = vadd.s32 %v115, 7120
        %v1006 = vadd.s32 %v115, 7128
        %v1007 = vadd.s32 %v115, 7136
        %v1008 = vadd.s32 %v115, 7144
        %v1009 = vadd.s32 %v115, 7152
        %v1010 = vadd.s32 %v115, 7160
        %v1011 = vadd.s32 %v115, 7168
        %v1012 = vadd.s32 %v115, 7176
        %v1013 = vadd.s32 %v115, 7184
        %v1014 = vadd.s32 %v115, 7192
        %v1015 = vadd.s32 %v115, 7200
        %v1016 = vadd.s32 %v115, 7208
        %v1017 = vadd.s32 %v115, 7216
        %v1018 = vadd.s32 %v115, 7224
        %v1019 = vadd.s32 %v115, 7232
        %v1020 = vadd.s32 %v115, 7240
        %v1021 = vadd.s32 %v115, 7248
        %v1022 = vadd.s32 %v115, 7256
        %v1023 = vadd.s32 %v115, 7264
        %v1024 = vadd.s32 %v115, 7272
        %v1025 = vadd.s32 %v115, 7280
        %v1026 = vadd.s32 %v115, 7288
        %v1027 = vadd.s32 %v115, 7296
        %v1028 = vadd.s32 %v115, 7304
        %v1029 = vadd.s32 %v115, 7312
        %v1030 = vadd.s32 %v115, 7320
        %v1031 = vadd.s32 %v115, 7328
        %v1032 = vadd.s32 %v115, 7336
        %v1033 = vadd.s32 %v115, 7344
        %v1034 = vadd.s32 %v115, 7352
        %v1035 = vadd.s32 %v115, 7360
        %v1036 = vadd.s32 %v115, 7368
        %v1037 = vadd.s32 %v115, 7376
        %v1038 = vadd.s32 %v115, 7384
        %v1039 = vadd.s32 %v115, 7392
        %v1040 = vadd.s32 %v115, 7400
        %v1041 = vadd.s32 %v115, 7408
        %v1042 = vadd.s32 %v115, 7416
        %v1043 = vadd.s32 %v115, 7424
        %v1044 = vadd.s32 %v115, 7432
        %v1045 = vadd.s32 %v115, 7440
        %v1046 = vadd.s32 %v115, 7448
        %v1047 = vadd.s32 %v115, 7456
        %v1048 = vadd.s32 %v115, 7464
        %v1049 = vadd.s32 %v115, 7472
        %v1050 = vadd.s32 %v115, 7480
        %v1051 = vadd.s32 %v115, 7488
        %v1052 = vadd.s32 %v115, 7496
        %v1053 = vadd.s32 %v115, 7504
        %v1054 = vadd.s32 %v115, 7512
        %v1055 = vadd.s32 %v115, 7520
        %v1056 = vadd.s32 %v115, 7528
        %v1057 = vadd.s32 %v115, 7536
        %v1058 = vadd.s32 %v115, 7544
        %v1059 = vadd.s32 %v115, 7552
        %v1060 = vadd.s32 %v115, 7560
        %v1061 = vadd.s32 %v115, 7568
        %v1062 = vadd.s32 %v115, 7576
        %v1063 = vadd.s32 %v115, 7584
        %v1064 = vadd.s32 %v115, 7592
        %v1065 = vadd.s32 %v115, 7600
        %v1066 = vadd.s32 %v115, 7608
        %v1067 = vadd.s32 %v115, 7616
        %v1068 = vadd.s32 %v115, 7624
        %v1069 = vadd.s32 %v115, 7632
        %v1070 = vadd.s32 %v115, 7640
        %v1071 = vadd.s32 %v115, 7648
        %v1072 = vadd.s32 %v115, 7656
        %v1073 = vadd.s32 %v115, 7664
        %v1074 = vadd.s32 %v115, 7672
        %v1075 = vadd.s32 %v115, 7680
        %v1076 = vadd.s32 %v115, 7688
        %v1077 = vadd.s32 %v115, 7696
        %v1078 = vadd.s32 %v115, 7704
        %v1079 = vadd.s32 %v115, 7712
        %v1080 = vadd.s32 %v115, 7720
        %v1081 = vadd.s32 %v115, 7728
        %v1082 = vadd.s32 %v115, 7736
        %v1083 = vadd.s32 %v115, 7744
        %v1084 = vadd.s32 %v115, 7752
        %v1085 = vadd.s32 %v115, 7760
        %v1086 = vadd.s32 %v115, 7768
        %v1087 = vadd.s32 %v115, 7776
        %v1088 = vadd.s32 %v115, 7784
        %v1089 = vadd.s32 %v115, 7792
        %v1090 = vadd.s32 %v115, 7800
        %v1091 = vadd.s32 %v115, 7808
        %v1092 = vadd.s32 %v115, 7816
        %v1093 = vadd.s32 %v115, 7824
        %v1094 = vadd.s32 %v115, 7832
        %v1095 = vadd.s32 %v115, 7840
        %v1096 = vadd.s32 %v115, 7848
        %v1097 = vadd.s32 %v115, 7856
        %v1098 = vadd.s32 %v115, 7864
        %v1099 = vadd.s32 %v115, 7872
        %v1100 = vadd.s32 %v115, 7880
        %v1101 = vadd.s32 %v115, 7888
        %v1102 = vadd.s32 %v115, 7896
        %v1103 = vadd.s32 %v115, 7904
        %v1104 = vadd.s32 %v115, 7912
        %v1105 = vadd.s32 %v115, 7920
        %v1106 = vadd.s32 %v115, 7928
        %v1107 = vadd.s32 %v115, 7936
        %v1108 = vadd.s32 %v115, 7944
        %v1109 = vadd.s32 %v115, 7952
        %v1110 = vadd.s32 %v115, 7960
        %v1111 = vadd.s32 %v115, 7968
        %v1112 = vadd.s32 %v115, 7976
        %v1113 = vadd.s32 %v115, 7984
        %v1114 = vadd.s32 %v115, 7992
        %v1115 = vadd.s32 %v115, 8000
        %v1116 = vadd.s32 %v115, 8008
        %v1117 = vadd.s32 %v115, 8016
        %v1118 = vadd.s32 %v115, 8024
        %v1119 = vadd.s32 %v115, 8032
        %v1120 = vadd.s32 %v115, 8040
        %v1121 = vadd.s32 %v115, 8048
        %v1122 = vadd.s32 %v115, 8056
        %v1123 = vadd.s32 %v115, 8064
        %v1124 = vadd.s32 %v115, 8072
        %v1125 = vadd.s32 %v115, 8080
        %v1126 = vadd.s32 %v115, 8088
        %v1127 = vadd.s32 %v115, 8096
        %v1128 = vadd.s32 %v115, 8104
        %v1129 = vadd.s32 %v115, 8112
        %v1130 = vadd.s32 %v115, 8120
        %v1131 = vadd.s32 %v115, 8128
        %v1132 = vadd.s32 %v115, 8136
        %v1133 = vadd.s32 %v115, 8144
        %v1134 = vadd.s32 %v115, 8152
        %v1135 = vadd.s32 %v115, 8160
        %v1136 = vadd.s32 %v115, 8168
        %v1137 = vadd.s32 %v115, 8176
        %v1138 = vadd.s32 %v115, 8184
        %v1139 = vstv %s113
        %v1140 = vadd.s32 %v115, %v1139
        %v1141 = vadd.s32 %v116, %v1139
        %v1142 = vadd.s32 %v117, %v1139
        %v1143 = vadd.s32 %v118, %v1139
        %v1144 = vadd.s32 %v119, %v1139
        %v1145 = vadd.s32 %v120, %v1139
        %v1146 = vadd.s32 %v121, %v1139
        %v1147 = vadd.s32 %v122, %v1139
        %v1148 = vadd.s32 %v123, %v1139
        %v1149 = vadd.s32 %v124, %v1139
        %v1150 = vadd.s32 %v125, %v1139
        %v1151 = vadd.s32 %v126, %v1139
        %v1152 = vadd.s32 %v127, %v1139
        %v1153 = vadd.s32 %v128, %v1139
        %v1154 = vadd.s32 %v129, %v1139
        %v1155 = vadd.s32 %v130, %v1139
        %v1156 = vadd.s32 %v131, %v1139
        %v1157 = vadd.s32 %v132, %v1139
        %v1158 = vadd.s32 %v133, %v1139
        %v1159 = vadd.s32 %v134, %v1139
        %v1160 = vadd.s32 %v135, %v1139
        %v1161 = vadd.s32 %v136, %v1139
        %v1162 = vadd.s32 %v137, %v1139
        %v1163 = vadd.s32 %v138, %v1139
        %v1164 = vadd.s32 %v139, %v1139
        %v1165 = vadd.s32 %v140, %v1139
        %v1166 = vadd.s32 %v141, %v1139
        %v1167 = vadd.s32 %v142, %v1139
        %v1168 = vadd.s32 %v143, %v1139
        %v1169 = vadd.s32 %v144, %v1139
        %v1170 = vadd.s32 %v145, %v1139
        %v1171 = vadd.s32 %v146, %v1139
        %v1172 = vadd.s32 %v147, %v1139
        %v1173 = vadd.s32 %v148, %v1139
        %v1174 = vadd.s32 %v149, %v1139
        %v1175 = vadd.s32 %v150, %v1139
        %v1176 = vadd.s32 %v151, %v1139
        %v1177 = vadd.s32 %v152, %v1139
        %v1178 = vadd.s32 %v153, %v1139
        %v1179 = vadd.s32 %v154, %v1139
        %v1180 = vadd.s32 %v155, %v1139
        %v1181 = vadd.s32 %v156, %v1139
        %v1182 = vadd.s32 %v157, %v1139
        %v1183 = vadd.s32 %v158, %v1139
        %v1184 = vadd.s32 %v159, %v1139
        %v1185 = vadd.s32 %v160, %v1139
        %v1186 = vadd.s32 %v161, %v1139
        %v1187 = vadd.s32 %v162, %v1139
        %v1188 = vadd.s32 %v163, %v1139
        %v1189 = vadd.s32 %v164, %v1139
        %v1190 = vadd.s32 %v165, %v1139
        %v1191 = vadd.s32 %v166, %v1139
        %v1192 = vadd.s32 %v167, %v1139
        %v1193 = vadd.s32 %v168, %v1139
        %v1194 = vadd.s32 %v169, %v1139
        %v1195 = vadd.s32 %v170, %v1139
        %v1196 = vadd.s32 %v171, %v1139
        %v1197 = vadd.s32 %v172, %v1139
        %v1198 = vadd.s32 %v173, %v1139
        %v1199 = vadd.s32 %v174, %v1139
        %v1200 = vadd.s32 %v175, %v1139
        %v1201 = vadd.s32 %v176, %v1139
        %v1202 = vadd.s32 %v177, %v1139
        %v1203 = vadd.s32 %v178, %v1139
        %v1204 = vadd.s32 %v179, %v1139
        %v1205 = vadd.s32 %v180, %v1139
        %v1206 = vadd.s32 %v181, %v1139
        %v1207 = vadd.s32 %v182, %v1139
        %v1208 = vadd.s32 %v183, %v1139
        %v1209 = vadd.s32 %v184, %v1139
        %v1210 = vadd.s32 %v185, %v1139
        %v1211 = vadd.s32 %v186, %v1139
        %v1212 = vadd.s32 %v187, %v1139
        %v1213 = vadd.s32 %v188, %v1139
        %v1214 = vadd.s32 %v189, %v1139
        %v1215 = vadd.s32 %v190, %v1139
        %v1216 = vadd.s32 %v191, %v1139
        %v1217 = vadd.s32 %v192, %v1139
        %v1218 = vadd.s32 %v193, %v1139
        %v1219 = vadd.s32 %v194, %v1139
        %v1220 = vadd.s32 %v195, %v1139
        %v1221 = vadd.s32 %v196, %v1139
        %v1222 = vadd.s32 %v197, %v1139
        %v1223 = vadd.s32 %v198, %v1139
        %v1224 = vadd.s32 %v199, %v1139
        %v1225 = vadd.s32 %v200, %v1139
        %v1226 = vadd.s32 %v201, %v1139
        %v1227 = vadd.s32 %v202, %v1139
        %v1228 = vadd.s32 %v203, %v1139
        %v1229 = vadd.s32 %v204, %v1139
        %v1230 = vadd.s32 %v205, %v1139
        %v1231 = vadd.s32 %v206, %v1139
        %v1232 = vadd.s32 %v207, %v1139
        %v1233 = vadd.s32 %v208, %v1139
        %v1234 = vadd.s32 %v209, %v1139
        %v1235 = vadd.s32 %v210, %v1139
        %v1236 = vadd.s32 %v211, %v1139
        %v1237 = vadd.s32 %v212, %v1139
        %v1238 = vadd.s32 %v213, %v1139
        %v1239 = vadd.s32 %v214, %v1139
        %v1240 = vadd.s32 %v215, %v1139
        %v1241 = vadd.s32 %v216, %v1139
        %v1242 = vadd.s32 %v217, %v1139
        %v1243 = vadd.s32 %v218, %v1139
        %v1244 = vadd.s32 %v219, %v1139
        %v1245 = vadd.s32 %v220, %v1139
        %v1246 = vadd.s32 %v221, %v1139
        %v1247 = vadd.s32 %v222, %v1139
        %v1248 = vadd.s32 %v223, %v1139
        %v1249 = vadd.s32 %v224, %v1139
        %v1250 = vadd.s32 %v225, %v1139
        %v1251 = vadd.s32 %v226, %v1139
        %v1252 = vadd.s32 %v227, %v1139
        %v1253 = vadd.s32 %v228, %v1139
        %v1254 = vadd.s32 %v229, %v1139
        %v1255 = vadd.s32 %v230, %v1139
        %v1256 = vadd.s32 %v231, %v1139
        %v1257 = vadd.s32 %v232, %v1139
        %v1258 = vadd.s32 %v233, %v1139
        %v1259 = vadd.s32 %v234, %v1139
        %v1260 = vadd.s32 %v235, %v1139
        %v1261 = vadd.s32 %v236, %v1139
        %v1262 = vadd.s32 %v237, %v1139
        %v1263 = vadd.s32 %v238, %v1139
        %v1264 = vadd.s32 %v239, %v1139
        %v1265 = vadd.s32 %v240, %v1139
        %v1266 = vadd.s32 %v241, %v1139
        %v1267 = vadd.s32 %v242, %v1139
        %v1268 = vadd.s32 %v243, %v1139
        %v1269 = vadd.s32 %v244, %v1139
        %v1270 = vadd.s32 %v245, %v1139
        %v1271 = vadd.s32 %v246, %v1139
        %v1272 = vadd.s32 %v247, %v1139
        %v1273 = vadd.s32 %v248, %v1139
        %v1274 = vadd.s32 %v249, %v1139
        %v1275 = vadd.s32 %v250, %v1139
        %v1276 = vadd.s32 %v251, %v1139
        %v1277 = vadd.s32 %v252, %v1139
        %v1278 = vadd.s32 %v253, %v1139
        %v1279 = vadd.s32 %v254, %v1139
        %v1280 = vadd.s32 %v255, %v1139
        %v1281 = vadd.s32 %v256, %v1139
        %v1282 = vadd.s32 %v257, %v1139
        %v1283 = vadd.s32 %v258, %v1139
        %v1284 = vadd.s32 %v259, %v1139
        %v1285 = vadd.s32 %v260, %v1139
        %v1286 = vadd.s32 %v261, %v1139
        %v1287 = vadd.s32 %v262, %v1139
        %v1288 = vadd.s32 %v263, %v1139
        %v1289 = vadd.s32 %v264, %v1139
        %v1290 = vadd.s32 %v265, %v1139
        %v1291 = vadd.s32 %v266, %v1139
        %v1292 = vadd.s32 %v267, %v1139
        %v1293 = vadd.s32 %v268, %v1139
        %v1294 = vadd.s32 %v269, %v1139
        %v1295 = vadd.s32 %v270, %v1139
        %v1296 = vadd.s32 %v271, %v1139
        %v1297 = vadd.s32 %v272, %v1139
        %v1298 = vadd.s32 %v273, %v1139
        %v1299 = vadd.s32 %v274, %v1139
        %v1300 = vadd.s32 %v275, %v1139
        %v1301 = vadd.s32 %v276, %v1139
        %v1302 = vadd.s32 %v277, %v1139
        %v1303 = vadd.s32 %v278, %v1139
        %v1304 = vadd.s32 %v279, %v1139
        %v1305 = vadd.s32 %v280, %v1139
        %v1306 = vadd.s32 %v281, %v1139
        %v1307 = vadd.s32 %v282, %v1139
        %v1308 = vadd.s32 %v283, %v1139
        %v1309 = vadd.s32 %v284, %v1139
        %v1310 = vadd.s32 %v285, %v1139
        %v1311 = vadd.s32 %v286, %v1139
        %v1312 = vadd.s32 %v287, %v1139
        %v1313 = vadd.s32 %v288, %v1139
        %v1314 = vadd.s32 %v289, %v1139
        %v1315 = vadd.s32 %v290, %v1139
        %v1316 = vadd.s32 %v291, %v1139
        %v1317 = vadd.s32 %v292, %v1139
        %v1318 = vadd.s32 %v293, %v1139
        %v1319 = vadd.s32 %v294, %v1139
        %v1320 = vadd.s32 %v295, %v1139
        %v1321 = vadd.s32 %v296, %v1139
        %v1322 = vadd.s32 %v297, %v1139
        %v1323 = vadd.s32 %v298, %v1139
        %v1324 = vadd.s32 %v299, %v1139
        %v1325 = vadd.s32 %v300, %v1139
        %v1326 = vadd.s32 %v301, %v1139
        %v1327 = vadd.s32 %v302, %v1139
        %v1328 = vadd.s32 %v303, %v1139
        %v1329 = vadd.s32 %v304, %v1139
        %v1330 = vadd.s32 %v305, %v1139
        %v1331 = vadd.s32 %v306, %v1139
        %v1332 = vadd.s32 %v307, %v1139
        %v1333 = vadd.s32 %v308, %v1139
        %v1334 = vadd.s32 %v309, %v1139
        %v1335 = vadd.s32 %v310, %v1139
        %v1336 = vadd.s32 %v311, %v1139
        %v1337 = vadd.s32 %v312, %v1139
        %v1338 = vadd.s32 %v313, %v1139
        %v1339 = vadd.s32 %v314, %v1139
        %v1340 = vadd.s32 %v315, %v1139
        %v1341 = vadd.s32 %v316, %v1139
        %v1342 = vadd.s32 %v317, %v1139
        %v1343 = vadd.s32 %v318, %v1139
        %v1344 = vadd.s32 %v319, %v1139
        %v1345 = vadd.s32 %v320, %v1139
        %v1346 = vadd.s32 %v321, %v1139
        %v1347 = vadd.s32 %v322, %v1139
        %v1348 = vadd.s32 %v323, %v1139
        %v1349 = vadd.s32 %v324, %v1139
        %v1350 = vadd.s32 %v325, %v1139
        %v1351 = vadd.s32 %v326, %v1139
        %v1352 = vadd.s32 %v327, %v1139
        %v1353 = vadd.s32 %v328, %v1139
        %v1354 = vadd.s32 %v329, %v1139
        %v1355 = vadd.s32 %v330, %v1139
        %v1356 = vadd.s32 %v331, %v1139
        %v1357 = vadd.s32 %v332, %v1139
        %v1358 = vadd.s32 %v333, %v1139
        %v1359 = vadd.s32 %v334, %v1139
        %v1360 = vadd.s32 %v335, %v1139
        %v1361 = vadd.s32 %v336, %v1139
        %v1362 = vadd.s32 %v337, %v1139
        %v1363 = vadd.s32 %v338, %v1139
        %v1364 = vadd.s32 %v339, %v1139
        %v1365 = vadd.s32 %v340, %v1139
        %v1366 = vadd.s32 %v341, %v1139
        %v1367 = vadd.s32 %v342, %v1139
        %v1368 = vadd.s32 %v343, %v1139
        %v1369 = vadd.s32 %v344, %v1139
        %v1370 = vadd.s32 %v345, %v1139
        %v1371 = vadd.s32 %v346, %v1139
        %v1372 = vadd.s32 %v347, %v1139
        %v1373 = vadd.s32 %v348, %v1139
        %v1374 = vadd.s32 %v349, %v1139
        %v1375 = vadd.s32 %v350, %v1139
        %v1376 = vadd.s32 %v351, %v1139
        %v1377 = vadd.s32 %v352, %v1139
        %v1378 = vadd.s32 %v353, %v1139
        %v1379 = vadd.s32 %v354, %v1139
        %v1380 = vadd.s32 %v355, %v1139
        %v1381 = vadd.s32 %v356, %v1139
        %v1382 = vadd.s32 %v357, %v1139
        %v1383 = vadd.s32 %v358, %v1139
        %v1384 = vadd.s32 %v359, %v1139
        %v1385 = vadd.s32 %v360, %v1139
        %v1386 = vadd.s32 %v361, %v1139
        %v1387 = vadd.s32 %v362, %v1139
        %v1388 = vadd.s32 %v363, %v1139
        %v1389 = vadd.s32 %v364, %v1139
        %v1390 = vadd.s32 %v365, %v1139
        %v1391 = vadd.s32 %v366, %v1139
        %v1392 = vadd.s32 %v367, %v1139
        %v1393 = vadd.s32 %v368, %v1139
        %v1394 = vadd.s32 %v369, %v1139
        %v1395 = vadd.s32 %v370, %v1139
        %v1396 = vadd.s32 %v371, %v1139
        %v1397 = vadd.s32 %v372, %v1139
        %v1398 = vadd.s32 %v373, %v1139
        %v1399 = vadd.s32 %v374, %v1139
        %v1400 = vadd.s32 %v375, %v1139
        %v1401 = vadd.s32 %v376, %v1139
        %v1402 = vadd.s32 %v377, %v1139
        %v1403 = vadd.s32 %v378, %v1139
        %v1404 = vadd.s32 %v379, %v1139
        %v1405 = vadd.s32 %v380, %v1139
        %v1406 = vadd.s32 %v381, %v1139
        %v1407 = vadd.s32 %v382, %v1139
        %v1408 = vadd.s32 %v383, %v1139
        %v1409 = vadd.s32 %v384, %v1139
        %v1410 = vadd.s32 %v385, %v1139
        %v1411 = vadd.s32 %v386, %v1139
        %v1412 = vadd.s32 %v387, %v1139
        %v1413 = vadd.s32 %v388, %v1139
        %v1414 = vadd.s32 %v389, %v1139
        %v1415 = vadd.s32 %v390, %v1139
        %v1416 = vadd.s32 %v391, %v1139
        %v1417 = vadd.s32 %v392, %v1139
        %v1418 = vadd.s32 %v393, %v1139
        %v1419 = vadd.s32 %v394, %v1139
        %v1420 = vadd.s32 %v395, %v1139
        %v1421 = vadd.s32 %v396, %v1139
        %v1422 = vadd.s32 %v397, %v1139
        %v1423 = vadd.s32 %v398, %v1139
        %v1424 = vadd.s32 %v399, %v1139
        %v1425 = vadd.s32 %v400, %v1139
        %v1426 = vadd.s32 %v401, %v1139
        %v1427 = vadd.s32 %v402, %v1139
        %v1428 = vadd.s32 %v403, %v1139
        %v1429 = vadd.s32 %v404, %v1139
        %v1430 = vadd.s32 %v405, %v1139
        %v1431 = vadd.s32 %v406, %v1139
        %v1432 = vadd.s32 %v407, %v1139
        %v1433 = vadd.s32 %v408, %v1139
        %v1434 = vadd.s32 %v409, %v1139
        %v1435 = vadd.s32 %v410, %v1139
        %v1436 = vadd.s32 %v411, %v1139
        %v1437 = vadd.s32 %v412, %v1139
        %v1438 = vadd.s32 %v413, %v1139
        %v1439 = vadd.s32 %v414, %v1139
        %v1440 = vadd.s32 %v415, %v1139
        %v1441 = vadd.s32 %v416, %v1139
        %v1442 = vadd.s32 %v417, %v1139
        %v1443 = vadd.s32 %v418, %v1139
        %v1444 = vadd.s32 %v419, %v1139
        %v1445 = vadd.s32 %v420, %v1139
        %v1446 = vadd.s32 %v421, %v1139
        %v1447 = vadd.s32 %v422, %v1139
        %v1448 = vadd.s32 %v423, %v1139
        %v1449 = vadd.s32 %v424, %v1139
        %v1450 = vadd.s32 %v425, %v1139
        %v1451 = vadd.s32 %v426, %v1139
        %v1452 = vadd.s32 %v427, %v1139
        %v1453 = vadd.s32 %v428, %v1139
        %v1454 = vadd.s32 %v429, %v1139
        %v1455 = vadd.s32 %v430, %v1139
        %v1456 = vadd.s32 %v431, %v1139
        %v1457 = vadd.s32 %v432, %v1139
        %v1458 = vadd.s32 %v433, %v1139
        %v1459 = vadd.s32 %v434, %v1139
        %v1460 = vadd.s32 %v435, %v1139
        %v1461 = vadd.s32 %v436, %v1139
        %v1462 = vadd.s32 %v437, %v1139
        %v1463 = vadd.s32 %v438, %v1139
        %v1464 = vadd.s32 %v439, %v1139
        %v1465 = vadd.s32 %v440, %v1139
        %v1466 = vadd.s32 %v441, %v1139
        %v1467 = vadd.s32 %v442, %v1139
        %v1468 = vadd.s32 %v443, %v1139
        %v1469 = vadd.s32 %v444, %v1139
        %v1470 = vadd.s32 %v445, %v1139
        %v1471 = vadd.s32 %v446, %v1139
        %v1472 = vadd.s32 %v447, %v1139
        %v1473 = vadd.s32 %v448, %v1139
        %v1474 = vadd.s32 %v449, %v1139
        %v1475 = vadd.s32 %v450, %v1139
        %v1476 = vadd.s32 %v451, %v1139
        %v1477 = vadd.s32 %v452, %v1139
        %v1478 = vadd.s32 %v453, %v1139
        %v1479 = vadd.s32 %v454, %v1139
        %v1480 = vadd.s32 %v455, %v1139
        %v1481 = vadd.s32 %v456, %v1139
        %v1482 = vadd.s32 %v457, %v1139
        %v1483 = vadd.s32 %v458, %v1139
        %v1484 = vadd.s32 %v459, %v1139
        %v1485 = vadd.s32 %v460, %v1139
        %v1486 = vadd.s32 %v461, %v1139
        %v1487 = vadd.s32 %v462, %v1139
        %v1488 = vadd.s32 %v463, %v1139
        %v1489 = vadd.s32 %v464, %v1139
        %v1490 = vadd.s32 %v465, %v1139
        %v1491 = vadd.s32 %v466, %v1139
        %v1492 = vadd.s32 %v467, %v1139
        %v1493 = vadd.s32 %v468, %v1139
        %v1494 = vadd.s32 %v469, %v1139
        %v1495 = vadd.s32 %v470, %v1139
        %v1496 = vadd.s32 %v471, %v1139
        %v1497 = vadd.s32 %v472, %v1139
        %v1498 = vadd.s32 %v473, %v1139
        %v1499 = vadd.s32 %v474, %v1139
        %v1500 = vadd.s32 %v475, %v1139
        %v1501 = vadd.s32 %v476, %v1139
        %v1502 = vadd.s32 %v477, %v1139
        %v1503 = vadd.s32 %v478, %v1139
        %v1504 = vadd.s32 %v479, %v1139
        %v1505 = vadd.s32 %v480, %v1139
        %v1506 = vadd.s32 %v481, %v1139
        %v1507 = vadd.s32 %v482, %v1139
        %v1508 = vadd.s32 %v483, %v1139
        %v1509 = vadd.s32 %v484, %v1139
        %v1510 = vadd.s32 %v485, %v1139
        %v1511 = vadd.s32 %v486, %v1139
        %v1512 = vadd.s32 %v487, %v1139
        %v1513 = vadd.s32 %v488, %v1139
        %v1514 = vadd.s32 %v489, %v1139
        %v1515 = vadd.s32 %v490, %v1139
        %v1516 = vadd.s32 %v491, %v1139
        %v1517 = vadd.s32 %v492, %v1139
        %v1518 = vadd.s32 %v493, %v1139
        %v1519 = vadd.s32 %v494, %v1139
        %v1520 = vadd.s32 %v495, %v1139
        %v1521 = vadd.s32 %v496, %v1139
        %v1522 = vadd.s32 %v497, %v1139
        %v1523 = vadd.s32 %v498, %v1139
        %v1524 = vadd.s32 %v499, %v1139
        %v1525 = vadd.s32 %v500, %v1139
        %v1526 = vadd.s32 %v501, %v1139
        %v1527 = vadd.s32 %v502, %v1139
        %v1528 = vadd.s32 %v503, %v1139
        %v1529 = vadd.s32 %v504, %v1139
        %v1530 = vadd.s32 %v505, %v1139
        %v1531 = vadd.s32 %v506, %v1139
        %v1532 = vadd.s32 %v507, %v1139
        %v1533 = vadd.s32 %v508, %v1139
        %v1534 = vadd.s32 %v509, %v1139
        %v1535 = vadd.s32 %v510, %v1139
        %v1536 = vadd.s32 %v511, %v1139
        %v1537 = vadd.s32 %v512, %v1139
        %v1538 = vadd.s32 %v513, %v1139
        %v1539 = vadd.s32 %v514, %v1139
        %v1540 = vadd.s32 %v515, %v1139
        %v1541 = vadd.s32 %v516, %v1139
        %v1542 = vadd.s32 %v517, %v1139
        %v1543 = vadd.s32 %v518, %v1139
        %v1544 = vadd.s32 %v519, %v1139
        %v1545 = vadd.s32 %v520, %v1139
        %v1546 = vadd.s32 %v521, %v1139
        %v1547 = vadd.s32 %v522, %v1139
        %v1548 = vadd.s32 %v523, %v1139
        %v1549 = vadd.s32 %v524, %v1139
        %v1550 = vadd.s32 %v525, %v1139
        %v1551 = vadd.s32 %v526, %v1139
        %v1552 = vadd.s32 %v527, %v1139
        %v1553 = vadd.s32 %v528, %v1139
        %v1554 = vadd.s32 %v529, %v1139
        %v1555 = vadd.s32 %v530, %v1139
        %v1556 = vadd.s32 %v531, %v1139
        %v1557 = vadd.s32 %v532, %v1139
        %v1558 = vadd.s32 %v533, %v1139
        %v1559 = vadd.s32 %v534, %v1139
        %v1560 = vadd.s32 %v535, %v1139
        %v1561 = vadd.s32 %v536, %v1139
        %v1562 = vadd.s32 %v537, %v1139
        %v1563 = vadd.s32 %v538, %v1139
        %v1564 = vadd.s32 %v539, %v1139
        %v1565 = vadd.s32 %v540, %v1139
        %v1566 = vadd.s32 %v541, %v1139
        %v1567 = vadd.s32 %v542, %v1139
        %v1568 = vadd.s32 %v543, %v1139
        %v1569 = vadd.s32 %v544, %v1139
        %v1570 = vadd.s32 %v545, %v1139
        %v1571 = vadd.s32 %v546, %v1139
        %v1572 = vadd.s32 %v547, %v1139
        %v1573 = vadd.s32 %v548, %v1139
        %v1574 = vadd.s32 %v549, %v1139
        %v1575 = vadd.s32 %v550, %v1139
        %v1576 = vadd.s32 %v551, %v1139
        %v1577 = vadd.s32 %v552, %v1139
        %v1578 = vadd.s32 %v553, %v1139
        %v1579 = vadd.s32 %v554, %v1139
        %v1580 = vadd.s32 %v555, %v1139
        %v1581 = vadd.s32 %v556, %v1139
        %v1582 = vadd.s32 %v557, %v1139
        %v1583 = vadd.s32 %v558, %v1139
        %v1584 = vadd.s32 %v559, %v1139
        %v1585 = vadd.s32 %v560, %v1139
        %v1586 = vadd.s32 %v561, %v1139
        %v1587 = vadd.s32 %v562, %v1139
        %v1588 = vadd.s32 %v563, %v1139
        %v1589 = vadd.s32 %v564, %v1139
        %v1590 = vadd.s32 %v565, %v1139
        %v1591 = vadd.s32 %v566, %v1139
        %v1592 = vadd.s32 %v567, %v1139
        %v1593 = vadd.s32 %v568, %v1139
        %v1594 = vadd.s32 %v569, %v1139
        %v1595 = vadd.s32 %v570, %v1139
        %v1596 = vadd.s32 %v571, %v1139
        %v1597 = vadd.s32 %v572, %v1139
        %v1598 = vadd.s32 %v573, %v1139
        %v1599 = vadd.s32 %v574, %v1139
        %v1600 = vadd.s32 %v575, %v1139
        %v1601 = vadd.s32 %v576, %v1139
        %v1602 = vadd.s32 %v577, %v1139
        %v1603 = vadd.s32 %v578, %v1139
        %v1604 = vadd.s32 %v579, %v1139
        %v1605 = vadd.s32 %v580, %v1139
        %v1606 = vadd.s32 %v581, %v1139
        %v1607 = vadd.s32 %v582, %v1139
        %v1608 = vadd.s32 %v583, %v1139
        %v1609 = vadd.s32 %v584, %v1139
        %v1610 = vadd.s32 %v585, %v1139
        %v1611 = vadd.s32 %v586, %v1139
        %v1612 = vadd.s32 %v587, %v1139
        %v1613 = vadd.s32 %v588, %v1139
        %v1614 = vadd.s32 %v589, %v1139
        %v1615 = vadd.s32 %v590, %v1139
        %v1616 = vadd.s32 %v591, %v1139
        %v1617 = vadd.s32 %v592, %v1139
        %v1618 = vadd.s32 %v593, %v1139
        %v1619 = vadd.s32 %v594, %v1139
        %v1620 = vadd.s32 %v595, %v1139
        %v1621 = vadd.s32 %v596, %v1139
        %v1622 = vadd.s32 %v597, %v1139
        %v1623 = vadd.s32 %v598, %v1139
        %v1624 = vadd.s32 %v599, %v1139
        %v1625 = vadd.s32 %v600, %v1139
        %v1626 = vadd.s32 %v601, %v1139
        %v1627 = vadd.s32 %v602, %v1139
        %v1628 = vadd.s32 %v603, %v1139
        %v1629 = vadd.s32 %v604, %v1139
        %v1630 = vadd.s32 %v605, %v1139
        %v1631 = vadd.s32 %v606, %v1139
        %v1632 = vadd.s32 %v607, %v1139
        %v1633 = vadd.s32 %v608, %v1139
        %v1634 = vadd.s32 %v609, %v1139
        %v1635 = vadd.s32 %v610, %v1139
        %v1636 = vadd.s32 %v611, %v1139
        %v1637 = vadd.s32 %v612, %v1139
        %v1638 = vadd.s32 %v613, %v1139
        %v1639 = vadd.s32 %v614, %v1139
        %v1640 = vadd.s32 %v615, %v1139
        %v1641 = vadd.s32 %v616, %v1139
        %v1642 = vadd.s32 %v617, %v1139
        %v1643 = vadd.s32 %v618, %v1139
        %v1644 = vadd.s32 %v619, %v1139
        %v1645 = vadd.s32 %v620, %v1139
        %v1646 = vadd.s32 %v621, %v1139
        %v1647 = vadd.s32 %v622, %v1139
        %v1648 = vadd.s32 %v623, %v1139
        %v1649 = vadd.s32 %v624, %v1139
        %v1650 = vadd.s32 %v625, %v1139
        %v1651 = vadd.s32 %v626, %v1139
        %v1652 = vadd.s32 %v627, %v1139
        %v1653 = vadd.s32 %v628, %v1139
        %v1654 = vadd.s32 %v629, %v1139
        %v1655 = vadd.s32 %v630, %v1139
        %v1656 = vadd.s32 %v631, %v1139
        %v1657 = vadd.s32 %v632, %v1139
        %v1658 = vadd.s32 %v633, %v1139
        %v1659 = vadd.s32 %v634, %v1139
        %v1660 = vadd.s32 %v635, %v1139
        %v1661 = vadd.s32 %v636, %v1139
        %v1662 = vadd.s32 %v637, %v1139
        %v1663 = vadd.s32 %v638, %v1139
        %v1664 = vadd.s32 %v639, %v1139
        %v1665 = vadd.s32 %v640, %v1139
        %v1666 = vadd.s32 %v641, %v1139
        %v1667 = vadd.s32 %v642, %v1139
        %v1668 = vadd.s32 %v643, %v1139
        %v1669 = vadd.s32 %v644, %v1139
        %v1670 = vadd.s32 %v645, %v1139
        %v1671 = vadd.s32 %v646, %v1139
        %v1672 = vadd.s32 %v647, %v1139
        %v1673 = vadd.s32 %v648, %v1139
        %v1674 = vadd.s32 %v649, %v1139
        %v1675 = vadd.s32 %v650, %v1139
        %v1676 = vadd.s32 %v651, %v1139
        %v1677 = vadd.s32 %v652, %v1139
        %v1678 = vadd.s32 %v653, %v1139
        %v1679 = vadd.s32 %v654, %v1139
        %v1680 = vadd.s32 %v655, %v1139
        %v1681 = vadd.s32 %v656, %v1139
        %v1682 = vadd.s32 %v657, %v1139
        %v1683 = vadd.s32 %v658, %v1139
        %v1684 = vadd.s32 %v659, %v1139
        %v1685 = vadd.s32 %v660, %v1139
        %v1686 = vadd.s32 %v661, %v1139
        %v1687 = vadd.s32 %v662, %v1139
        %v1688 = vadd.s32 %v663, %v1139
        %v1689 = vadd.s32 %v664, %v1139
        %v1690 = vadd.s32 %v665, %v1139
        %v1691 = vadd.s32 %v666, %v1139
        %v1692 = vadd.s32 %v667, %v1139
        %v1693 = vadd.s32 %v668, %v1139
        %v1694 = vadd.s32 %v669, %v1139
        %v1695 = vadd.s32 %v670, %v1139
        %v1696 = vadd.s32 %v671, %v1139
        %v1697 = vadd.s32 %v672, %v1139
        %v1698 = vadd.s32 %v673, %v1139
        %v1699 = vadd.s32 %v674, %v1139
        %v1700 = vadd.s32 %v675, %v1139
        %v1701 = vadd.s32 %v676, %v1139
        %v1702 = vadd.s32 %v677, %v1139
        %v1703 = vadd.s32 %v678, %v1139
        %v1704 = vadd.s32 %v679, %v1139
        %v1705 = vadd.s32 %v680, %v1139
        %v1706 = vadd.s32 %v681, %v1139
        %v1707 = vadd.s32 %v682, %v1139
        %v1708 = vadd.s32 %v683, %v1139
        %v1709 = vadd.s32 %v684, %v1139
        %v1710 = vadd.s32 %v685, %v1139
        %v1711 = vadd.s32 %v686, %v1139
        %v1712 = vadd.s32 %v687, %v1139
        %v1713 = vadd.s32 %v688, %v1139
        %v1714 = vadd.s32 %v689, %v1139
        %v1715 = vadd.s32 %v690, %v1139
        %v1716 = vadd.s32 %v691, %v1139
        %v1717 = vadd.s32 %v692, %v1139
        %v1718 = vadd.s32 %v693, %v1139
        %v1719 = vadd.s32 %v694, %v1139
        %v1720 = vadd.s32 %v695, %v1139
        %v1721 = vadd.s32 %v696, %v1139
        %v1722 = vadd.s32 %v697, %v1139
        %v1723 = vadd.s32 %v698, %v1139
        %v1724 = vadd.s32 %v699, %v1139
        %v1725 = vadd.s32 %v700, %v1139
        %v1726 = vadd.s32 %v701, %v1139
        %v1727 = vadd.s32 %v702, %v1139
        %v1728 = vadd.s32 %v703, %v1139
        %v1729 = vadd.s32 %v704, %v1139
        %v1730 = vadd.s32 %v705, %v1139
        %v1731 = vadd.s32 %v706, %v1139
        %v1732 = vadd.s32 %v707, %v1139
        %v1733 = vadd.s32 %v708, %v1139
        %v1734 = vadd.s32 %v709, %v1139
        %v1735 = vadd.s32 %v710, %v1139
        %v1736 = vadd.s32 %v711, %v1139
        %v1737 = vadd.s32 %v712, %v1139
        %v1738 = vadd.s32 %v713, %v1139
        %v1739 = vadd.s32 %v714, %v1139
        %v1740 = vadd.s32 %v715, %v1139
        %v1741 = vadd.s32 %v716, %v1139
        %v1742 = vadd.s32 %v717, %v1139
        %v1743 = vadd.s32 %v718, %v1139
        %v1744 = vadd.s32 %v719, %v1139
        %v1745 = vadd.s32 %v720, %v1139
        %v1746 = vadd.s32 %v721, %v1139
        %v1747 = vadd.s32 %v722, %v1139
        %v1748 = vadd.s32 %v723, %v1139
        %v1749 = vadd.s32 %v724, %v1139
        %v1750 = vadd.s32 %v725, %v1139
        %v1751 = vadd.s32 %v726, %v1139
        %v1752 = vadd.s32 %v727, %v1139
        %v1753 = vadd.s32 %v728, %v1139
        %v1754 = vadd.s32 %v729, %v1139
        %v1755 = vadd.s32 %v730, %v1139
        %v1756 = vadd.s32 %v731, %v1139
        %v1757 = vadd.s32 %v732, %v1139
        %v1758 = vadd.s32 %v733, %v1139
        %v1759 = vadd.s32 %v734, %v1139
        %v1760 = vadd.s32 %v735, %v1139
        %v1761 = vadd.s32 %v736, %v1139
        %v1762 = vadd.s32 %v737, %v1139
        %v1763 = vadd.s32 %v738, %v1139
        %v1764 = vadd.s32 %v739, %v1139
        %v1765 = vadd.s32 %v740, %v1139
        %v1766 = vadd.s32 %v741, %v1139
        %v1767 = vadd.s32 %v742, %v1139
        %v1768 = vadd.s32 %v743, %v1139
        %v1769 = vadd.s32 %v744, %v1139
        %v1770 = vadd.s32 %v745, %v1139
        %v1771 = vadd.s32 %v746, %v1139
        %v1772 = vadd.s32 %v747, %v1139
        %v1773 = vadd.s32 %v748, %v1139
        %v1774 = vadd.s32 %v749, %v1139
        %v1775 = vadd.s32 %v750, %v1139
        %v1776 = vadd.s32 %v751, %v1139
        %v1777 = vadd.s32 %v752, %v1139
        %v1778 = vadd.s32 %v753, %v1139
        %v1779 = vadd.s32 %v754, %v1139
        %v1780 = vadd.s32 %v755, %v1139
        %v1781 = vadd.s32 %v756, %v1139
        %v1782 = vadd.s32 %v757, %v1139
        %v1783 = vadd.s32 %v758, %v1139
        %v1784 = vadd.s32 %v759, %v1139
        %v1785 = vadd.s32 %v760, %v1139
        %v1786 = vadd.s32 %v761, %v1139
        %v1787 = vadd.s32 %v762, %v1139
        %v1788 = vadd.s32 %v763, %v1139
        %v1789 = vadd.s32 %v764, %v1139
        %v1790 = vadd.s32 %v765, %v1139
        %v1791 = vadd.s32 %v766, %v1139
        %v1792 = vadd.s32 %v767, %v1139
        %v1793 = vadd.s32 %v768, %v1139
        %v1794 = vadd.s32 %v769, %v1139
        %v1795 = vadd.s32 %v770, %v1139
        %v1796 = vadd.s32 %v771, %v1139
        %v1797 = vadd.s32 %v772, %v1139
        %v1798 = vadd.s32 %v773, %v1139
        %v1799 = vadd.s32 %v774, %v1139
        %v1800 = vadd.s32 %v775, %v1139
        %v1801 = vadd.s32 %v776, %v1139
        %v1802 = vadd.s32 %v777, %v1139
        %v1803 = vadd.s32 %v778, %v1139
        %v1804 = vadd.s32 %v779, %v1139
        %v1805 = vadd.s32 %v780, %v1139
        %v1806 = vadd.s32 %v781, %v1139
        %v1807 = vadd.s32 %v782, %v1139
        %v1808 = vadd.s32 %v783, %v1139
        %v1809 = vadd.s32 %v784, %v1139
        %v1810 = vadd.s32 %v785, %v1139
        %v1811 = vadd.s32 %v786, %v1139
        %v1812 = vadd.s32 %v787, %v1139
        %v1813 = vadd.s32 %v788, %v1139
        %v1814 = vadd.s32 %v789, %v1139
        %v1815 = vadd.s32 %v790, %v1139
        %v1816 = vadd.s32 %v791, %v1139
        %v1817 = vadd.s32 %v792, %v1139
        %v1818 = vadd.s32 %v793, %v1139
        %v1819 = vadd.s32 %v794, %v1139
        %v1820 = vadd.s32 %v795, %v1139
        %v1821 = vadd.s32 %v796, %v1139
        %v1822 = vadd.s32 %v797, %v1139
        %v1823 = vadd.s32 %v798, %v1139
        %v1824 = vadd.s32 %v799, %v1139
        %v1825 = vadd.s32 %v800, %v1139
        %v1826 = vadd.s32 %v801, %v1139
        %v1827 = vadd.s32 %v802, %v1139
        %v1828 = vadd.s32 %v803, %v1139
        %v1829 = vadd.s32 %v804, %v1139
        %v1830 = vadd.s32 %v805, %v1139
        %v1831 = vadd.s32 %v806, %v1139
        %v1832 = vadd.s32 %v807, %v1139
        %v1833 = vadd.s32 %v808, %v1139
        %v1834 = vadd.s32 %v809, %v1139
        %v1835 = vadd.s32 %v810, %v1139
        %v1836 = vadd.s32 %v811, %v1139
        %v1837 = vadd.s32 %v812, %v1139
        %v1838 = vadd.s32 %v813, %v1139
        %v1839 = vadd.s32 %v814, %v1139
        %v1840 = vadd.s32 %v815, %v1139
        %v1841 = vadd.s32 %v816, %v1139
        %v1842 = vadd.s32 %v817, %v1139
        %v1843 = vadd.s32 %v818, %v1139
        %v1844 = vadd.s32 %v819, %v1139
        %v1845 = vadd.s32 %v820, %v1139
        %v1846 = vadd.s32 %v821, %v1139
        %v1847 = vadd.s32 %v822, %v1139
        %v1848 = vadd.s32 %v823, %v1139
        %v1849 = vadd.s32 %v824, %v1139
        %v1850 = vadd.s32 %v825, %v1139
        %v1851 = vadd.s32 %v826, %v1139
        %v1852 = vadd.s32 %v827, %v1139
        %v1853 = vadd.s32 %v828, %v1139
        %v1854 = vadd.s32 %v829, %v1139
        %v1855 = vadd.s32 %v830, %v1139
        %v1856 = vadd.s32 %v831, %v1139
        %v1857 = vadd.s32 %v832, %v1139
        %v1858 = vadd.s32 %v833, %v1139
        %v1859 = vadd.s32 %v834, %v1139
        %v1860 = vadd.s32 %v835, %v1139
        %v1861 = vadd.s32 %v836, %v1139
        %v1862 = vadd.s32 %v837, %v1139
        %v1863 = vadd.s32 %v838, %v1139
        %v1864 = vadd.s32 %v839, %v1139
        %v1865 = vadd.s32 %v840, %v1139
        %v1866 = vadd.s32 %v841, %v1139
        %v1867 = vadd.s32 %v842, %v1139
        %v1868 = vadd.s32 %v843, %v1139
        %v1869 = vadd.s32 %v844, %v1139
        %v1870 = vadd.s32 %v845, %v1139
        %v1871 = vadd.s32 %v846, %v1139
        %v1872 = vadd.s32 %v847, %v1139
        %v1873 = vadd.s32 %v848, %v1139
        %v1874 = vadd.s32 %v849, %v1139
        %v1875 = vadd.s32 %v850, %v1139
        %v1876 = vadd.s32 %v851, %v1139
        %v1877 = vadd.s32 %v852, %v1139
        %v1878 = vadd.s32 %v853, %v1139
        %v1879 = vadd.s32 %v854, %v1139
        %v1880 = vadd.s32 %v855, %v1139
        %v1881 = vadd.s32 %v856, %v1139
        %v1882 = vadd.s32 %v857, %v1139
        %v1883 = vadd.s32 %v858, %v1139
        %v1884 = vadd.s32 %v859, %v1139
        %v1885 = vadd.s32 %v860, %v1139
        %v1886 = vadd.s32 %v861, %v1139
        %v1887 = vadd.s32 %v862, %v1139
        %v1888 = vadd.s32 %v863, %v1139
        %v1889 = vadd.s32 %v864, %v1139
        %v1890 = vadd.s32 %v865, %v1139
        %v1891 = vadd.s32 %v866, %v1139
        %v1892 = vadd.s32 %v867, %v1139
        %v1893 = vadd.s32 %v868, %v1139
        %v1894 = vadd.s32 %v869, %v1139
        %v1895 = vadd.s32 %v870, %v1139
        %v1896 = vadd.s32 %v871, %v1139
        %v1897 = vadd.s32 %v872, %v1139
        %v1898 = vadd.s32 %v873, %v1139
        %v1899 = vadd.s32 %v874, %v1139
        %v1900 = vadd.s32 %v875, %v1139
        %v1901 = vadd.s32 %v876, %v1139
        %v1902 = vadd.s32 %v877, %v1139
        %v1903 = vadd.s32 %v878, %v1139
        %v1904 = vadd.s32 %v879, %v1139
        %v1905 = vadd.s32 %v880, %v1139
        %v1906 = vadd.s32 %v881, %v1139
        %v1907 = vadd.s32 %v882, %v1139
        %v1908 = vadd.s32 %v883, %v1139
        %v1909 = vadd.s32 %v884, %v1139
        %v1910 = vadd.s32 %v885, %v1139
        %v1911 = vadd.s32 %v886, %v1139
        %v1912 = vadd.s32 %v887, %v1139
        %v1913 = vadd.s32 %v888, %v1139
        %v1914 = vadd.s32 %v889, %v1139
        %v1915 = vadd.s32 %v890, %v1139
        %v1916 = vadd.s32 %v891, %v1139
        %v1917 = vadd.s32 %v892, %v1139
        %v1918 = vadd.s32 %v893, %v1139
        %v1919 = vadd.s32 %v894, %v1139
        %v1920 = vadd.s32 %v895, %v1139
        %v1921 = vadd.s32 %v896, %v1139
        %v1922 = vadd.s32 %v897, %v1139
        %v1923 = vadd.s32 %v898, %v1139
        %v1924 = vadd.s32 %v899, %v1139
        %v1925 = vadd.s32 %v900, %v1139
        %v1926 = vadd.s32 %v901, %v1139
        %v1927 = vadd.s32 %v902, %v1139
        %v1928 = vadd.s32 %v903, %v1139
        %v1929 = vadd.s32 %v904, %v1139
        %v1930 = vadd.s32 %v905, %v1139
        %v1931 = vadd.s32 %v906, %v1139
        %v1932 = vadd.s32 %v907, %v1139
        %v1933 = vadd.s32 %v908, %v1139
        %v1934 = vadd.s32 %v909, %v1139
        %v1935 = vadd.s32 %v910, %v1139
        %v1936 = vadd.s32 %v911, %v1139
        %v1937 = vadd.s32 %v912, %v1139
        %v1938 = vadd.s32 %v913, %v1139
        %v1939 = vadd.s32 %v914, %v1139
        %v1940 = vadd.s32 %v915, %v1139
        %v1941 = vadd.s32 %v916, %v1139
        %v1942 = vadd.s32 %v917, %v1139
        %v1943 = vadd.s32 %v918, %v1139
        %v1944 = vadd.s32 %v919, %v1139
        %v1945 = vadd.s32 %v920, %v1139
        %v1946 = vadd.s32 %v921, %v1139
        %v1947 = vadd.s32 %v922, %v1139
        %v1948 = vadd.s32 %v923, %v1139
        %v1949 = vadd.s32 %v924, %v1139
        %v1950 = vadd.s32 %v925, %v1139
        %v1951 = vadd.s32 %v926, %v1139
        %v1952 = vadd.s32 %v927, %v1139
        %v1953 = vadd.s32 %v928, %v1139
        %v1954 = vadd.s32 %v929, %v1139
        %v1955 = vadd.s32 %v930, %v1139
        %v1956 = vadd.s32 %v931, %v1139
        %v1957 = vadd.s32 %v932, %v1139
        %v1958 = vadd.s32 %v933, %v1139
        %v1959 = vadd.s32 %v934, %v1139
        %v1960 = vadd.s32 %v935, %v1139
        %v1961 = vadd.s32 %v936, %v1139
        %v1962 = vadd.s32 %v937, %v1139
        %v1963 = vadd.s32 %v938, %v1139
        %v1964 = vadd.s32 %v939, %v1139
        %v1965 = vadd.s32 %v940, %v1139
        %v1966 = vadd.s32 %v941, %v1139
        %v1967 = vadd.s32 %v942, %v1139
        %v1968 = vadd.s32 %v943, %v1139
        %v1969 = vadd.s32 %v944, %v1139
        %v1970 = vadd.s32 %v945, %v1139
        %v1971 = vadd.s32 %v946, %v1139
        %v1972 = vadd.s32 %v947, %v1139
        %v1973 = vadd.s32 %v948, %v1139
        %v1974 = vadd.s32 %v949, %v1139
        %v1975 = vadd.s32 %v950, %v1139
        %v1976 = vadd.s32 %v951, %v1139
        %v1977 = vadd.s32 %v952, %v1139
        %v1978 = vadd.s32 %v953, %v1139
        %v1979 = vadd.s32 %v954, %v1139
        %v1980 = vadd.s32 %v955, %v1139
        %v1981 = vadd.s32 %v956, %v1139
        %v1982 = vadd.s32 %v957, %v1139
        %v1983 = vadd.s32 %v958, %v1139
        %v1984 = vadd.s32 %v959, %v1139
        %v1985 = vadd.s32 %v960, %v1139
        %v1986 = vadd.s32 %v961, %v1139
        %v1987 = vadd.s32 %v962, %v1139
        %v1988 = vadd.s32 %v963, %v1139
        %v1989 = vadd.s32 %v964, %v1139
        %v1990 = vadd.s32 %v965, %v1139
        %v1991 = vadd.s32 %v966, %v1139
        %v1992 = vadd.s32 %v967, %v1139
        %v1993 = vadd.s32 %v968, %v1139
        %v1994 = vadd.s32 %v969, %v1139
        %v1995 = vadd.s32 %v970, %v1139
        %v1996 = vadd.s32 %v971, %v1139
        %v1997 = vadd.s32 %v972, %v1139
        %v1998 = vadd.s32 %v973, %v1139
        %v1999 = vadd.s32 %v974, %v1139
        %v2000 = vadd.s32 %v975, %v1139
        %v2001 = vadd.s32 %v976, %v1139
        %v2002 = vadd.s32 %v977, %v1139
        %v2003 = vadd.s32 %v978, %v1139
        %v2004 = vadd.s32 %v979, %v1139
        %v2005 = vadd.s32 %v980, %v1139
        %v2006 = vadd.s32 %v981, %v1139
        %v2007 = vadd.s32 %v982, %v1139
        %v2008 = vadd.s32 %v983, %v1139
        %v2009 = vadd.s32 %v984, %v1139
        %v2010 = vadd.s32 %v985, %v1139
        %v2011 = vadd.s32 %v986, %v1139
        %v2012 = vadd.s32 %v987, %v1139
        %v2013 = vadd.s32 %v988, %v1139
        %v2014 = vadd.s32 %v989, %v1139
        %v2015 = vadd.s32 %v990, %v1139
        %v2016 = vadd.s32 %v991, %v1139
        %v2017 = vadd.s32 %v992, %v1139
        %v2018 = vadd.s32 %v993, %v1139
        %v2019 = vadd.s32 %v994, %v1139
        %v2020 = vadd.s32 %v995, %v1139
        %v2021 = vadd.s32 %v996, %v1139
        %v2022 = vadd.s32 %v997, %v1139
        %v2023 = vadd.s32 %v998, %v1139
        %v2024 = vadd.s32 %v999, %v1139
        %v2025 = vadd.s32 %v1000, %v1139
        %v2026 = vadd.s32 %v1001, %v1139
        %v2027 = vadd.s32 %v1002, %v1139
        %v2028 = vadd.s32 %v1003, %v1139
        %v2029 = vadd.s32 %v1004, %v1139
        %v2030 = vadd.s32 %v1005, %v1139
        %v2031 = vadd.s32 %v1006, %v1139
        %v2032 = vadd.s32 %v1007, %v1139
        %v2033 = vadd.s32 %v1008, %v1139
        %v2034 = vadd.s32 %v1009, %v1139
        %v2035 = vadd.s32 %v1010, %v1139
        %v2036 = vadd.s32 %v1011, %v1139
        %v2037 = vadd.s32 %v1012, %v1139
        %v2038 = vadd.s32 %v1013, %v1139
        %v2039 = vadd.s32 %v1014, %v1139
        %v2040 = vadd.s32 %v1015, %v1139
        %v2041 = vadd.s32 %v1016, %v1139
        %v2042 = vadd.s32 %v1017, %v1139
        %v2043 = vadd.s32 %v1018, %v1139
        %v2044 = vadd.s32 %v1019, %v1139
        %v2045 = vadd.s32 %v1020, %v1139
        %v2046 = vadd.s32 %v1021, %v1139
        %v2047 = vadd.s32 %v1022, %v1139
        %v2048 = vadd.s32 %v1023, %v1139
        %v2049 = vadd.s32 %v1024, %v1139
        %v2050 = vadd.s32 %v1025, %v1139
        %v2051 = vadd.s32 %v1026, %v1139
        %v2052 = vadd.s32 %v1027, %v1139
        %v2053 = vadd.s32 %v1028, %v1139
        %v2054 = vadd.s32 %v1029, %v1139
        %v2055 = vadd.s32 %v1030, %v1139
        %v2056 = vadd.s32 %v1031, %v1139
        %v2057 = vadd.s32 %v1032, %v1139
        %v2058 = vadd.s32 %v1033, %v1139
        %v2059 = vadd.s32 %v1034, %v1139
        %v2060 = vadd.s32 %v1035, %v1139
        %v2061 = vadd.s32 %v1036, %v1139
        %v2062 = vadd.s32 %v1037, %v1139
        %v2063 = vadd.s32 %v1038, %v1139
        %v2064 = vadd.s32 %v1039, %v1139
        %v2065 = vadd.s32 %v1040, %v1139
        %v2066 = vadd.s32 %v1041, %v1139
        %v2067 = vadd.s32 %v1042, %v1139
        %v2068 = vadd.s32 %v1043, %v1139
        %v2069 = vadd.s32 %v1044, %v1139
        %v2070 = vadd.s32 %v1045, %v1139
        %v2071 = vadd.s32 %v1046, %v1139
        %v2072 = vadd.s32 %v1047, %v1139
        %v2073 = vadd.s32 %v1048, %v1139
        %v2074 = vadd.s32 %v1049, %v1139
        %v2075 = vadd.s32 %v1050, %v1139
        %v2076 = vadd.s32 %v1051, %v1139
        %v2077 = vadd.s32 %v1052, %v1139
        %v2078 = vadd.s32 %v1053, %v1139
        %v2079 = vadd.s32 %v1054, %v1139
        %v2080 = vadd.s32 %v1055, %v1139
        %v2081 = vadd.s32 %v1056, %v1139
        %v2082 = vadd.s32 %v1057, %v1139
        %v2083 = vadd.s32 %v1058, %v1139
        %v2084 = vadd.s32 %v1059, %v1139
        %v2085 = vadd.s32 %v1060, %v1139
        %v2086 = vadd.s32 %v1061, %v1139
        %v2087 = vadd.s32 %v1062, %v1139
        %v2088 = vadd.s32 %v1063, %v1139
        %v2089 = vadd.s32 %v1064, %v1139
        %v2090 = vadd.s32 %v1065, %v1139
        %v2091 = vadd.s32 %v1066, %v1139
        %v2092 = vadd.s32 %v1067, %v1139
        %v2093 = vadd.s32 %v1068, %v1139
        %v2094 = vadd.s32 %v1069, %v1139
        %v2095 = vadd.s32 %v1070, %v1139
        %v2096 = vadd.s32 %v1071, %v1139
        %v2097 = vadd.s32 %v1072, %v1139
        %v2098 = vadd.s32 %v1073, %v1139
        %v2099 = vadd.s32 %v1074, %v1139
        %v2100 = vadd.s32 %v1075, %v1139
        %v2101 = vadd.s32 %v1076, %v1139
        %v2102 = vadd.s32 %v1077, %v1139
        %v2103 = vadd.s32 %v1078, %v1139
        %v2104 = vadd.s32 %v1079, %v1139
        %v2105 = vadd.s32 %v1080, %v1139
        %v2106 = vadd.s32 %v1081, %v1139
        %v2107 = vadd.s32 %v1082, %v1139
        %v2108 = vadd.s32 %v1083, %v1139
        %v2109 = vadd.s32 %v1084, %v1139
        %v2110 = vadd.s32 %v1085, %v1139
        %v2111 = vadd.s32 %v1086, %v1139
        %v2112 = vadd.s32 %v1087, %v1139
        %v2113 = vadd.s32 %v1088, %v1139
        %v2114 = vadd.s32 %v1089, %v1139
        %v2115 = vadd.s32 %v1090, %v1139
        %v2116 = vadd.s32 %v1091, %v1139
        %v2117 = vadd.s32 %v1092, %v1139
        %v2118 = vadd.s32 %v1093, %v1139
        %v2119 = vadd.s32 %v1094, %v1139
        %v2120 = vadd.s32 %v1095, %v1139
        %v2121 = vadd.s32 %v1096, %v1139
        %v2122 = vadd.s32 %v1097, %v1139
        %v2123 = vadd.s32 %v1098, %v1139
        %v2124 = vadd.s32 %v1099, %v1139
        %v2125 = vadd.s32 %v1100, %v1139
        %v2126 = vadd.s32 %v1101, %v1139
        %v2127 = vadd.s32 %v1102, %v1139
        %v2128 = vadd.s32 %v1103, %v1139
        %v2129 = vadd.s32 %v1104, %v1139
        %v2130 = vadd.s32 %v1105, %v1139
        %v2131 = vadd.s32 %v1106, %v1139
        %v2132 = vadd.s32 %v1107, %v1139
        %v2133 = vadd.s32 %v1108, %v1139
        %v2134 = vadd.s32 %v1109, %v1139
        %v2135 = vadd.s32 %v1110, %v1139
        %v2136 = vadd.s32 %v1111, %v1139
        %v2137 = vadd.s32 %v1112, %v1139
        %v2138 = vadd.s32 %v1113, %v1139
        %v2139 = vadd.s32 %v1114, %v1139
        %v2140 = vadd.s32 %v1115, %v1139
        %v2141 = vadd.s32 %v1116, %v1139
        %v2142 = vadd.s32 %v1117, %v1139
        %v2143 = vadd.s32 %v1118, %v1139
        %v2144 = vadd.s32 %v1119, %v1139
        %v2145 = vadd.s32 %v1120, %v1139
        %v2146 = vadd.s32 %v1121, %v1139
        %v2147 = vadd.s32 %v1122, %v1139
        %v2148 = vadd.s32 %v1123, %v1139
        %v2149 = vadd.s32 %v1124, %v1139
        %v2150 = vadd.s32 %v1125, %v1139
        %v2151 = vadd.s32 %v1126, %v1139
        %v2152 = vadd.s32 %v1127, %v1139
        %v2153 = vadd.s32 %v1128, %v1139
        %v2154 = vadd.s32 %v1129, %v1139
        %v2155 = vadd.s32 %v1130, %v1139
        %v2156 = vadd.s32 %v1131, %v1139
        %v2157 = vadd.s32 %v1132, %v1139
        %v2158 = vadd.s32 %v1133, %v1139
        %v2159 = vadd.s32 %v1134, %v1139
        %v2160 = vadd.s32 %v1135, %v1139
        %v2161 = vadd.s32 %v1136, %v1139
        %v2162 = vadd.s32 %v1137, %v1139
        %v2163 = vadd.s32 %v1138, %v1139
        %v2164 = vcvt.s32.f32 %v1140
        %v2165 = vcvt.s32.f32 %v1141
        %v2166 = vcvt.s32.f32 %v1142
        %v2167 = vcvt.s32.f32 %v1143
        %v2168 = vcvt.s32.f32 %v1144
        %v2169 = vcvt.s32.f32 %v1145
        %v2170 = vcvt.s32.f32 %v1146
        %v2171 = vcvt.s32.f32 %v1147
        %v2172 = vcvt.s32.f32 %v1148
        %v2173 = vcvt.s32.f32 %v1149
        %v2174 = vcvt.s32.f32 %v1150
        %v2175 = vcvt.s32.f32 %v1151
        %v2176 = vcvt.s32.f32 %v1152
        %v2177 = vcvt.s32.f32 %v1153
        %v2178 = vcvt.s32.f32 %v1154
        %v2179 = vcvt.s32.f32 %v1155
        %v2180 = vcvt.s32.f32 %v1156
        %v2181 = vcvt.s32.f32 %v1157
        %v2182 = vcvt.s32.f32 %v1158
        %v2183 = vcvt.s32.f32 %v1159
        %v2184 = vcvt.s32.f32 %v1160
        %v2185 = vcvt.s32.f32 %v1161
        %v2186 = vcvt.s32.f32 %v1162
        %v2187 = vcvt.s32.f32 %v1163
        %v2188 = vcvt.s32.f32 %v1164
        %v2189 = vcvt.s32.f32 %v1165
        %v2190 = vcvt.s32.f32 %v1166
        %v2191 = vcvt.s32.f32 %v1167
        %v2192 = vcvt.s32.f32 %v1168
        %v2193 = vcvt.s32.f32 %v1169
        %v2194 = vcvt.s32.f32 %v1170
        %v2195 = vcvt.s32.f32 %v1171
        %v2196 = vcvt.s32.f32 %v1172
        %v2197 = vcvt.s32.f32 %v1173
        %v2198 = vcvt.s32.f32 %v1174
        %v2199 = vcvt.s32.f32 %v1175
        %v2200 = vcvt.s32.f32 %v1176
        %v2201 = vcvt.s32.f32 %v1177
        %v2202 = vcvt.s32.f32 %v1178
        %v2203 = vcvt.s32.f32 %v1179
        %v2204 = vcvt.s32.f32 %v1180
        %v2205 = vcvt.s32.f32 %v1181
        %v2206 = vcvt.s32.f32 %v1182
        %v2207 = vcvt.s32.f32 %v1183
        %v2208 = vcvt.s32.f32 %v1184
        %v2209 = vcvt.s32.f32 %v1185
        %v2210 = vcvt.s32.f32 %v1186
        %v2211 = vcvt.s32.f32 %v1187
        %v2212 = vcvt.s32.f32 %v1188
        %v2213 = vcvt.s32.f32 %v1189
        %v2214 = vcvt.s32.f32 %v1190
        %v2215 = vcvt.s32.f32 %v1191
        %v2216 = vcvt.s32.f32 %v1192
        %v2217 = vcvt.s32.f32 %v1193
        %v2218 = vcvt.s32.f32 %v1194
        %v2219 = vcvt.s32.f32 %v1195
        %v2220 = vcvt.s32.f32 %v1196
        %v2221 = vcvt.s32.f32 %v1197
        %v2222 = vcvt.s32.f32 %v1198
        %v2223 = vcvt.s32.f32 %v1199
        %v2224 = vcvt.s32.f32 %v1200
        %v2225 = vcvt.s32.f32 %v1201
        %v2226 = vcvt.s32.f32 %v1202
        %v2227 = vcvt.s32.f32 %v1203
        %v2228 = vcvt.s32.f32 %v1204
        %v2229 = vcvt.s32.f32 %v1205
        %v2230 = vcvt.s32.f32 %v1206
        %v2231 = vcvt.s32.f32 %v1207
        %v2232 = vcvt.s32.f32 %v1208
        %v2233 = vcvt.s32.f32 %v1209
        %v2234 = vcvt.s32.f32 %v1210
        %v2235 = vcvt.s32.f32 %v1211
        %v2236 = vcvt.s32.f32 %v1212
        %v2237 = vcvt.s32.f32 %v1213
        %v2238 = vcvt.s32.f32 %v1214
        %v2239 = vcvt.s32.f32 %v1215
        %v2240 = vcvt.s32.f32 %v1216
        %v2241 = vcvt.s32.f32 %v1217
        %v2242 = vcvt.s32.f32 %v1218
        %v2243 = vcvt.s32.f32 %v1219
        %v2244 = vcvt.s32.f32 %v1220
        %v2245 = vcvt.s32.f32 %v1221
        %v2246 = vcvt.s32.f32 %v1222
        %v2247 = vcvt.s32.f32 %v1223
        %v2248 = vcvt.s32.f32 %v1224
        %v2249 = vcvt.s32.f32 %v1225
        %v2250 = vcvt.s32.f32 %v1226
        %v2251 = vcvt.s32.f32 %v1227
        %v2252 = vcvt.s32.f32 %v1228
        %v2253 = vcvt.s32.f32 %v1229
        %v2254 = vcvt.s32.f32 %v1230
        %v2255 = vcvt.s32.f32 %v1231
        %v2256 = vcvt.s32.f32 %v1232
        %v2257 = vcvt.s32.f32 %v1233
        %v2258 = vcvt.s32.f32 %v1234
        %v2259 = vcvt.s32.f32 %v1235
        %v2260 = vcvt.s32.f32 %v1236
        %v2261 = vcvt.s32.f32 %v1237
        %v2262 = vcvt.s32.f32 %v1238
        %v2263 = vcvt.s32.f32 %v1239
        %v2264 = vcvt.s32.f32 %v1240
        %v2265 = vcvt.s32.f32 %v1241
        %v2266 = vcvt.s32.f32 %v1242
        %v2267 = vcvt.s32.f32 %v1243
        %v2268 = vcvt.s32.f32 %v1244
        %v2269 = vcvt.s32.f32 %v1245
        %v2270 = vcvt.s32.f32 %v1246
        %v2271 = vcvt.s32.f32 %v1247
        %v2272 = vcvt.s32.f32 %v1248
        %v2273 = vcvt.s32.f32 %v1249
        %v2274 = vcvt.s32.f32 %v1250
        %v2275 = vcvt.s32.f32 %v1251
        %v2276 = vcvt.s32.f32 %v1252
        %v2277 = vcvt.s32.f32 %v1253
        %v2278 = vcvt.s32.f32 %v1254
        %v2279 = vcvt.s32.f32 %v1255
        %v2280 = vcvt.s32.f32 %v1256
        %v2281 = vcvt.s32.f32 %v1257
        %v2282 = vcvt.s32.f32 %v1258
        %v2283 = vcvt.s32.f32 %v1259
        %v2284 = vcvt.s32.f32 %v1260
        %v2285 = vcvt.s32.f32 %v1261
        %v2286 = vcvt.s32.f32 %v1262
        %v2287 = vcvt.s32.f32 %v1263
        %v2288 = vcvt.s32.f32 %v1264
        %v2289 = vcvt.s32.f32 %v1265
        %v2290 = vcvt.s32.f32 %v1266
        %v2291 = vcvt.s32.f32 %v1267
        %v2292 = vcvt.s32.f32 %v1268
        %v2293 = vcvt.s32.f32 %v1269
        %v2294 = vcvt.s32.f32 %v1270
        %v2295 = vcvt.s32.f32 %v1271
        %v2296 = vcvt.s32.f32 %v1272
        %v2297 = vcvt.s32.f32 %v1273
        %v2298 = vcvt.s32.f32 %v1274
        %v2299 = vcvt.s32.f32 %v1275
        %v2300 = vcvt.s32.f32 %v1276
        %v2301 = vcvt.s32.f32 %v1277
        %v2302 = vcvt.s32.f32 %v1278
        %v2303 = vcvt.s32.f32 %v1279
        %v2304 = vcvt.s32.f32 %v1280
        %v2305 = vcvt.s32.f32 %v1281
        %v2306 = vcvt.s32.f32 %v1282
        %v2307 = vcvt.s32.f32 %v1283
        %v2308 = vcvt.s32.f32 %v1284
        %v2309 = vcvt.s32.f32 %v1285
        %v2310 = vcvt.s32.f32 %v1286
        %v2311 = vcvt.s32.f32 %v1287
        %v2312 = vcvt.s32.f32 %v1288
        %v2313 = vcvt.s32.f32 %v1289
        %v2314 = vcvt.s32.f32 %v1290
        %v2315 = vcvt.s32.f32 %v1291
        %v2316 = vcvt.s32.f32 %v1292
        %v2317 = vcvt.s32.f32 %v1293
        %v2318 = vcvt.s32.f32 %v1294
        %v2319 = vcvt.s32.f32 %v1295
        %v2320 = vcvt.s32.f32 %v1296
        %v2321 = vcvt.s32.f32 %v1297
        %v2322 = vcvt.s32.f32 %v1298
        %v2323 = vcvt.s32.f32 %v1299
        %v2324 = vcvt.s32.f32 %v1300
        %v2325 = vcvt.s32.f32 %v1301
        %v2326 = vcvt.s32.f32 %v1302
        %v2327 = vcvt.s32.f32 %v1303
        %v2328 = vcvt.s32.f32 %v1304
        %v2329 = vcvt.s32.f32 %v1305
        %v2330 = vcvt.s32.f32 %v1306
        %v2331 = vcvt.s32.f32 %v1307
        %v2332 = vcvt.s32.f32 %v1308
        %v2333 = vcvt.s32.f32 %v1309
        %v2334 = vcvt.s32.f32 %v1310
        %v2335 = vcvt.s32.f32 %v1311
        %v2336 = vcvt.s32.f32 %v1312
        %v2337 = vcvt.s32.f32 %v1313
        %v2338 = vcvt.s32.f32 %v1314
        %v2339 = vcvt.s32.f32 %v1315
        %v2340 = vcvt.s32.f32 %v1316
        %v2341 = vcvt.s32.f32 %v1317
        %v2342 = vcvt.s32.f32 %v1318
        %v2343 = vcvt.s32.f32 %v1319
        %v2344 = vcvt.s32.f32 %v1320
        %v2345 = vcvt.s32.f32 %v1321
        %v2346 = vcvt.s32.f32 %v1322
        %v2347 = vcvt.s32.f32 %v1323
        %v2348 = vcvt.s32.f32 %v1324
        %v2349 = vcvt.s32.f32 %v1325
        %v2350 = vcvt.s32.f32 %v1326
        %v2351 = vcvt.s32.f32 %v1327
        %v2352 = vcvt.s32.f32 %v1328
        %v2353 = vcvt.s32.f32 %v1329
        %v2354 = vcvt.s32.f32 %v1330
        %v2355 = vcvt.s32.f32 %v1331
        %v2356 = vcvt.s32.f32 %v1332
        %v2357 = vcvt.s32.f32 %v1333
        %v2358 = vcvt.s32.f32 %v1334
        %v2359 = vcvt.s32.f32 %v1335
        %v2360 = vcvt.s32.f32 %v1336
        %v2361 = vcvt.s32.f32 %v1337
        %v2362 = vcvt.s32.f32 %v1338
        %v2363 = vcvt.s32.f32 %v1339
        %v2364 = vcvt.s32.f32 %v1340
        %v2365 = vcvt.s32.f32 %v1341
        %v2366 = vcvt.s32.f32 %v1342
        %v2367 = vcvt.s32.f32 %v1343
        %v2368 = vcvt.s32.f32 %v1344
        %v2369 = vcvt.s32.f32 %v1345
        %v2370 = vcvt.s32.f32 %v1346
        %v2371 = vcvt.s32.f32 %v1347
        %v2372 = vcvt.s32.f32 %v1348
        %v2373 = vcvt.s32.f32 %v1349
        %v2374 = vcvt.s32.f32 %v1350
        %v2375 = vcvt.s32.f32 %v1351
        %v2376 = vcvt.s32.f32 %v1352
        %v2377 = vcvt.s32.f32 %v1353
        %v2378 = vcvt.s32.f32 %v1354
        %v2379 = vcvt.s32.f32 %v1355
        %v2380 = vcvt.s32.f32 %v1356
        %v2381 = vcvt.s32.f32 %v1357
        %v2382 = vcvt.s32.f32 %v1358
        %v2383 = vcvt.s32.f32 %v1359
        %v2384 = vcvt.s32.f32 %v1360
        %v2385 = vcvt.s32.f32 %v1361
        %v2386 = vcvt.s32.f32 %v1362
        %v2387 = vcvt.s32.f32 %v1363
        %v2388 = vcvt.s32.f32 %v1364
        %v2389 = vcvt.s32.f32 %v1365
        %v2390 = vcvt.s32.f32 %v1366
        %v2391 = vcvt.s32.f32 %v1367
        %v2392 = vcvt.s32.f32 %v1368
        %v2393 = vcvt.s32.f32 %v1369
        %v2394 = vcvt.s32.f32 %v1370
        %v2395 = vcvt.s32.f32 %v1371
        %v2396 = vcvt.s32.f32 %v1372
        %v2397 = vcvt.s32.f32 %v1373
        %v2398 = vcvt.s32.f32 %v1374
        %v2399 = vcvt.s32.f32 %v1375
        %v2400 = vcvt.s32.f32 %v1376
        %v2401 = vcvt.s32.f32 %v1377
        %v2402 = vcvt.s32.f32 %v1378
        %v2403 = vcvt.s32.f32 %v1379
        %v2404 = vcvt.s32.f32 %v1380
        %v2405 = vcvt.s32.f32 %v1381
        %v2406 = vcvt.s32.f32 %v1382
        %v2407 = vcvt.s32.f32 %v1383
        %v2408 = vcvt.s32.f32 %v1384
        %v2409 = vcvt.s32.f32 %v1385
        %v2410 = vcvt.s32.f32 %v1386
        %v2411 = vcvt.s32.f32 %v1387
        %v2412 = vcvt.s32.f32 %v1388
        %v2413 = vcvt.s32.f32 %v1389
        %v2414 = vcvt.s32.f32 %v1390
        %v2415 = vcvt.s32.f32 %v1391
        %v2416 = vcvt.s32.f32 %v1392
        %v2417 = vcvt.s32.f32 %v1393
        %v2418 = vcvt.s32.f32 %v1394
        %v2419 = vcvt.s32.f32 %v1395
        %v2420 = vcvt.s32.f32 %v1396
        %v2421 = vcvt.s32.f32 %v1397
        %v2422 = vcvt.s32.f32 %v1398
        %v2423 = vcvt.s32.f32 %v1399
        %v2424 = vcvt.s32.f32 %v1400
        %v2425 = vcvt.s32.f32 %v1401
        %v2426 = vcvt.s32.f32 %v1402
        %v2427 = vcvt.s32.f32 %v1403
        %v2428 = vcvt.s32.f32 %v1404
        %v2429 = vcvt.s32.f32 %v1405
        %v2430 = vcvt.s32.f32 %v1406
        %v2431 = vcvt.s32.f32 %v1407
        %v2432 = vcvt.s32.f32 %v1408
        %v2433 = vcvt.s32.f32 %v1409
        %v2434 = vcvt.s32.f32 %v1410
        %v2435 = vcvt.s32.f32 %v1411
        %v2436 = vcvt.s32.f32 %v1412
        %v2437 = vcvt.s32.f32 %v1413
        %v2438 = vcvt.s32.f32 %v1414
        %v2439 = vcvt.s32.f32 %v1415
        %v2440 = vcvt.s32.f32 %v1416
        %v2441 = vcvt.s32.f32 %v1417
        %v2442 = vcvt.s32.f32 %v1418
        %v2443 = vcvt.s32.f32 %v1419
        %v2444 = vcvt.s32.f32 %v1420
        %v2445 = vcvt.s32.f32 %v1421
        %v2446 = vcvt.s32.f32 %v1422
        %v2447 = vcvt.s32.f32 %v1423
        %v2448 = vcvt.s32.f32 %v1424
        %v2449 = vcvt.s32.f32 %v1425
        %v2450 = vcvt.s32.f32 %v1426
        %v2451 = vcvt.s32.f32 %v1427
        %v2452 = vcvt.s32.f32 %v1428
        %v2453 = vcvt.s32.f32 %v1429
        %v2454 = vcvt.s32.f32 %v1430
        %v2455 = vcvt.s32.f32 %v1431
        %v2456 = vcvt.s32.f32 %v1432
        %v2457 = vcvt.s32.f32 %v1433
        %v2458 = vcvt.s32.f32 %v1434
        %v2459 = vcvt.s32.f32 %v1435
        %v2460 = vcvt.s32.f32 %v1436
        %v2461 = vcvt.s32.f32 %v1437
        %v2462 = vcvt.s32.f32 %v1438
        %v2463 = vcvt.s32.f32 %v1439
        %v2464 = vcvt.s32.f32 %v1440
        %v2465 = vcvt.s32.f32 %v1441
        %v2466 = vcvt.s32.f32 %v1442
        %v2467 = vcvt.s32.f32 %v1443
        %v2468 = vcvt.s32.f32 %v1444
        %v2469 = vcvt.s32.f32 %v1445
        %v2470 = vcvt.s32.f32 %v1446
        %v2471 = vcvt.s32.f32 %v1447
        %v2472 = vcvt.s32.f32 %v1448
        %v2473 = vcvt.s32.f32 %v1449
        %v2474 = vcvt.s32.f32 %v1450
        %v2475 = vcvt.s32.f32 %v1451
        %v2476 = vcvt.s32.f32 %v1452
        %v2477 = vcvt.s32.f32 %v1453
        %v2478 = vcvt.s32.f32 %v1454
        %v2479 = vcvt.s32.f32 %v1455
        %v2480 = vcvt.s32.f32 %v1456
        %v2481 = vcvt.s32.f32 %v1457
        %v2482 = vcvt.s32.f32 %v1458
        %v2483 = vcvt.s32.f32 %v1459
        %v2484 = vcvt.s32.f32 %v1460
        %v2485 = vcvt.s32.f32 %v1461
        %v2486 = vcvt.s32.f32 %v1462
        %v2487 = vcvt.s32.f32 %v1463
        %v2488 = vcvt.s32.f32 %v1464
        %v2489 = vcvt.s32.f32 %v1465
        %v2490 = vcvt.s32.f32 %v1466
        %v2491 = vcvt.s32.f32 %v1467
        %v2492 = vcvt.s32.f32 %v1468
        %v2493 = vcvt.s32.f32 %v1469
        %v2494 = vcvt.s32.f32 %v1470
        %v2495 = vcvt.s32.f32 %v1471
        %v2496 = vcvt.s32.f32 %v1472
        %v2497 = vcvt.s32.f32 %v1473
        %v2498 = vcvt.s32.f32 %v1474
        %v2499 = vcvt.s32.f32 %v1475
        %v2500 = vcvt.s32.f32 %v1476
        %v2501 = vcvt.s32.f32 %v1477
        %v2502 = vcvt.s32.f32 %v1478
        %v2503 = vcvt.s32.f32 %v1479
        %v2504 = vcvt.s32.f32 %v1480
        %v2505 = vcvt.s32.f32 %v1481
        %v2506 = vcvt.s32.f32 %v1482
        %v2507 = vcvt.s32.f32 %v1483
        %v2508 = vcvt.s32.f32 %v1484
        %v2509 = vcvt.s32.f32 %v1485
        %v2510 = vcvt.s32.f32 %v1486
        %v2511 = vcvt.s32.f32 %v1487
        %v2512 = vcvt.s32.f32 %v1488
        %v2513 = vcvt.s32.f32 %v1489
        %v2514 = vcvt.s32.f32 %v1490
        %v2515 = vcvt.s32.f32 %v1491
        %v2516 = vcvt.s32.f32 %v1492
        %v2517 = vcvt.s32.f32 %v1493
        %v2518 = vcvt.s32.f32 %v1494
        %v2519 = vcvt.s32.f32 %v1495
        %v2520 = vcvt.s32.f32 %v1496
        %v2521 = vcvt.s32.f32 %v1497
        %v2522 = vcvt.s32.f32 %v1498
        %v2523 = vcvt.s32.f32 %v1499
        %v2524 = vcvt.s32.f32 %v1500
        %v2525 = vcvt.s32.f32 %v1501
        %v2526 = vcvt.s32.f32 %v1502
        %v2527 = vcvt.s32.f32 %v1503
        %v2528 = vcvt.s32.f32 %v1504
        %v2529 = vcvt.s32.f32 %v1505
        %v2530 = vcvt.s32.f32 %v1506
        %v2531 = vcvt.s32.f32 %v1507
        %v2532 = vcvt.s32.f32 %v1508
        %v2533 = vcvt.s32.f32 %v1509
        %v2534 = vcvt.s32.f32 %v1510
        %v2535 = vcvt.s32.f32 %v1511
        %v2536 = vcvt.s32.f32 %v1512
        %v2537 = vcvt.s32.f32 %v1513
        %v2538 = vcvt.s32.f32 %v1514
        %v2539 = vcvt.s32.f32 %v1515
        %v2540 = vcvt.s32.f32 %v1516
        %v2541 = vcvt.s32.f32 %v1517
        %v2542 = vcvt.s32.f32 %v1518
        %v2543 = vcvt.s32.f32 %v1519
        %v2544 = vcvt.s32.f32 %v1520
        %v2545 = vcvt.s32.f32 %v1521
        %v2546 = vcvt.s32.f32 %v1522
        %v2547 = vcvt.s32.f32 %v1523
        %v2548 = vcvt.s32.f32 %v1524
        %v2549 = vcvt.s32.f32 %v1525
        %v2550 = vcvt.s32.f32 %v1526
        %v2551 = vcvt.s32.f32 %v1527
        %v2552 = vcvt.s32.f32 %v1528
        %v2553 = vcvt.s32.f32 %v1529
        %v2554 = vcvt.s32.f32 %v1530
        %v2555 = vcvt.s32.f32 %v1531
        %v2556 = vcvt.s32.f32 %v1532
        %v2557 = vcvt.s32.f32 %v1533
        %v2558 = vcvt.s32.f32 %v1534
        %v2559 = vcvt.s32.f32 %v1535
        %v2560 = vcvt.s32.f32 %v1536
        %v2561 = vcvt.s32.f32 %v1537
        %v2562 = vcvt.s32.f32 %v1538
        %v2563 = vcvt.s32.f32 %v1539
        %v2564 = vcvt.s32.f32 %v1540
        %v2565 = vcvt.s32.f32 %v1541
        %v2566 = vcvt.s32.f32 %v1542
        %v2567 = vcvt.s32.f32 %v1543
        %v2568 = vcvt.s32.f32 %v1544
        %v2569 = vcvt.s32.f32 %v1545
        %v2570 = vcvt.s32.f32 %v1546
        %v2571 = vcvt.s32.f32 %v1547
        %v2572 = vcvt.s32.f32 %v1548
        %v2573 = vcvt.s32.f32 %v1549
        %v2574 = vcvt.s32.f32 %v1550
        %v2575 = vcvt.s32.f32 %v1551
        %v2576 = vcvt.s32.f32 %v1552
        %v2577 = vcvt.s32.f32 %v1553
        %v2578 = vcvt.s32.f32 %v1554
        %v2579 = vcvt.s32.f32 %v1555
        %v2580 = vcvt.s32.f32 %v1556
        %v2581 = vcvt.s32.f32 %v1557
        %v2582 = vcvt.s32.f32 %v1558
        %v2583 = vcvt.s32.f32 %v1559
        %v2584 = vcvt.s32.f32 %v1560
        %v2585 = vcvt.s32.f32 %v1561
        %v2586 = vcvt.s32.f32 %v1562
        %v2587 = vcvt.s32.f32 %v1563
        %v2588 = vcvt.s32.f32 %v1564
        %v2589 = vcvt.s32.f32 %v1565
        %v2590 = vcvt.s32.f32 %v1566
        %v2591 = vcvt.s32.f32 %v1567
        %v2592 = vcvt.s32.f32 %v1568
        %v2593 = vcvt.s32.f32 %v1569
        %v2594 = vcvt.s32.f32 %v1570
        %v2595 = vcvt.s32.f32 %v1571
        %v2596 = vcvt.s32.f32 %v1572
        %v2597 = vcvt.s32.f32 %v1573
        %v2598 = vcvt.s32.f32 %v1574
        %v2599 = vcvt.s32.f32 %v1575
        %v2600 = vcvt.s32.f32 %v1576
        %v2601 = vcvt.s32.f32 %v1577
        %v2602 = vcvt.s32.f32 %v1578
        %v2603 = vcvt.s32.f32 %v1579
        %v2604 = vcvt.s32.f32 %v1580
        %v2605 = vcvt.s32.f32 %v1581
        %v2606 = vcvt.s32.f32 %v1582
        %v2607 = vcvt.s32.f32 %v1583
        %v2608 = vcvt.s32.f32 %v1584
        %v2609 = vcvt.s32.f32 %v1585
        %v2610 = vcvt.s32.f32 %v1586
        %v2611 = vcvt.s32.f32 %v1587
        %v2612 = vcvt.s32.f32 %v1588
        %v2613 = vcvt.s32.f32 %v1589
        %v2614 = vcvt.s32.f32 %v1590
        %v2615 = vcvt.s32.f32 %v1591
        %v2616 = vcvt.s32.f32 %v1592
        %v2617 = vcvt.s32.f32 %v1593
        %v2618 = vcvt.s32.f32 %v1594
        %v2619 = vcvt.s32.f32 %v1595
        %v2620 = vcvt.s32.f32 %v1596
        %v2621 = vcvt.s32.f32 %v1597
        %v2622 = vcvt.s32.f32 %v1598
        %v2623 = vcvt.s32.f32 %v1599
        %v2624 = vcvt.s32.f32 %v1600
        %v2625 = vcvt.s32.f32 %v1601
        %v2626 = vcvt.s32.f32 %v1602
        %v2627 = vcvt.s32.f32 %v1603
        %v2628 = vcvt.s32.f32 %v1604
        %v2629 = vcvt.s32.f32 %v1605
        %v2630 = vcvt.s32.f32 %v1606
        %v2631 = vcvt.s32.f32 %v1607
        %v2632 = vcvt.s32.f32 %v1608
        %v2633 = vcvt.s32.f32 %v1609
        %v2634 = vcvt.s32.f32 %v1610
        %v2635 = vcvt.s32.f32 %v1611
        %v2636 = vcvt.s32.f32 %v1612
        %v2637 = vcvt.s32.f32 %v1613
        %v2638 = vcvt.s32.f32 %v1614
        %v2639 = vcvt.s32.f32 %v1615
        %v2640 = vcvt.s32.f32 %v1616
        %v2641 = vcvt.s32.f32 %v1617
        %v2642 = vcvt.s32.f32 %v1618
        %v2643 = vcvt.s32.f32 %v1619
        %v2644 = vcvt.s32.f32 %v1620
        %v2645 = vcvt.s32.f32 %v1621
        %v2646 = vcvt.s32.f32 %v1622
        %v2647 = vcvt.s32.f32 %v1623
        %v2648 = vcvt.s32.f32 %v1624
        %v2649 = vcvt.s32.f32 %v1625
        %v2650 = vcvt.s32.f32 %v1626
        %v2651 = vcvt.s32.f32 %v1627
        %v2652 = vcvt.s32.f32 %v1628
        %v2653 = vcvt.s32.f32 %v1629
        %v2654 = vcvt.s32.f32 %v1630
        %v2655 = vcvt.s32.f32 %v1631
        %v2656 = vcvt.s32.f32 %v1632
        %v2657 = vcvt.s32.f32 %v1633
        %v2658 = vcvt.s32.f32 %v1634
        %v2659 = vcvt.s32.f32 %v1635
        %v2660 = vcvt.s32.f32 %v1636
        %v2661 = vcvt.s32.f32 %v1637
        %v2662 = vcvt.s32.f32 %v1638
        %v2663 = vcvt.s32.f32 %v1639
        %v2664 = vcvt.s32.f32 %v1640
        %v2665 = vcvt.s32.f32 %v1641
        %v2666 = vcvt.s32.f32 %v1642
        %v2667 = vcvt.s32.f32 %v1643
        %v2668 = vcvt.s32.f32 %v1644
        %v2669 = vcvt.s32.f32 %v1645
        %v2670 = vcvt.s32.f32 %v1646
        %v2671 = vcvt.s32.f32 %v1647
        %v2672 = vcvt.s32.f32 %v1648
        %v2673 = vcvt.s32.f32 %v1649
        %v2674 = vcvt.s32.f32 %v1650
        %v2675 = vcvt.s32.f32 %v1651
        %v2676 = vcvt.s32.f32 %v1652
        %v2677 = vcvt.s32.f32 %v1653
        %v2678 = vcvt.s32.f32 %v1654
        %v2679 = vcvt.s32.f32 %v1655
        %v2680 = vcvt.s32.f32 %v1656
        %v2681 = vcvt.s32.f32 %v1657
        %v2682 = vcvt.s32.f32 %v1658
        %v2683 = vcvt.s32.f32 %v1659
        %v2684 = vcvt.s32.f32 %v1660
        %v2685 = vcvt.s32.f32 %v1661
        %v2686 = vcvt.s32.f32 %v1662
        %v2687 = vcvt.s32.f32 %v1663
        %v2688 = vcvt.s32.f32 %v1664
        %v2689 = vcvt.s32.f32 %v1665
        %v2690 = vcvt.s32.f32 %v1666
        %v2691 = vcvt.s32.f32 %v1667
        %v2692 = vcvt.s32.f32 %v1668
        %v2693 = vcvt.s32.f32 %v1669
        %v2694 = vcvt.s32.f32 %v1670
        %v2695 = vcvt.s32.f32 %v1671
        %v2696 = vcvt.s32.f32 %v1672
        %v2697 = vcvt.s32.f32 %v1673
        %v2698 = vcvt.s32.f32 %v1674
        %v2699 = vcvt.s32.f32 %v1675
        %v2700 = vcvt.s32.f32 %v1676
        %v2701 = vcvt.s32.f32 %v1677
        %v2702 = vcvt.s32.f32 %v1678
        %v2703 = vcvt.s32.f32 %v1679
        %v2704 = vcvt.s32.f32 %v1680
        %v2705 = vcvt.s32.f32 %v1681
        %v2706 = vcvt.s32.f32 %v1682
        %v2707 = vcvt.s32.f32 %v1683
        %v2708 = vcvt.s32.f32 %v1684
        %v2709 = vcvt.s32.f32 %v1685
        %v2710 = vcvt.s32.f32 %v1686
        %v2711 = vcvt.s32.f32 %v1687
        %v2712 = vcvt.s32.f32 %v1688
        %v2713 = vcvt.s32.f32 %v1689
        %v2714 = vcvt.s32.f32 %v1690
        %v2715 = vcvt.s32.f32 %v1691
        %v2716 = vcvt.s32.f32 %v1692
        %v2717 = vcvt.s32.f32 %v1693
        %v2718 = vcvt.s32.f32 %v1694
        %v2719 = vcvt.s32.f32 %v1695
        %v2720 = vcvt.s32.f32 %v1696
        %v2721 = vcvt.s32.f32 %v1697
        %v2722 = vcvt.s32.f32 %v1698
        %v2723 = vcvt.s32.f32 %v1699
        %v2724 = vcvt.s32.f32 %v1700
        %v2725 = vcvt.s32.f32 %v1701
        %v2726 = vcvt.s32.f32 %v1702
        %v2727 = vcvt.s32.f32 %v1703
        %v2728 = vcvt.s32.f32 %v1704
        %v2729 = vcvt.s32.f32 %v1705
        %v2730 = vcvt.s32.f32 %v1706
        %v2731 = vcvt.s32.f32 %v1707
        %v2732 = vcvt.s32.f32 %v1708
        %v2733 = vcvt.s32.f32 %v1709
        %v2734 = vcvt.s32.f32 %v1710
        %v2735 = vcvt.s32.f32 %v1711
        %v2736 = vcvt.s32.f32 %v1712
        %v2737 = vcvt.s32.f32 %v1713
        %v2738 = vcvt.s32.f32 %v1714
        %v2739 = vcvt.s32.f32 %v1715
        %v2740 = vcvt.s32.f32 %v1716
        %v2741 = vcvt.s32.f32 %v1717
        %v2742 = vcvt.s32.f32 %v1718
        %v2743 = vcvt.s32.f32 %v1719
        %v2744 = vcvt.s32.f32 %v1720
        %v2745 = vcvt.s32.f32 %v1721
        %v2746 = vcvt.s32.f32 %v1722
        %v2747 = vcvt.s32.f32 %v1723
        %v2748 = vcvt.s32.f32 %v1724
        %v2749 = vcvt.s32.f32 %v1725
        %v2750 = vcvt.s32.f32 %v1726
        %v2751 = vcvt.s32.f32 %v1727
        %v2752 = vcvt.s32.f32 %v1728
        %v2753 = vcvt.s32.f32 %v1729
        %v2754 = vcvt.s32.f32 %v1730
        %v2755 = vcvt.s32.f32 %v1731
        %v2756 = vcvt.s32.f32 %v1732
        %v2757 = vcvt.s32.f32 %v1733
        %v2758 = vcvt.s32.f32 %v1734
        %v2759 = vcvt.s32.f32 %v1735
        %v2760 = vcvt.s32.f32 %v1736
        %v2761 = vcvt.s32.f32 %v1737
        %v2762 = vcvt.s32.f32 %v1738
        %v2763 = vcvt.s32.f32 %v1739
        %v2764 = vcvt.s32.f32 %v1740
        %v2765 = vcvt.s32.f32 %v1741
        %v2766 = vcvt.s32.f32 %v1742
        %v2767 = vcvt.s32.f32 %v1743
        %v2768 = vcvt.s32.f32 %v1744
        %v2769 = vcvt.s32.f32 %v1745
        %v2770 = vcvt.s32.f32 %v1746
        %v2771 = vcvt.s32.f32 %v1747
        %v2772 = vcvt.s32.f32 %v1748
        %v2773 = vcvt.s32.f32 %v1749
        %v2774 = vcvt.s32.f32 %v1750
        %v2775 = vcvt.s32.f32 %v1751
        %v2776 = vcvt.s32.f32 %v1752
        %v2777 = vcvt.s32.f32 %v1753
        %v2778 = vcvt.s32.f32 %v1754
        %v2779 = vcvt.s32.f32 %v1755
        %v2780 = vcvt.s32.f32 %v1756
        %v2781 = vcvt.s32.f32 %v1757
        %v2782 = vcvt.s32.f32 %v1758
        %v2783 = vcvt.s32.f32 %v1759
        %v2784 = vcvt.s32.f32 %v1760
        %v2785 = vcvt.s32.f32 %v1761
        %v2786 = vcvt.s32.f32 %v1762
        %v2787 = vcvt.s32.f32 %v1763
        %v2788 = vcvt.s32.f32 %v1764
        %v2789 = vcvt.s32.f32 %v1765
        %v2790 = vcvt.s32.f32 %v1766
        %v2791 = vcvt.s32.f32 %v1767
        %v2792 = vcvt.s32.f32 %v1768
        %v2793 = vcvt.s32.f32 %v1769
        %v2794 = vcvt.s32.f32 %v1770
        %v2795 = vcvt.s32.f32 %v1771
        %v2796 = vcvt.s32.f32 %v1772
        %v2797 = vcvt.s32.f32 %v1773
        %v2798 = vcvt.s32.f32 %v1774
        %v2799 = vcvt.s32.f32 %v1775
        %v2800 = vcvt.s32.f32 %v1776
        %v2801 = vcvt.s32.f32 %v1777
        %v2802 = vcvt.s32.f32 %v1778
        %v2803 = vcvt.s32.f32 %v1779
        %v2804 = vcvt.s32.f32 %v1780
        %v2805 = vcvt.s32.f32 %v1781
        %v2806 = vcvt.s32.f32 %v1782
        %v2807 = vcvt.s32.f32 %v1783
        %v2808 = vcvt.s32.f32 %v1784
        %v2809 = vcvt.s32.f32 %v1785
        %v2810 = vcvt.s32.f32 %v1786
        %v2811 = vcvt.s32.f32 %v1787
        %v2812 = vcvt.s32.f32 %v1788
        %v2813 = vcvt.s32.f32 %v1789
        %v2814 = vcvt.s32.f32 %v1790
        %v2815 = vcvt.s32.f32 %v1791
        %v2816 = vcvt.s32.f32 %v1792
        %v2817 = vcvt.s32.f32 %v1793
        %v2818 = vcvt.s32.f32 %v1794
        %v2819 = vcvt.s32.f32 %v1795
        %v2820 = vcvt.s32.f32 %v1796
        %v2821 = vcvt.s32.f32 %v1797
        %v2822 = vcvt.s32.f32 %v1798
        %v2823 = vcvt.s32.f32 %v1799
        %v2824 = vcvt.s32.f32 %v1800
        %v2825 = vcvt.s32.f32 %v1801
        %v2826 = vcvt.s32.f32 %v1802
        %v2827 = vcvt.s32.f32 %v1803
        %v2828 = vcvt.s32.f32 %v1804
        %v2829 = vcvt.s32.f32 %v1805
        %v2830 = vcvt.s32.f32 %v1806
        %v2831 = vcvt.s32.f32 %v1807
        %v2832 = vcvt.s32.f32 %v1808
        %v2833 = vcvt.s32.f32 %v1809
        %v2834 = vcvt.s32.f32 %v1810
        %v2835 = vcvt.s32.f32 %v1811
        %v2836 = vcvt.s32.f32 %v1812
        %v2837 = vcvt.s32.f32 %v1813
        %v2838 = vcvt.s32.f32 %v1814
        %v2839 = vcvt.s32.f32 %v1815
        %v2840 = vcvt.s32.f32 %v1816
        %v2841 = vcvt.s32.f32 %v1817
        %v2842 = vcvt.s32.f32 %v1818
        %v2843 = vcvt.s32.f32 %v1819
        %v2844 = vcvt.s32.f32 %v1820
        %v2845 = vcvt.s32.f32 %v1821
        %v2846 = vcvt.s32.f32 %v1822
        %v2847 = vcvt.s32.f32 %v1823
        %v2848 = vcvt.s32.f32 %v1824
        %v2849 = vcvt.s32.f32 %v1825
        %v2850 = vcvt.s32.f32 %v1826
        %v2851 = vcvt.s32.f32 %v1827
        %v2852 = vcvt.s32.f32 %v1828
        %v2853 = vcvt.s32.f32 %v1829
        %v2854 = vcvt.s32.f32 %v1830
        %v2855 = vcvt.s32.f32 %v1831
        %v2856 = vcvt.s32.f32 %v1832
        %v2857 = vcvt.s32.f32 %v1833
        %v2858 = vcvt.s32.f32 %v1834
        %v2859 = vcvt.s32.f32 %v1835
        %v2860 = vcvt.s32.f32 %v1836
        %v2861 = vcvt.s32.f32 %v1837
        %v2862 = vcvt.s32.f32 %v1838
        %v2863 = vcvt.s32.f32 %v1839
        %v2864 = vcvt.s32.f32 %v1840
        %v2865 = vcvt.s32.f32 %v1841
        %v2866 = vcvt.s32.f32 %v1842
        %v2867 = vcvt.s32.f32 %v1843
        %v2868 = vcvt.s32.f32 %v1844
        %v2869 = vcvt.s32.f32 %v1845
        %v2870 = vcvt.s32.f32 %v1846
        %v2871 = vcvt.s32.f32 %v1847
        %v2872 = vcvt.s32.f32 %v1848
        %v2873 = vcvt.s32.f32 %v1849
        %v2874 = vcvt.s32.f32 %v1850
        %v2875 = vcvt.s32.f32 %v1851
        %v2876 = vcvt.s32.f32 %v1852
        %v2877 = vcvt.s32.f32 %v1853
        %v2878 = vcvt.s32.f32 %v1854
        %v2879 = vcvt.s32.f32 %v1855
        %v2880 = vcvt.s32.f32 %v1856
        %v2881 = vcvt.s32.f32 %v1857
        %v2882 = vcvt.s32.f32 %v1858
        %v2883 = vcvt.s32.f32 %v1859
        %v2884 = vcvt.s32.f32 %v1860
        %v2885 = vcvt.s32.f32 %v1861
        %v2886 = vcvt.s32.f32 %v1862
        %v2887 = vcvt.s32.f32 %v1863
        %v2888 = vcvt.s32.f32 %v1864
        %v2889 = vcvt.s32.f32 %v1865
        %v2890 = vcvt.s32.f32 %v1866
        %v2891 = vcvt.s32.f32 %v1867
        %v2892 = vcvt.s32.f32 %v1868
        %v2893 = vcvt.s32.f32 %v1869
        %v2894 = vcvt.s32.f32 %v1870
        %v2895 = vcvt.s32.f32 %v1871
        %v2896 = vcvt.s32.f32 %v1872
        %v2897 = vcvt.s32.f32 %v1873
        %v2898 = vcvt.s32.f32 %v1874
        %v2899 = vcvt.s32.f32 %v1875
        %v2900 = vcvt.s32.f32 %v1876
        %v2901 = vcvt.s32.f32 %v1877
        %v2902 = vcvt.s32.f32 %v1878
        %v2903 = vcvt.s32.f32 %v1879
        %v2904 = vcvt.s32.f32 %v1880
        %v2905 = vcvt.s32.f32 %v1881
        %v2906 = vcvt.s32.f32 %v1882
        %v2907 = vcvt.s32.f32 %v1883
        %v2908 = vcvt.s32.f32 %v1884
        %v2909 = vcvt.s32.f32 %v1885
        %v2910 = vcvt.s32.f32 %v1886
        %v2911 = vcvt.s32.f32 %v1887
        %v2912 = vcvt.s32.f32 %v1888
        %v2913 = vcvt.s32.f32 %v1889
        %v2914 = vcvt.s32.f32 %v1890
        %v2915 = vcvt.s32.f32 %v1891
        %v2916 = vcvt.s32.f32 %v1892
        %v2917 = vcvt.s32.f32 %v1893
        %v2918 = vcvt.s32.f32 %v1894
        %v2919 = vcvt.s32.f32 %v1895
        %v2920 = vcvt.s32.f32 %v1896
        %v2921 = vcvt.s32.f32 %v1897
        %v2922 = vcvt.s32.f32 %v1898
        %v2923 = vcvt.s32.f32 %v1899
        %v2924 = vcvt.s32.f32 %v1900
        %v2925 = vcvt.s32.f32 %v1901
        %v2926 = vcvt.s32.f32 %v1902
        %v2927 = vcvt.s32.f32 %v1903
        %v2928 = vcvt.s32.f32 %v1904
        %v2929 = vcvt.s32.f32 %v1905
        %v2930 = vcvt.s32.f32 %v1906
        %v2931 = vcvt.s32.f32 %v1907
        %v2932 = vcvt.s32.f32 %v1908
        %v2933 = vcvt.s32.f32 %v1909
        %v2934 = vcvt.s32.f32 %v1910
        %v2935 = vcvt.s32.f32 %v1911
        %v2936 = vcvt.s32.f32 %v1912
        %v2937 = vcvt.s32.f32 %v1913
        %v2938 = vcvt.s32.f32 %v1914
        %v2939 = vcvt.s32.f32 %v1915
        %v2940 = vcvt.s32.f32 %v1916
        %v2941 = vcvt.s32.f32 %v1917
        %v2942 = vcvt.s32.f32 %v1918
        %v2943 = vcvt.s32.f32 %v1919
        %v2944 = vcvt.s32.f32 %v1920
        %v2945 = vcvt.s32.f32 %v1921
        %v2946 = vcvt.s32.f32 %v1922
        %v2947 = vcvt.s32.f32 %v1923
        %v2948 = vcvt.s32.f32 %v1924
        %v2949 = vcvt.s32.f32 %v1925
        %v2950 = vcvt.s32.f32 %v1926
        %v2951 = vcvt.s32.f32 %v1927
        %v2952 = vcvt.s32.f32 %v1928
        %v2953 = vcvt.s32.f32 %v1929
        %v2954 = vcvt.s32.f32 %v1930
        %v2955 = vcvt.s32.f32 %v1931
        %v2956 = vcvt.s32.f32 %v1932
        %v2957 = vcvt.s32.f32 %v1933
        %v2958 = vcvt.s32.f32 %v1934
        %v2959 = vcvt.s32.f32 %v1935
        %v2960 = vcvt.s32.f32 %v1936
        %v2961 = vcvt.s32.f32 %v1937
        %v2962 = vcvt.s32.f32 %v1938
        %v2963 = vcvt.s32.f32 %v1939
        %v2964 = vcvt.s32.f32 %v1940
        %v2965 = vcvt.s32.f32 %v1941
        %v2966 = vcvt.s32.f32 %v1942
        %v2967 = vcvt.s32.f32 %v1943
        %v2968 = vcvt.s32.f32 %v1944
        %v2969 = vcvt.s32.f32 %v1945
        %v2970 = vcvt.s32.f32 %v1946
        %v2971 = vcvt.s32.f32 %v1947
        %v2972 = vcvt.s32.f32 %v1948
        %v2973 = vcvt.s32.f32 %v1949
        %v2974 = vcvt.s32.f32 %v1950
        %v2975 = vcvt.s32.f32 %v1951
        %v2976 = vcvt.s32.f32 %v1952
        %v2977 = vcvt.s32.f32 %v1953
        %v2978 = vcvt.s32.f32 %v1954
        %v2979 = vcvt.s32.f32 %v1955
        %v2980 = vcvt.s32.f32 %v1956
        %v2981 = vcvt.s32.f32 %v1957
        %v2982 = vcvt.s32.f32 %v1958
        %v2983 = vcvt.s32.f32 %v1959
        %v2984 = vcvt.s32.f32 %v1960
        %v2985 = vcvt.s32.f32 %v1961
        %v2986 = vcvt.s32.f32 %v1962
        %v2987 = vcvt.s32.f32 %v1963
        %v2988 = vcvt.s32.f32 %v1964
        %v2989 = vcvt.s32.f32 %v1965
        %v2990 = vcvt.s32.f32 %v1966
        %v2991 = vcvt.s32.f32 %v1967
        %v2992 = vcvt.s32.f32 %v1968
        %v2993 = vcvt.s32.f32 %v1969
        %v2994 = vcvt.s32.f32 %v1970
        %v2995 = vcvt.s32.f32 %v1971
        %v2996 = vcvt.s32.f32 %v1972
        %v2997 = vcvt.s32.f32 %v1973
        %v2998 = vcvt.s32.f32 %v1974
        %v2999 = vcvt.s32.f32 %v1975
        %v3000 = vcvt.s32.f32 %v1976
        %v3001 = vcvt.s32.f32 %v1977
        %v3002 = vcvt.s32.f32 %v1978
        %v3003 = vcvt.s32.f32 %v1979
        %v3004 = vcvt.s32.f32 %v1980
        %v3005 = vcvt.s32.f32 %v1981
        %v3006 = vcvt.s32.f32 %v1982
        %v3007 = vcvt.s32.f32 %v1983
        %v3008 = vcvt.s32.f32 %v1984
        %v3009 = vcvt.s32.f32 %v1985
        %v3010 = vcvt.s32.f32 %v1986
        %v3011 = vcvt.s32.f32 %v1987
        %v3012 = vcvt.s32.f32 %v1988
        %v3013 = vcvt.s32.f32 %v1989
        %v3014 = vcvt.s32.f32 %v1990
        %v3015 = vcvt.s32.f32 %v1991
        %v3016 = vcvt.s32.f32 %v1992
        %v3017 = vcvt.s32.f32 %v1993
        %v3018 = vcvt.s32.f32 %v1994
        %v3019 = vcvt.s32.f32 %v1995
        %v3020 = vcvt.s32.f32 %v1996
        %v3021 = vcvt.s32.f32 %v1997
        %v3022 = vcvt.s32.f32 %v1998
        %v3023 = vcvt.s32.f32 %v1999
        %v3024 = vcvt.s32.f32 %v2000
        %v3025 = vcvt.s32.f32 %v2001
        %v3026 = vcvt.s32.f32 %v2002
        %v3027 = vcvt.s32.f32 %v2003
        %v3028 = vcvt.s32.f32 %v2004
        %v3029 = vcvt.s32.f32 %v2005
        %v3030 = vcvt.s32.f32 %v2006
        %v3031 = vcvt.s32.f32 %v2007
        %v3032 = vcvt.s32.f32 %v2008
        %v3033 = vcvt.s32.f32 %v2009
        %v3034 = vcvt.s32.f32 %v2010
        %v3035 = vcvt.s32.f32 %v2011
        %v3036 = vcvt.s32.f32 %v2012
        %v3037 = vcvt.s32.f32 %v2013
        %v3038 = vcvt.s32.f32 %v2014
        %v3039 = vcvt.s32.f32 %v2015
        %v3040 = vcvt.s32.f32 %v2016
        %v3041 = vcvt.s32.f32 %v2017
        %v3042 = vcvt.s32.f32 %v2018
        %v3043 = vcvt.s32.f32 %v2019
        %v3044 = vcvt.s32.f32 %v2020
        %v3045 = vcvt.s32.f32 %v2021
        %v3046 = vcvt.s32.f32 %v2022
        %v3047 = vcvt.s32.f32 %v2023
        %v3048 = vcvt.s32.f32 %v2024
        %v3049 = vcvt.s32.f32 %v2025
        %v3050 = vcvt.s32.f32 %v2026
        %v3051 = vcvt.s32.f32 %v2027
        %v3052 = vcvt.s32.f32 %v2028
        %v3053 = vcvt.s32.f32 %v2029
        %v3054 = vcvt.s32.f32 %v2030
        %v3055 = vcvt.s32.f32 %v2031
        %v3056 = vcvt.s32.f32 %v2032
        %v3057 = vcvt.s32.f32 %v2033
        %v3058 = vcvt.s32.f32 %v2034
        %v3059 = vcvt.s32.f32 %v2035
        %v3060 = vcvt.s32.f32 %v2036
        %v3061 = vcvt.s32.f32 %v2037
        %v3062 = vcvt.s32.f32 %v2038
        %v3063 = vcvt.s32.f32 %v2039
        %v3064 = vcvt.s32.f32 %v2040
        %v3065 = vcvt.s32.f32 %v2041
        %v3066 = vcvt.s32.f32 %v2042
        %v3067 = vcvt.s32.f32 %v2043
        %v3068 = vcvt.s32.f32 %v2044
        %v3069 = vcvt.s32.f32 %v2045
        %v3070 = vcvt.s32.f32 %v2046
        %v3071 = vcvt.s32.f32 %v2047
        %v3072 = vcvt.s32.f32 %v2048
        %v3073 = vcvt.s32.f32 %v2049
        %v3074 = vcvt.s32.f32 %v2050
        %v3075 = vcvt.s32.f32 %v2051
        %v3076 = vcvt.s32.f32 %v2052
        %v3077 = vcvt.s32.f32 %v2053
        %v3078 = vcvt.s32.f32 %v2054
        %v3079 = vcvt.s32.f32 %v2055
        %v3080 = vcvt.s32.f32 %v2056
        %v3081 = vcvt.s32.f32 %v2057
        %v3082 = vcvt.s32.f32 %v2058
        %v3083 = vcvt.s32.f32 %v2059
        %v3084 = vcvt.s32.f32 %v2060
        %v3085 = vcvt.s32.f32 %v2061
        %v3086 = vcvt.s32.f32 %v2062
        %v3087 = vcvt.s32.f32 %v2063
        %v3088 = vcvt.s32.f32 %v2064
        %v3089 = vcvt.s32.f32 %v2065
        %v3090 = vcvt.s32.f32 %v2066
        %v3091 = vcvt.s32.f32 %v2067
        %v3092 = vcvt.s32.f32 %v2068
        %v3093 = vcvt.s32.f32 %v2069
        %v3094 = vcvt.s32.f32 %v2070
        %v3095 = vcvt.s32.f32 %v2071
        %v3096 = vcvt.s32.f32 %v2072
        %v3097 = vcvt.s32.f32 %v2073
        %v3098 = vcvt.s32.f32 %v2074
        %v3099 = vcvt.s32.f32 %v2075
        %v3100 = vcvt.s32.f32 %v2076
        %v3101 = vcvt.s32.f32 %v2077
        %v3102 = vcvt.s32.f32 %v2078
        %v3103 = vcvt.s32.f32 %v2079
        %v3104 = vcvt.s32.f32 %v2080
        %v3105 = vcvt.s32.f32 %v2081
        %v3106 = vcvt.s32.f32 %v2082
        %v3107 = vcvt.s32.f32 %v2083
        %v3108 = vcvt.s32.f32 %v2084
        %v3109 = vcvt.s32.f32 %v2085
        %v3110 = vcvt.s32.f32 %v2086
        %v3111 = vcvt.s32.f32 %v2087
        %v3112 = vcvt.s32.f32 %v2088
        %v3113 = vcvt.s32.f32 %v2089
        %v3114 = vcvt.s32.f32 %v2090
        %v3115 = vcvt.s32.f32 %v2091
        %v3116 = vcvt.s32.f32 %v2092
        %v3117 = vcvt.s32.f32 %v2093
        %v3118 = vcvt.s32.f32 %v2094
        %v3119 = vcvt.s32.f32 %v2095
        %v3120 = vcvt.s32.f32 %v2096
        %v3121 = vcvt.s32.f32 %v2097
        %v3122 = vcvt.s32.f32 %v2098
        %v3123 = vcvt.s32.f32 %v2099
        %v3124 = vcvt.s32.f32 %v2100
        %v3125 = vcvt.s32.f32 %v2101
        %v3126 = vcvt.s32.f32 %v2102
        %v3127 = vcvt.s32.f32 %v2103
        %v3128 = vcvt.s32.f32 %v2104
        %v3129 = vcvt.s32.f32 %v2105
        %v3130 = vcvt.s32.f32 %v2106
        %v3131 = vcvt.s32.f32 %v2107
        %v3132 = vcvt.s32.f32 %v2108
        %v3133 = vcvt.s32.f32 %v2109
        %v3134 = vcvt.s32.f32 %v2110
        %v3135 = vcvt.s32.f32 %v2111
        %v3136 = vcvt.s32.f32 %v2112
        %v3137 = vcvt.s32.f32 %v2113
        %v3138 = vcvt.s32.f32 %v2114
        %v3139 = vcvt.s32.f32 %v2115
        %v3140 = vcvt.s32.f32 %v2116
        %v3141 = vcvt.s32.f32 %v2117
        %v3142 = vcvt.s32.f32 %v2118
        %v3143 = vcvt.s32.f32 %v2119
        %v3144 = vcvt.s32.f32 %v2120
        %v3145 = vcvt.s32.f32 %v2121
        %v3146 = vcvt.s32.f32 %v2122
        %v3147 = vcvt.s32.f32 %v2123
        %v3148 = vcvt.s32.f32 %v2124
        %v3149 = vcvt.s32.f32 %v2125
        %v3150 = vcvt.s32.f32 %v2126
        %v3151 = vcvt.s32.f32 %v2127
        %v3152 = vcvt.s32.f32 %v2128
        %v3153 = vcvt.s32.f32 %v2129
        %v3154 = vcvt.s32.f32 %v2130
        %v3155 = vcvt.s32.f32 %v2131
        %v3156 = vcvt.s32.f32 %v2132
        %v3157 = vcvt.s32.f32 %v2133
        %v3158 = vcvt.s32.f32 %v2134
        %v3159 = vcvt.s32.f32 %v2135
        %v3160 = vcvt.s32.f32 %v2136
        %v3161 = vcvt.s32.f32 %v2137
        %v3162 = vcvt.s32.f32 %v2138
        %v3163 = vcvt.s32.f32 %v2139
        %v3164 = vcvt.s32.f32 %v2140
        %v3165 = vcvt.s32.f32 %v2141
        %v3166 = vcvt.s32.f32 %v2142
        %v3167 = vcvt.s32.f32 %v2143
        %v3168 = vcvt.s32.f32 %v2144
        %v3169 = vcvt.s32.f32 %v2145
        %v3170 = vcvt.s32.f32 %v2146
        %v3171 = vcvt.s32.f32 %v2147
        %v3172 = vcvt.s32.f32 %v2148
        %v3173 = vcvt.s32.f32 %v2149
        %v3174 = vcvt.s32.f32 %v2150
        %v3175 = vcvt.s32.f32 %v2151
        %v3176 = vcvt.s32.f32 %v2152
        %v3177 = vcvt.s32.f32 %v2153
        %v3178 = vcvt.s32.f32 %v2154
        %v3179 = vcvt.s32.f32 %v2155
        %v3180 = vcvt.s32.f32 %v2156
        %v3181 = vcvt.s32.f32 %v2157
        %v3182 = vcvt.s32.f32 %v2158
        %v3183 = vcvt.s32.f32 %v2159
        %v3184 = vcvt.s32.f32 %v2160
        %v3185 = vcvt.s32.f32 %v2161
        %v3186 = vcvt.s32.f32 %v2162
        %v3187 = vcvt.s32.f32 %v2163
        %v3188 = vld [vmem:[#allocation2] sm:$0x1]
        %v3190 = vperm.slane %v3188, 0
        %v3192 = vmul.f32 %v2164, %v3190
        %v3193 = vmul.f32 %v2165, %v3190
        %v3194 = vmul.f32 %v2166, %v3190
        %v3195 = vmul.f32 %v2167, %v3190
        %v3196 = vmul.f32 %v2168, %v3190
        %v3197 = vmul.f32 %v2169, %v3190
        %v3198 = vmul.f32 %v2170, %v3190
        %v3199 = vmul.f32 %v2171, %v3190
        %v3200 = vmul.f32 %v2172, %v3190
        %v3201 = vmul.f32 %v2173, %v3190
        %v3202 = vmul.f32 %v2174, %v3190
        %v3203 = vmul.f32 %v2175, %v3190
        %v3204 = vmul.f32 %v2176, %v3190
        %v3205 = vmul.f32 %v2177, %v3190
        %v3206 = vmul.f32 %v2178, %v3190
        %v3207 = vmul.f32 %v2179, %v3190
        %v3208 = vmul.f32 %v2180, %v3190
        %v3209 = vmul.f32 %v2181, %v3190
        %v3210 = vmul.f32 %v2182, %v3190
        %v3211 = vmul.f32 %v2183, %v3190
        %v3212 = vmul.f32 %v2184, %v3190
        %v3213 = vmul.f32 %v2185, %v3190
        %v3214 = vmul.f32 %v2186, %v3190
        %v3215 = vmul.f32 %v2187, %v3190
        %v3216 = vmul.f32 %v2188, %v3190
        %v3217 = vmul.f32 %v2189, %v3190
        %v3218 = vmul.f32 %v2190, %v3190
        %v3219 = vmul.f32 %v2191, %v3190
        %v3220 = vmul.f32 %v2192, %v3190
        %v3221 = vmul.f32 %v2193, %v3190
        %v3222 = vmul.f32 %v2194, %v3190
        %v3223 = vmul.f32 %v2195, %v3190
        %v3224 = vmul.f32 %v2196, %v3190
        %v3225 = vmul.f32 %v2197, %v3190
        %v3226 = vmul.f32 %v2198, %v3190
        %v3227 = vmul.f32 %v2199, %v3190
        %v3228 = vmul.f32 %v2200, %v3190
        %v3229 = vmul.f32 %v2201, %v3190
        %v3230 = vmul.f32 %v2202, %v3190
        %v3231 = vmul.f32 %v2203, %v3190
        %v3232 = vmul.f32 %v2204, %v3190
        %v3233 = vmul.f32 %v2205, %v3190
        %v3234 = vmul.f32 %v2206, %v3190
        %v3235 = vmul.f32 %v2207, %v3190
        %v3236 = vmul.f32 %v2208, %v3190
        %v3237 = vmul.f32 %v2209, %v3190
        %v3238 = vmul.f32 %v2210, %v3190
        %v3239 = vmul.f32 %v2211, %v3190
        %v3240 = vmul.f32 %v2212, %v3190
        %v3241 = vmul.f32 %v2213, %v3190
        %v3242 = vmul.f32 %v2214, %v3190
        %v3243 = vmul.f32 %v2215, %v3190
        %v3244 = vmul.f32 %v2216, %v3190
        %v3245 = vmul.f32 %v2217, %v3190
        %v3246 = vmul.f32 %v2218, %v3190
        %v3247 = vmul.f32 %v2219, %v3190
        %v3248 = vmul.f32 %v2220, %v3190
        %v3249 = vmul.f32 %v2221, %v3190
        %v3250 = vmul.f32 %v2222, %v3190
        %v3251 = vmul.f32 %v2223, %v3190
        %v3252 = vmul.f32 %v2224, %v3190
        %v3253 = vmul.f32 %v2225, %v3190
        %v3254 = vmul.f32 %v2226, %v3190
        %v3255 = vmul.f32 %v2227, %v3190
        %v3256 = vmul.f32 %v2228, %v3190
        %v3257 = vmul.f32 %v2229, %v3190
        %v3258 = vmul.f32 %v2230, %v3190
        %v3259 = vmul.f32 %v2231, %v3190
        %v3260 = vmul.f32 %v2232, %v3190
        %v3261 = vmul.f32 %v2233, %v3190
        %v3262 = vmul.f32 %v2234, %v3190
        %v3263 = vmul.f32 %v2235, %v3190
        %v3264 = vmul.f32 %v2236, %v3190
        %v3265 = vmul.f32 %v2237, %v3190
        %v3266 = vmul.f32 %v2238, %v3190
        %v3267 = vmul.f32 %v2239, %v3190
        %v3268 = vmul.f32 %v2240, %v3190
        %v3269 = vmul.f32 %v2241, %v3190
        %v3270 = vmul.f32 %v2242, %v3190
        %v3271 = vmul.f32 %v2243, %v3190
        %v3272 = vmul.f32 %v2244, %v3190
        %v3273 = vmul.f32 %v2245, %v3190
        %v3274 = vmul.f32 %v2246, %v3190
        %v3275 = vmul.f32 %v2247, %v3190
        %v3276 = vmul.f32 %v2248, %v3190
        %v3277 = vmul.f32 %v2249, %v3190
        %v3278 = vmul.f32 %v2250, %v3190
        %v3279 = vmul.f32 %v2251, %v3190
        %v3280 = vmul.f32 %v2252, %v3190
        %v3281 = vmul.f32 %v2253, %v3190
        %v3282 = vmul.f32 %v2254, %v3190
        %v3283 = vmul.f32 %v2255, %v3190
        %v3284 = vmul.f32 %v2256, %v3190
        %v3285 = vmul.f32 %v2257, %v3190
        %v3286 = vmul.f32 %v2258, %v3190
        %v3287 = vmul.f32 %v2259, %v3190
        %v3288 = vmul.f32 %v2260, %v3190
        %v3289 = vmul.f32 %v2261, %v3190
        %v3290 = vmul.f32 %v2262, %v3190
        %v3291 = vmul.f32 %v2263, %v3190
        %v3292 = vmul.f32 %v2264, %v3190
        %v3293 = vmul.f32 %v2265, %v3190
        %v3294 = vmul.f32 %v2266, %v3190
        %v3295 = vmul.f32 %v2267, %v3190
        %v3296 = vmul.f32 %v2268, %v3190
        %v3297 = vmul.f32 %v2269, %v3190
        %v3298 = vmul.f32 %v2270, %v3190
        %v3299 = vmul.f32 %v2271, %v3190
        %v3300 = vmul.f32 %v2272, %v3190
        %v3301 = vmul.f32 %v2273, %v3190
        %v3302 = vmul.f32 %v2274, %v3190
        %v3303 = vmul.f32 %v2275, %v3190
        %v3304 = vmul.f32 %v2276, %v3190
        %v3305 = vmul.f32 %v2277, %v3190
        %v3306 = vmul.f32 %v2278, %v3190
        %v3307 = vmul.f32 %v2279, %v3190
        %v3308 = vmul.f32 %v2280, %v3190
        %v3309 = vmul.f32 %v2281, %v3190
        %v3310 = vmul.f32 %v2282, %v3190
        %v3311 = vmul.f32 %v2283, %v3190
        %v3312 = vmul.f32 %v2284, %v3190
        %v3313 = vmul.f32 %v2285, %v3190
        %v3314 = vmul.f32 %v2286, %v3190
        %v3315 = vmul.f32 %v2287, %v3190
        %v3316 = vmul.f32 %v2288, %v3190
        %v3317 = vmul.f32 %v2289, %v3190
        %v3318 = vmul.f32 %v2290, %v3190
        %v3319 = vmul.f32 %v2291, %v3190
        %v3320 = vmul.f32 %v2292, %v3190
        %v3321 = vmul.f32 %v2293, %v3190
        %v3322 = vmul.f32 %v2294, %v3190
        %v3323 = vmul.f32 %v2295, %v3190
        %v3324 = vmul.f32 %v2296, %v3190
        %v3325 = vmul.f32 %v2297, %v3190
        %v3326 = vmul.f32 %v2298, %v3190
        %v3327 = vmul.f32 %v2299, %v3190
        %v3328 = vmul.f32 %v2300, %v3190
        %v3329 = vmul.f32 %v2301, %v3190
        %v3330 = vmul.f32 %v2302, %v3190
        %v3331 = vmul.f32 %v2303, %v3190
        %v3332 = vmul.f32 %v2304, %v3190
        %v3333 = vmul.f32 %v2305, %v3190
        %v3334 = vmul.f32 %v2306, %v3190
        %v3335 = vmul.f32 %v2307, %v3190
        %v3336 = vmul.f32 %v2308, %v3190
        %v3337 = vmul.f32 %v2309, %v3190
        %v3338 = vmul.f32 %v2310, %v3190
        %v3339 = vmul.f32 %v2311, %v3190
        %v3340 = vmul.f32 %v2312, %v3190
        %v3341 = vmul.f32 %v2313, %v3190
        %v3342 = vmul.f32 %v2314, %v3190
        %v3343 = vmul.f32 %v2315, %v3190
        %v3344 = vmul.f32 %v2316, %v3190
        %v3345 = vmul.f32 %v2317, %v3190
        %v3346 = vmul.f32 %v2318, %v3190
        %v3347 = vmul.f32 %v2319, %v3190
        %v3348 = vmul.f32 %v2320, %v3190
        %v3349 = vmul.f32 %v2321, %v3190
        %v3350 = vmul.f32 %v2322, %v3190
        %v3351 = vmul.f32 %v2323, %v3190
        %v3352 = vmul.f32 %v2324, %v3190
        %v3353 = vmul.f32 %v2325, %v3190
        %v3354 = vmul.f32 %v2326, %v3190
        %v3355 = vmul.f32 %v2327, %v3190
        %v3356 = vmul.f32 %v2328, %v3190
        %v3357 = vmul.f32 %v2329, %v3190
        %v3358 = vmul.f32 %v2330, %v3190
        %v3359 = vmul.f32 %v2331, %v3190
        %v3360 = vmul.f32 %v2332, %v3190
        %v3361 = vmul.f32 %v2333, %v3190
        %v3362 = vmul.f32 %v2334, %v3190
        %v3363 = vmul.f32 %v2335, %v3190
        %v3364 = vmul.f32 %v2336, %v3190
        %v3365 = vmul.f32 %v2337, %v3190
        %v3366 = vmul.f32 %v2338, %v3190
        %v3367 = vmul.f32 %v2339, %v3190
        %v3368 = vmul.f32 %v2340, %v3190
        %v3369 = vmul.f32 %v2341, %v3190
        %v3370 = vmul.f32 %v2342, %v3190
        %v3371 = vmul.f32 %v2343, %v3190
        %v3372 = vmul.f32 %v2344, %v3190
        %v3373 = vmul.f32 %v2345, %v3190
        %v3374 = vmul.f32 %v2346, %v3190
        %v3375 = vmul.f32 %v2347, %v3190
        %v3376 = vmul.f32 %v2348, %v3190
        %v3377 = vmul.f32 %v2349, %v3190
        %v3378 = vmul.f32 %v2350, %v3190
        %v3379 = vmul.f32 %v2351, %v3190
        %v3380 = vmul.f32 %v2352, %v3190
        %v3381 = vmul.f32 %v2353, %v3190
        %v3382 = vmul.f32 %v2354, %v3190
        %v3383 = vmul.f32 %v2355, %v3190
        %v3384 = vmul.f32 %v2356, %v3190
        %v3385 = vmul.f32 %v2357, %v3190
        %v3386 = vmul.f32 %v2358, %v3190
        %v3387 = vmul.f32 %v2359, %v3190
        %v3388 = vmul.f32 %v2360, %v3190
        %v3389 = vmul.f32 %v2361, %v3190
        %v3390 = vmul.f32 %v2362, %v3190
        %v3391 = vmul.f32 %v2363, %v3190
        %v3392 = vmul.f32 %v2364, %v3190
        %v3393 = vmul.f32 %v2365, %v3190
        %v3394 = vmul.f32 %v2366, %v3190
        %v3395 = vmul.f32 %v2367, %v3190
        %v3396 = vmul.f32 %v2368, %v3190
        %v3397 = vmul.f32 %v2369, %v3190
        %v3398 = vmul.f32 %v2370, %v3190
        %v3399 = vmul.f32 %v2371, %v3190
        %v3400 = vmul.f32 %v2372, %v3190
        %v3401 = vmul.f32 %v2373, %v3190
        %v3402 = vmul.f32 %v2374, %v3190
        %v3403 = vmul.f32 %v2375, %v3190
        %v3404 = vmul.f32 %v2376, %v3190
        %v3405 = vmul.f32 %v2377, %v3190
        %v3406 = vmul.f32 %v2378, %v3190
        %v3407 = vmul.f32 %v2379, %v3190
        %v3408 = vmul.f32 %v2380, %v3190
        %v3409 = vmul.f32 %v2381, %v3190
        %v3410 = vmul.f32 %v2382, %v3190
        %v3411 = vmul.f32 %v2383, %v3190
        %v3412 = vmul.f32 %v2384, %v3190
        %v3413 = vmul.f32 %v2385, %v3190
        %v3414 = vmul.f32 %v2386, %v3190
        %v3415 = vmul.f32 %v2387, %v3190
        %v3416 = vmul.f32 %v2388, %v3190
        %v3417 = vmul.f32 %v2389, %v3190
        %v3418 = vmul.f32 %v2390, %v3190
        %v3419 = vmul.f32 %v2391, %v3190
        %v3420 = vmul.f32 %v2392, %v3190
        %v3421 = vmul.f32 %v2393, %v3190
        %v3422 = vmul.f32 %v2394, %v3190
        %v3423 = vmul.f32 %v2395, %v3190
        %v3424 = vmul.f32 %v2396, %v3190
        %v3425 = vmul.f32 %v2397, %v3190
        %v3426 = vmul.f32 %v2398, %v3190
        %v3427 = vmul.f32 %v2399, %v3190
        %v3428 = vmul.f32 %v2400, %v3190
        %v3429 = vmul.f32 %v2401, %v3190
        %v3430 = vmul.f32 %v2402, %v3190
        %v3431 = vmul.f32 %v2403, %v3190
        %v3432 = vmul.f32 %v2404, %v3190
        %v3433 = vmul.f32 %v2405, %v3190
        %v3434 = vmul.f32 %v2406, %v3190
        %v3435 = vmul.f32 %v2407, %v3190
        %v3436 = vmul.f32 %v2408, %v3190
        %v3437 = vmul.f32 %v2409, %v3190
        %v3438 = vmul.f32 %v2410, %v3190
        %v3439 = vmul.f32 %v2411, %v3190
        %v3440 = vmul.f32 %v2412, %v3190
        %v3441 = vmul.f32 %v2413, %v3190
        %v3442 = vmul.f32 %v2414, %v3190
        %v3443 = vmul.f32 %v2415, %v3190
        %v3444 = vmul.f32 %v2416, %v3190
        %v3445 = vmul.f32 %v2417, %v3190
        %v3446 = vmul.f32 %v2418, %v3190
        %v3447 = vmul.f32 %v2419, %v3190
        %v3448 = vmul.f32 %v2420, %v3190
        %v3449 = vmul.f32 %v2421, %v3190
        %v3450 = vmul.f32 %v2422, %v3190
        %v3451 = vmul.f32 %v2423, %v3190
        %v3452 = vmul.f32 %v2424, %v3190
        %v3453 = vmul.f32 %v2425, %v3190
        %v3454 = vmul.f32 %v2426, %v3190
        %v3455 = vmul.f32 %v2427, %v3190
        %v3456 = vmul.f32 %v2428, %v3190
        %v3457 = vmul.f32 %v2429, %v3190
        %v3458 = vmul.f32 %v2430, %v3190
        %v3459 = vmul.f32 %v2431, %v3190
        %v3460 = vmul.f32 %v2432, %v3190
        %v3461 = vmul.f32 %v2433, %v3190
        %v3462 = vmul.f32 %v2434, %v3190
        %v3463 = vmul.f32 %v2435, %v3190
        %v3464 = vmul.f32 %v2436, %v3190
        %v3465 = vmul.f32 %v2437, %v3190
        %v3466 = vmul.f32 %v2438, %v3190
        %v3467 = vmul.f32 %v2439, %v3190
        %v3468 = vmul.f32 %v2440, %v3190
        %v3469 = vmul.f32 %v2441, %v3190
        %v3470 = vmul.f32 %v2442, %v3190
        %v3471 = vmul.f32 %v2443, %v3190
        %v3472 = vmul.f32 %v2444, %v3190
        %v3473 = vmul.f32 %v2445, %v3190
        %v3474 = vmul.f32 %v2446, %v3190
        %v3475 = vmul.f32 %v2447, %v3190
        %v3476 = vmul.f32 %v2448, %v3190
        %v3477 = vmul.f32 %v2449, %v3190
        %v3478 = vmul.f32 %v2450, %v3190
        %v3479 = vmul.f32 %v2451, %v3190
        %v3480 = vmul.f32 %v2452, %v3190
        %v3481 = vmul.f32 %v2453, %v3190
        %v3482 = vmul.f32 %v2454, %v3190
        %v3483 = vmul.f32 %v2455, %v3190
        %v3484 = vmul.f32 %v2456, %v3190
        %v3485 = vmul.f32 %v2457, %v3190
        %v3486 = vmul.f32 %v2458, %v3190
        %v3487 = vmul.f32 %v2459, %v3190
        %v3488 = vmul.f32 %v2460, %v3190
        %v3489 = vmul.f32 %v2461, %v3190
        %v3490 = vmul.f32 %v2462, %v3190
        %v3491 = vmul.f32 %v2463, %v3190
        %v3492 = vmul.f32 %v2464, %v3190
        %v3493 = vmul.f32 %v2465, %v3190
        %v3494 = vmul.f32 %v2466, %v3190
        %v3495 = vmul.f32 %v2467, %v3190
        %v3496 = vmul.f32 %v2468, %v3190
        %v3497 = vmul.f32 %v2469, %v3190
        %v3498 = vmul.f32 %v2470, %v3190
        %v3499 = vmul.f32 %v2471, %v3190
        %v3500 = vmul.f32 %v2472, %v3190
        %v3501 = vmul.f32 %v2473, %v3190
        %v3502 = vmul.f32 %v2474, %v3190
        %v3503 = vmul.f32 %v2475, %v3190
        %v3504 = vmul.f32 %v2476, %v3190
        %v3505 = vmul.f32 %v2477, %v3190
        %v3506 = vmul.f32 %v2478, %v3190
        %v3507 = vmul.f32 %v2479, %v3190
        %v3508 = vmul.f32 %v2480, %v3190
        %v3509 = vmul.f32 %v2481, %v3190
        %v3510 = vmul.f32 %v2482, %v3190
        %v3511 = vmul.f32 %v2483, %v3190
        %v3512 = vmul.f32 %v2484, %v3190
        %v3513 = vmul.f32 %v2485, %v3190
        %v3514 = vmul.f32 %v2486, %v3190
        %v3515 = vmul.f32 %v2487, %v3190
        %v3516 = vmul.f32 %v2488, %v3190
        %v3517 = vmul.f32 %v2489, %v3190
        %v3518 = vmul.f32 %v2490, %v3190
        %v3519 = vmul.f32 %v2491, %v3190
        %v3520 = vmul.f32 %v2492, %v3190
        %v3521 = vmul.f32 %v2493, %v3190
        %v3522 = vmul.f32 %v2494, %v3190
        %v3523 = vmul.f32 %v2495, %v3190
        %v3524 = vmul.f32 %v2496, %v3190
        %v3525 = vmul.f32 %v2497, %v3190
        %v3526 = vmul.f32 %v2498, %v3190
        %v3527 = vmul.f32 %v2499, %v3190
        %v3528 = vmul.f32 %v2500, %v3190
        %v3529 = vmul.f32 %v2501, %v3190
        %v3530 = vmul.f32 %v2502, %v3190
        %v3531 = vmul.f32 %v2503, %v3190
        %v3532 = vmul.f32 %v2504, %v3190
        %v3533 = vmul.f32 %v2505, %v3190
        %v3534 = vmul.f32 %v2506, %v3190
        %v3535 = vmul.f32 %v2507, %v3190
        %v3536 = vmul.f32 %v2508, %v3190
        %v3537 = vmul.f32 %v2509, %v3190
        %v3538 = vmul.f32 %v2510, %v3190
        %v3539 = vmul.f32 %v2511, %v3190
        %v3540 = vmul.f32 %v2512, %v3190
        %v3541 = vmul.f32 %v2513, %v3190
        %v3542 = vmul.f32 %v2514, %v3190
        %v3543 = vmul.f32 %v2515, %v3190
        %v3544 = vmul.f32 %v2516, %v3190
        %v3545 = vmul.f32 %v2517, %v3190
        %v3546 = vmul.f32 %v2518, %v3190
        %v3547 = vmul.f32 %v2519, %v3190
        %v3548 = vmul.f32 %v2520, %v3190
        %v3549 = vmul.f32 %v2521, %v3190
        %v3550 = vmul.f32 %v2522, %v3190
        %v3551 = vmul.f32 %v2523, %v3190
        %v3552 = vmul.f32 %v2524, %v3190
        %v3553 = vmul.f32 %v2525, %v3190
        %v3554 = vmul.f32 %v2526, %v3190
        %v3555 = vmul.f32 %v2527, %v3190
        %v3556 = vmul.f32 %v2528, %v3190
        %v3557 = vmul.f32 %v2529, %v3190
        %v3558 = vmul.f32 %v2530, %v3190
        %v3559 = vmul.f32 %v2531, %v3190
        %v3560 = vmul.f32 %v2532, %v3190
        %v3561 = vmul.f32 %v2533, %v3190
        %v3562 = vmul.f32 %v2534, %v3190
        %v3563 = vmul.f32 %v2535, %v3190
        %v3564 = vmul.f32 %v2536, %v3190
        %v3565 = vmul.f32 %v2537, %v3190
        %v3566 = vmul.f32 %v2538, %v3190
        %v3567 = vmul.f32 %v2539, %v3190
        %v3568 = vmul.f32 %v2540, %v3190
        %v3569 = vmul.f32 %v2541, %v3190
        %v3570 = vmul.f32 %v2542, %v3190
        %v3571 = vmul.f32 %v2543, %v3190
        %v3572 = vmul.f32 %v2544, %v3190
        %v3573 = vmul.f32 %v2545, %v3190
        %v3574 = vmul.f32 %v2546, %v3190
        %v3575 = vmul.f32 %v2547, %v3190
        %v3576 = vmul.f32 %v2548, %v3190
        %v3577 = vmul.f32 %v2549, %v3190
        %v3578 = vmul.f32 %v2550, %v3190
        %v3579 = vmul.f32 %v2551, %v3190
        %v3580 = vmul.f32 %v2552, %v3190
        %v3581 = vmul.f32 %v2553, %v3190
        %v3582 = vmul.f32 %v2554, %v3190
        %v3583 = vmul.f32 %v2555, %v3190
        %v3584 = vmul.f32 %v2556, %v3190
        %v3585 = vmul.f32 %v2557, %v3190
        %v3586 = vmul.f32 %v2558, %v3190
        %v3587 = vmul.f32 %v2559, %v3190
        %v3588 = vmul.f32 %v2560, %v3190
        %v3589 = vmul.f32 %v2561, %v3190
        %v3590 = vmul.f32 %v2562, %v3190
        %v3591 = vmul.f32 %v2563, %v3190
        %v3592 = vmul.f32 %v2564, %v3190
        %v3593 = vmul.f32 %v2565, %v3190
        %v3594 = vmul.f32 %v2566, %v3190
        %v3595 = vmul.f32 %v2567, %v3190
        %v3596 = vmul.f32 %v2568, %v3190
        %v3597 = vmul.f32 %v2569, %v3190
        %v3598 = vmul.f32 %v2570, %v3190
        %v3599 = vmul.f32 %v2571, %v3190
        %v3600 = vmul.f32 %v2572, %v3190
        %v3601 = vmul.f32 %v2573, %v3190
        %v3602 = vmul.f32 %v2574, %v3190
        %v3603 = vmul.f32 %v2575, %v3190
        %v3604 = vmul.f32 %v2576, %v3190
        %v3605 = vmul.f32 %v2577, %v3190
        %v3606 = vmul.f32 %v2578, %v3190
        %v3607 = vmul.f32 %v2579, %v3190
        %v3608 = vmul.f32 %v2580, %v3190
        %v3609 = vmul.f32 %v2581, %v3190
        %v3610 = vmul.f32 %v2582, %v3190
        %v3611 = vmul.f32 %v2583, %v3190
        %v3612 = vmul.f32 %v2584, %v3190
        %v3613 = vmul.f32 %v2585, %v3190
        %v3614 = vmul.f32 %v2586, %v3190
        %v3615 = vmul.f32 %v2587, %v3190
        %v3616 = vmul.f32 %v2588, %v3190
        %v3617 = vmul.f32 %v2589, %v3190
        %v3618 = vmul.f32 %v2590, %v3190
        %v3619 = vmul.f32 %v2591, %v3190
        %v3620 = vmul.f32 %v2592, %v3190
        %v3621 = vmul.f32 %v2593, %v3190
        %v3622 = vmul.f32 %v2594, %v3190
        %v3623 = vmul.f32 %v2595, %v3190
        %v3624 = vmul.f32 %v2596, %v3190
        %v3625 = vmul.f32 %v2597, %v3190
        %v3626 = vmul.f32 %v2598, %v3190
        %v3627 = vmul.f32 %v2599, %v3190
        %v3628 = vmul.f32 %v2600, %v3190
        %v3629 = vmul.f32 %v2601, %v3190
        %v3630 = vmul.f32 %v2602, %v3190
        %v3631 = vmul.f32 %v2603, %v3190
        %v3632 = vmul.f32 %v2604, %v3190
        %v3633 = vmul.f32 %v2605, %v3190
        %v3634 = vmul.f32 %v2606, %v3190
        %v3635 = vmul.f32 %v2607, %v3190
        %v3636 = vmul.f32 %v2608, %v3190
        %v3637 = vmul.f32 %v2609, %v3190
        %v3638 = vmul.f32 %v2610, %v3190
        %v3639 = vmul.f32 %v2611, %v3190
        %v3640 = vmul.f32 %v2612, %v3190
        %v3641 = vmul.f32 %v2613, %v3190
        %v3642 = vmul.f32 %v2614, %v3190
        %v3643 = vmul.f32 %v2615, %v3190
        %v3644 = vmul.f32 %v2616, %v3190
        %v3645 = vmul.f32 %v2617, %v3190
        %v3646 = vmul.f32 %v2618, %v3190
        %v3647 = vmul.f32 %v2619, %v3190
        %v3648 = vmul.f32 %v2620, %v3190
        %v3649 = vmul.f32 %v2621, %v3190
        %v3650 = vmul.f32 %v2622, %v3190
        %v3651 = vmul.f32 %v2623, %v3190
        %v3652 = vmul.f32 %v2624, %v3190
        %v3653 = vmul.f32 %v2625, %v3190
        %v3654 = vmul.f32 %v2626, %v3190
        %v3655 = vmul.f32 %v2627, %v3190
        %v3656 = vmul.f32 %v2628, %v3190
        %v3657 = vmul.f32 %v2629, %v3190
        %v3658 = vmul.f32 %v2630, %v3190
        %v3659 = vmul.f32 %v2631, %v3190
        %v3660 = vmul.f32 %v2632, %v3190
        %v3661 = vmul.f32 %v2633, %v3190
        %v3662 = vmul.f32 %v2634, %v3190
        %v3663 = vmul.f32 %v2635, %v3190
        %v3664 = vmul.f32 %v2636, %v3190
        %v3665 = vmul.f32 %v2637, %v3190
        %v3666 = vmul.f32 %v2638, %v3190
        %v3667 = vmul.f32 %v2639, %v3190
        %v3668 = vmul.f32 %v2640, %v3190
        %v3669 = vmul.f32 %v2641, %v3190
        %v3670 = vmul.f32 %v2642, %v3190
        %v3671 = vmul.f32 %v2643, %v3190
        %v3672 = vmul.f32 %v2644, %v3190
        %v3673 = vmul.f32 %v2645, %v3190
        %v3674 = vmul.f32 %v2646, %v3190
        %v3675 = vmul.f32 %v2647, %v3190
        %v3676 = vmul.f32 %v2648, %v3190
        %v3677 = vmul.f32 %v2649, %v3190
        %v3678 = vmul.f32 %v2650, %v3190
        %v3679 = vmul.f32 %v2651, %v3190
        %v3680 = vmul.f32 %v2652, %v3190
        %v3681 = vmul.f32 %v2653, %v3190
        %v3682 = vmul.f32 %v2654, %v3190
        %v3683 = vmul.f32 %v2655, %v3190
        %v3684 = vmul.f32 %v2656, %v3190
        %v3685 = vmul.f32 %v2657, %v3190
        %v3686 = vmul.f32 %v2658, %v3190
        %v3687 = vmul.f32 %v2659, %v3190
        %v3688 = vmul.f32 %v2660, %v3190
        %v3689 = vmul.f32 %v2661, %v3190
        %v3690 = vmul.f32 %v2662, %v3190
        %v3691 = vmul.f32 %v2663, %v3190
        %v3692 = vmul.f32 %v2664, %v3190
        %v3693 = vmul.f32 %v2665, %v3190
        %v3694 = vmul.f32 %v2666, %v3190
        %v3695 = vmul.f32 %v2667, %v3190
        %v3696 = vmul.f32 %v2668, %v3190
        %v3697 = vmul.f32 %v2669, %v3190
        %v3698 = vmul.f32 %v2670, %v3190
        %v3699 = vmul.f32 %v2671, %v3190
        %v3700 = vmul.f32 %v2672, %v3190
        %v3701 = vmul.f32 %v2673, %v3190
        %v3702 = vmul.f32 %v2674, %v3190
        %v3703 = vmul.f32 %v2675, %v3190
        %v3704 = vmul.f32 %v2676, %v3190
        %v3705 = vmul.f32 %v2677, %v3190
        %v3706 = vmul.f32 %v2678, %v3190
        %v3707 = vmul.f32 %v2679, %v3190
        %v3708 = vmul.f32 %v2680, %v3190
        %v3709 = vmul.f32 %v2681, %v3190
        %v3710 = vmul.f32 %v2682, %v3190
        %v3711 = vmul.f32 %v2683, %v3190
        %v3712 = vmul.f32 %v2684, %v3190
        %v3713 = vmul.f32 %v2685, %v3190
        %v3714 = vmul.f32 %v2686, %v3190
        %v3715 = vmul.f32 %v2687, %v3190
        %v3716 = vmul.f32 %v2688, %v3190
        %v3717 = vmul.f32 %v2689, %v3190
        %v3718 = vmul.f32 %v2690, %v3190
        %v3719 = vmul.f32 %v2691, %v3190
        %v3720 = vmul.f32 %v2692, %v3190
        %v3721 = vmul.f32 %v2693, %v3190
        %v3722 = vmul.f32 %v2694, %v3190
        %v3723 = vmul.f32 %v2695, %v3190
        %v3724 = vmul.f32 %v2696, %v3190
        %v3725 = vmul.f32 %v2697, %v3190
        %v3726 = vmul.f32 %v2698, %v3190
        %v3727 = vmul.f32 %v2699, %v3190
        %v3728 = vmul.f32 %v2700, %v3190
        %v3729 = vmul.f32 %v2701, %v3190
        %v3730 = vmul.f32 %v2702, %v3190
        %v3731 = vmul.f32 %v2703, %v3190
        %v3732 = vmul.f32 %v2704, %v3190
        %v3733 = vmul.f32 %v2705, %v3190
        %v3734 = vmul.f32 %v2706, %v3190
        %v3735 = vmul.f32 %v2707, %v3190
        %v3736 = vmul.f32 %v2708, %v3190
        %v3737 = vmul.f32 %v2709, %v3190
        %v3738 = vmul.f32 %v2710, %v3190
        %v3739 = vmul.f32 %v2711, %v3190
        %v3740 = vmul.f32 %v2712, %v3190
        %v3741 = vmul.f32 %v2713, %v3190
        %v3742 = vmul.f32 %v2714, %v3190
        %v3743 = vmul.f32 %v2715, %v3190
        %v3744 = vmul.f32 %v2716, %v3190
        %v3745 = vmul.f32 %v2717, %v3190
        %v3746 = vmul.f32 %v2718, %v3190
        %v3747 = vmul.f32 %v2719, %v3190
        %v3748 = vmul.f32 %v2720, %v3190
        %v3749 = vmul.f32 %v2721, %v3190
        %v3750 = vmul.f32 %v2722, %v3190
        %v3751 = vmul.f32 %v2723, %v3190
        %v3752 = vmul.f32 %v2724, %v3190
        %v3753 = vmul.f32 %v2725, %v3190
        %v3754 = vmul.f32 %v2726, %v3190
        %v3755 = vmul.f32 %v2727, %v3190
        %v3756 = vmul.f32 %v2728, %v3190
        %v3757 = vmul.f32 %v2729, %v3190
        %v3758 = vmul.f32 %v2730, %v3190
        %v3759 = vmul.f32 %v2731, %v3190
        %v3760 = vmul.f32 %v2732, %v3190
        %v3761 = vmul.f32 %v2733, %v3190
        %v3762 = vmul.f32 %v2734, %v3190
        %v3763 = vmul.f32 %v2735, %v3190
        %v3764 = vmul.f32 %v2736, %v3190
        %v3765 = vmul.f32 %v2737, %v3190
        %v3766 = vmul.f32 %v2738, %v3190
        %v3767 = vmul.f32 %v2739, %v3190
        %v3768 = vmul.f32 %v2740, %v3190
        %v3769 = vmul.f32 %v2741, %v3190
        %v3770 = vmul.f32 %v2742, %v3190
        %v3771 = vmul.f32 %v2743, %v3190
        %v3772 = vmul.f32 %v2744, %v3190
        %v3773 = vmul.f32 %v2745, %v3190
        %v3774 = vmul.f32 %v2746, %v3190
        %v3775 = vmul.f32 %v2747, %v3190
        %v3776 = vmul.f32 %v2748, %v3190
        %v3777 = vmul.f32 %v2749, %v3190
        %v3778 = vmul.f32 %v2750, %v3190
        %v3779 = vmul.f32 %v2751, %v3190
        %v3780 = vmul.f32 %v2752, %v3190
        %v3781 = vmul.f32 %v2753, %v3190
        %v3782 = vmul.f32 %v2754, %v3190
        %v3783 = vmul.f32 %v2755, %v3190
        %v3784 = vmul.f32 %v2756, %v3190
        %v3785 = vmul.f32 %v2757, %v3190
        %v3786 = vmul.f32 %v2758, %v3190
        %v3787 = vmul.f32 %v2759, %v3190
        %v3788 = vmul.f32 %v2760, %v3190
        %v3789 = vmul.f32 %v2761, %v3190
        %v3790 = vmul.f32 %v2762, %v3190
        %v3791 = vmul.f32 %v2763, %v3190
        %v3792 = vmul.f32 %v2764, %v3190
        %v3793 = vmul.f32 %v2765, %v3190
        %v3794 = vmul.f32 %v2766, %v3190
        %v3795 = vmul.f32 %v2767, %v3190
        %v3796 = vmul.f32 %v2768, %v3190
        %v3797 = vmul.f32 %v2769, %v3190
        %v3798 = vmul.f32 %v2770, %v3190
        %v3799 = vmul.f32 %v2771, %v3190
        %v3800 = vmul.f32 %v2772, %v3190
        %v3801 = vmul.f32 %v2773, %v3190
        %v3802 = vmul.f32 %v2774, %v3190
        %v3803 = vmul.f32 %v2775, %v3190
        %v3804 = vmul.f32 %v2776, %v3190
        %v3805 = vmul.f32 %v2777, %v3190
        %v3806 = vmul.f32 %v2778, %v3190
        %v3807 = vmul.f32 %v2779, %v3190
        %v3808 = vmul.f32 %v2780, %v3190
        %v3809 = vmul.f32 %v2781, %v3190
        %v3810 = vmul.f32 %v2782, %v3190
        %v3811 = vmul.f32 %v2783, %v3190
        %v3812 = vmul.f32 %v2784, %v3190
        %v3813 = vmul.f32 %v2785, %v3190
        %v3814 = vmul.f32 %v2786, %v3190
        %v3815 = vmul.f32 %v2787, %v3190
        %v3816 = vmul.f32 %v2788, %v3190
        %v3817 = vmul.f32 %v2789, %v3190
        %v3818 = vmul.f32 %v2790, %v3190
        %v3819 = vmul.f32 %v2791, %v3190
        %v3820 = vmul.f32 %v2792, %v3190
        %v3821 = vmul.f32 %v2793, %v3190
        %v3822 = vmul.f32 %v2794, %v3190
        %v3823 = vmul.f32 %v2795, %v3190
        %v3824 = vmul.f32 %v2796, %v3190
        %v3825 = vmul.f32 %v2797, %v3190
        %v3826 = vmul.f32 %v2798, %v3190
        %v3827 = vmul.f32 %v2799, %v3190
        %v3828 = vmul.f32 %v2800, %v3190
        %v3829 = vmul.f32 %v2801, %v3190
        %v3830 = vmul.f32 %v2802, %v3190
        %v3831 = vmul.f32 %v2803, %v3190
        %v3832 = vmul.f32 %v2804, %v3190
        %v3833 = vmul.f32 %v2805, %v3190
        %v3834 = vmul.f32 %v2806, %v3190
        %v3835 = vmul.f32 %v2807, %v3190
        %v3836 = vmul.f32 %v2808, %v3190
        %v3837 = vmul.f32 %v2809, %v3190
        %v3838 = vmul.f32 %v2810, %v3190
        %v3839 = vmul.f32 %v2811, %v3190
        %v3840 = vmul.f32 %v2812, %v3190
        %v3841 = vmul.f32 %v2813, %v3190
        %v3842 = vmul.f32 %v2814, %v3190
        %v3843 = vmul.f32 %v2815, %v3190
        %v3844 = vmul.f32 %v2816, %v3190
        %v3845 = vmul.f32 %v2817, %v3190
        %v3846 = vmul.f32 %v2818, %v3190
        %v3847 = vmul.f32 %v2819, %v3190
        %v3848 = vmul.f32 %v2820, %v3190
        %v3849 = vmul.f32 %v2821, %v3190
        %v3850 = vmul.f32 %v2822, %v3190
        %v3851 = vmul.f32 %v2823, %v3190
        %v3852 = vmul.f32 %v2824, %v3190
        %v3853 = vmul.f32 %v2825, %v3190
        %v3854 = vmul.f32 %v2826, %v3190
        %v3855 = vmul.f32 %v2827, %v3190
        %v3856 = vmul.f32 %v2828, %v3190
        %v3857 = vmul.f32 %v2829, %v3190
        %v3858 = vmul.f32 %v2830, %v3190
        %v3859 = vmul.f32 %v2831, %v3190
        %v3860 = vmul.f32 %v2832, %v3190
        %v3861 = vmul.f32 %v2833, %v3190
        %v3862 = vmul.f32 %v2834, %v3190
        %v3863 = vmul.f32 %v2835, %v3190
        %v3864 = vmul.f32 %v2836, %v3190
        %v3865 = vmul.f32 %v2837, %v3190
        %v3866 = vmul.f32 %v2838, %v3190
        %v3867 = vmul.f32 %v2839, %v3190
        %v3868 = vmul.f32 %v2840, %v3190
        %v3869 = vmul.f32 %v2841, %v3190
        %v3870 = vmul.f32 %v2842, %v3190
        %v3871 = vmul.f32 %v2843, %v3190
        %v3872 = vmul.f32 %v2844, %v3190
        %v3873 = vmul.f32 %v2845, %v3190
        %v3874 = vmul.f32 %v2846, %v3190
        %v3875 = vmul.f32 %v2847, %v3190
        %v3876 = vmul.f32 %v2848, %v3190
        %v3877 = vmul.f32 %v2849, %v3190
        %v3878 = vmul.f32 %v2850, %v3190
        %v3879 = vmul.f32 %v2851, %v3190
        %v3880 = vmul.f32 %v2852, %v3190
        %v3881 = vmul.f32 %v2853, %v3190
        %v3882 = vmul.f32 %v2854, %v3190
        %v3883 = vmul.f32 %v2855, %v3190
        %v3884 = vmul.f32 %v2856, %v3190
        %v3885 = vmul.f32 %v2857, %v3190
        %v3886 = vmul.f32 %v2858, %v3190
        %v3887 = vmul.f32 %v2859, %v3190
        %v3888 = vmul.f32 %v2860, %v3190
        %v3889 = vmul.f32 %v2861, %v3190
        %v3890 = vmul.f32 %v2862, %v3190
        %v3891 = vmul.f32 %v2863, %v3190
        %v3892 = vmul.f32 %v2864, %v3190
        %v3893 = vmul.f32 %v2865, %v3190
        %v3894 = vmul.f32 %v2866, %v3190
        %v3895 = vmul.f32 %v2867, %v3190
        %v3896 = vmul.f32 %v2868, %v3190
        %v3897 = vmul.f32 %v2869, %v3190
        %v3898 = vmul.f32 %v2870, %v3190
        %v3899 = vmul.f32 %v2871, %v3190
        %v3900 = vmul.f32 %v2872, %v3190
        %v3901 = vmul.f32 %v2873, %v3190
        %v3902 = vmul.f32 %v2874, %v3190
        %v3903 = vmul.f32 %v2875, %v3190
        %v3904 = vmul.f32 %v2876, %v3190
        %v3905 = vmul.f32 %v2877, %v3190
        %v3906 = vmul.f32 %v2878, %v3190
        %v3907 = vmul.f32 %v2879, %v3190
        %v3908 = vmul.f32 %v2880, %v3190
        %v3909 = vmul.f32 %v2881, %v3190
        %v3910 = vmul.f32 %v2882, %v3190
        %v3911 = vmul.f32 %v2883, %v3190
        %v3912 = vmul.f32 %v2884, %v3190
        %v3913 = vmul.f32 %v2885, %v3190
        %v3914 = vmul.f32 %v2886, %v3190
        %v3915 = vmul.f32 %v2887, %v3190
        %v3916 = vmul.f32 %v2888, %v3190
        %v3917 = vmul.f32 %v2889, %v3190
        %v3918 = vmul.f32 %v2890, %v3190
        %v3919 = vmul.f32 %v2891, %v3190
        %v3920 = vmul.f32 %v2892, %v3190
        %v3921 = vmul.f32 %v2893, %v3190
        %v3922 = vmul.f32 %v2894, %v3190
        %v3923 = vmul.f32 %v2895, %v3190
        %v3924 = vmul.f32 %v2896, %v3190
        %v3925 = vmul.f32 %v2897, %v3190
        %v3926 = vmul.f32 %v2898, %v3190
        %v3927 = vmul.f32 %v2899, %v3190
        %v3928 = vmul.f32 %v2900, %v3190
        %v3929 = vmul.f32 %v2901, %v3190
        %v3930 = vmul.f32 %v2902, %v3190
        %v3931 = vmul.f32 %v2903, %v3190
        %v3932 = vmul.f32 %v2904, %v3190
        %v3933 = vmul.f32 %v2905, %v3190
        %v3934 = vmul.f32 %v2906, %v3190
        %v3935 = vmul.f32 %v2907, %v3190
        %v3936 = vmul.f32 %v2908, %v3190
        %v3937 = vmul.f32 %v2909, %v3190
        %v3938 = vmul.f32 %v2910, %v3190
        %v3939 = vmul.f32 %v2911, %v3190
        %v3940 = vmul.f32 %v2912, %v3190
        %v3941 = vmul.f32 %v2913, %v3190
        %v3942 = vmul.f32 %v2914, %v3190
        %v3943 = vmul.f32 %v2915, %v3190
        %v3944 = vmul.f32 %v2916, %v3190
        %v3945 = vmul.f32 %v2917, %v3190
        %v3946 = vmul.f32 %v2918, %v3190
        %v3947 = vmul.f32 %v2919, %v3190
        %v3948 = vmul.f32 %v2920, %v3190
        %v3949 = vmul.f32 %v2921, %v3190
        %v3950 = vmul.f32 %v2922, %v3190
        %v3951 = vmul.f32 %v2923, %v3190
        %v3952 = vmul.f32 %v2924, %v3190
        %v3953 = vmul.f32 %v2925, %v3190
        %v3954 = vmul.f32 %v2926, %v3190
        %v3955 = vmul.f32 %v2927, %v3190
        %v3956 = vmul.f32 %v2928, %v3190
        %v3957 = vmul.f32 %v2929, %v3190
        %v3958 = vmul.f32 %v2930, %v3190
        %v3959 = vmul.f32 %v2931, %v3190
        %v3960 = vmul.f32 %v2932, %v3190
        %v3961 = vmul.f32 %v2933, %v3190
        %v3962 = vmul.f32 %v2934, %v3190
        %v3963 = vmul.f32 %v2935, %v3190
        %v3964 = vmul.f32 %v2936, %v3190
        %v3965 = vmul.f32 %v2937, %v3190
        %v3966 = vmul.f32 %v2938, %v3190
        %v3967 = vmul.f32 %v2939, %v3190
        %v3968 = vmul.f32 %v2940, %v3190
        %v3969 = vmul.f32 %v2941, %v3190
        %v3970 = vmul.f32 %v2942, %v3190
        %v3971 = vmul.f32 %v2943, %v3190
        %v3972 = vmul.f32 %v2944, %v3190
        %v3973 = vmul.f32 %v2945, %v3190
        %v3974 = vmul.f32 %v2946, %v3190
        %v3975 = vmul.f32 %v2947, %v3190
        %v3976 = vmul.f32 %v2948, %v3190
        %v3977 = vmul.f32 %v2949, %v3190
        %v3978 = vmul.f32 %v2950, %v3190
        %v3979 = vmul.f32 %v2951, %v3190
        %v3980 = vmul.f32 %v2952, %v3190
        %v3981 = vmul.f32 %v2953, %v3190
        %v3982 = vmul.f32 %v2954, %v3190
        %v3983 = vmul.f32 %v2955, %v3190
        %v3984 = vmul.f32 %v2956, %v3190
        %v3985 = vmul.f32 %v2957, %v3190
        %v3986 = vmul.f32 %v2958, %v3190
        %v3987 = vmul.f32 %v2959, %v3190
        %v3988 = vmul.f32 %v2960, %v3190
        %v3989 = vmul.f32 %v2961, %v3190
        %v3990 = vmul.f32 %v2962, %v3190
        %v3991 = vmul.f32 %v2963, %v3190
        %v3992 = vmul.f32 %v2964, %v3190
        %v3993 = vmul.f32 %v2965, %v3190
        %v3994 = vmul.f32 %v2966, %v3190
        %v3995 = vmul.f32 %v2967, %v3190
        %v3996 = vmul.f32 %v2968, %v3190
        %v3997 = vmul.f32 %v2969, %v3190
        %v3998 = vmul.f32 %v2970, %v3190
        %v3999 = vmul.f32 %v2971, %v3190
        %v4000 = vmul.f32 %v2972, %v3190
        %v4001 = vmul.f32 %v2973, %v3190
        %v4002 = vmul.f32 %v2974, %v3190
        %v4003 = vmul.f32 %v2975, %v3190
        %v4004 = vmul.f32 %v2976, %v3190
        %v4005 = vmul.f32 %v2977, %v3190
        %v4006 = vmul.f32 %v2978, %v3190
        %v4007 = vmul.f32 %v2979, %v3190
        %v4008 = vmul.f32 %v2980, %v3190
        %v4009 = vmul.f32 %v2981, %v3190
        %v4010 = vmul.f32 %v2982, %v3190
        %v4011 = vmul.f32 %v2983, %v3190
        %v4012 = vmul.f32 %v2984, %v3190
        %v4013 = vmul.f32 %v2985, %v3190
        %v4014 = vmul.f32 %v2986, %v3190
        %v4015 = vmul.f32 %v2987, %v3190
        %v4016 = vmul.f32 %v2988, %v3190
        %v4017 = vmul.f32 %v2989, %v3190
        %v4018 = vmul.f32 %v2990, %v3190
        %v4019 = vmul.f32 %v2991, %v3190
        %v4020 = vmul.f32 %v2992, %v3190
        %v4021 = vmul.f32 %v2993, %v3190
        %v4022 = vmul.f32 %v2994, %v3190
        %v4023 = vmul.f32 %v2995, %v3190
        %v4024 = vmul.f32 %v2996, %v3190
        %v4025 = vmul.f32 %v2997, %v3190
        %v4026 = vmul.f32 %v2998, %v3190
        %v4027 = vmul.f32 %v2999, %v3190
        %v4028 = vmul.f32 %v3000, %v3190
        %v4029 = vmul.f32 %v3001, %v3190
        %v4030 = vmul.f32 %v3002, %v3190
        %v4031 = vmul.f32 %v3003, %v3190
        %v4032 = vmul.f32 %v3004, %v3190
        %v4033 = vmul.f32 %v3005, %v3190
        %v4034 = vmul.f32 %v3006, %v3190
        %v4035 = vmul.f32 %v3007, %v3190
        %v4036 = vmul.f32 %v3008, %v3190
        %v4037 = vmul.f32 %v3009, %v3190
        %v4038 = vmul.f32 %v3010, %v3190
        %v4039 = vmul.f32 %v3011, %v3190
        %v4040 = vmul.f32 %v3012, %v3190
        %v4041 = vmul.f32 %v3013, %v3190
        %v4042 = vmul.f32 %v3014, %v3190
        %v4043 = vmul.f32 %v3015, %v3190
        %v4044 = vmul.f32 %v3016, %v3190
        %v4045 = vmul.f32 %v3017, %v3190
        %v4046 = vmul.f32 %v3018, %v3190
        %v4047 = vmul.f32 %v3019, %v3190
        %v4048 = vmul.f32 %v3020, %v3190
        %v4049 = vmul.f32 %v3021, %v3190
        %v4050 = vmul.f32 %v3022, %v3190
        %v4051 = vmul.f32 %v3023, %v3190
        %v4052 = vmul.f32 %v3024, %v3190
        %v4053 = vmul.f32 %v3025, %v3190
        %v4054 = vmul.f32 %v3026, %v3190
        %v4055 = vmul.f32 %v3027, %v3190
        %v4056 = vmul.f32 %v3028, %v3190
        %v4057 = vmul.f32 %v3029, %v3190
        %v4058 = vmul.f32 %v3030, %v3190
        %v4059 = vmul.f32 %v3031, %v3190
        %v4060 = vmul.f32 %v3032, %v3190
        %v4061 = vmul.f32 %v3033, %v3190
        %v4062 = vmul.f32 %v3034, %v3190
        %v4063 = vmul.f32 %v3035, %v3190
        %v4064 = vmul.f32 %v3036, %v3190
        %v4065 = vmul.f32 %v3037, %v3190
        %v4066 = vmul.f32 %v3038, %v3190
        %v4067 = vmul.f32 %v3039, %v3190
        %v4068 = vmul.f32 %v3040, %v3190
        %v4069 = vmul.f32 %v3041, %v3190
        %v4070 = vmul.f32 %v3042, %v3190
        %v4071 = vmul.f32 %v3043, %v3190
        %v4072 = vmul.f32 %v3044, %v3190
        %v4073 = vmul.f32 %v3045, %v3190
        %v4074 = vmul.f32 %v3046, %v3190
        %v4075 = vmul.f32 %v3047, %v3190
        %v4076 = vmul.f32 %v3048, %v3190
        %v4077 = vmul.f32 %v3049, %v3190
        %v4078 = vmul.f32 %v3050, %v3190
        %v4079 = vmul.f32 %v3051, %v3190
        %v4080 = vmul.f32 %v3052, %v3190
        %v4081 = vmul.f32 %v3053, %v3190
        %v4082 = vmul.f32 %v3054, %v3190
        %v4083 = vmul.f32 %v3055, %v3190
        %v4084 = vmul.f32 %v3056, %v3190
        %v4085 = vmul.f32 %v3057, %v3190
        %v4086 = vmul.f32 %v3058, %v3190
        %v4087 = vmul.f32 %v3059, %v3190
        %v4088 = vmul.f32 %v3060, %v3190
        %v4089 = vmul.f32 %v3061, %v3190
        %v4090 = vmul.f32 %v3062, %v3190
        %v4091 = vmul.f32 %v3063, %v3190
        %v4092 = vmul.f32 %v3064, %v3190
        %v4093 = vmul.f32 %v3065, %v3190
        %v4094 = vmul.f32 %v3066, %v3190
        %v4095 = vmul.f32 %v3067, %v3190
        %v4096 = vmul.f32 %v3068, %v3190
        %v4097 = vmul.f32 %v3069, %v3190
        %v4098 = vmul.f32 %v3070, %v3190
        %v4099 = vmul.f32 %v3071, %v3190
        %v4100 = vmul.f32 %v3072, %v3190
        %v4101 = vmul.f32 %v3073, %v3190
        %v4102 = vmul.f32 %v3074, %v3190
        %v4103 = vmul.f32 %v3075, %v3190
        %v4104 = vmul.f32 %v3076, %v3190
        %v4105 = vmul.f32 %v3077, %v3190
        %v4106 = vmul.f32 %v3078, %v3190
        %v4107 = vmul.f32 %v3079, %v3190
        %v4108 = vmul.f32 %v3080, %v3190
        %v4109 = vmul.f32 %v3081, %v3190
        %v4110 = vmul.f32 %v3082, %v3190
        %v4111 = vmul.f32 %v3083, %v3190
        %v4112 = vmul.f32 %v3084, %v3190
        %v4113 = vmul.f32 %v3085, %v3190
        %v4114 = vmul.f32 %v3086, %v3190
        %v4115 = vmul.f32 %v3087, %v3190
        %v4116 = vmul.f32 %v3088, %v3190
        %v4117 = vmul.f32 %v3089, %v3190
        %v4118 = vmul.f32 %v3090, %v3190
        %v4119 = vmul.f32 %v3091, %v3190
        %v4120 = vmul.f32 %v3092, %v3190
        %v4121 = vmul.f32 %v3093, %v3190
        %v4122 = vmul.f32 %v3094, %v3190
        %v4123 = vmul.f32 %v3095, %v3190
        %v4124 = vmul.f32 %v3096, %v3190
        %v4125 = vmul.f32 %v3097, %v3190
        %v4126 = vmul.f32 %v3098, %v3190
        %v4127 = vmul.f32 %v3099, %v3190
        %v4128 = vmul.f32 %v3100, %v3190
        %v4129 = vmul.f32 %v3101, %v3190
        %v4130 = vmul.f32 %v3102, %v3190
        %v4131 = vmul.f32 %v3103, %v3190
        %v4132 = vmul.f32 %v3104, %v3190
        %v4133 = vmul.f32 %v3105, %v3190
        %v4134 = vmul.f32 %v3106, %v3190
        %v4135 = vmul.f32 %v3107, %v3190
        %v4136 = vmul.f32 %v3108, %v3190
        %v4137 = vmul.f32 %v3109, %v3190
        %v4138 = vmul.f32 %v3110, %v3190
        %v4139 = vmul.f32 %v3111, %v3190
        %v4140 = vmul.f32 %v3112, %v3190
        %v4141 = vmul.f32 %v3113, %v3190
        %v4142 = vmul.f32 %v3114, %v3190
        %v4143 = vmul.f32 %v3115, %v3190
        %v4144 = vmul.f32 %v3116, %v3190
        %v4145 = vmul.f32 %v3117, %v3190
        %v4146 = vmul.f32 %v3118, %v3190
        %v4147 = vmul.f32 %v3119, %v3190
        %v4148 = vmul.f32 %v3120, %v3190
        %v4149 = vmul.f32 %v3121, %v3190
        %v4150 = vmul.f32 %v3122, %v3190
        %v4151 = vmul.f32 %v3123, %v3190
        %v4152 = vmul.f32 %v3124, %v3190
        %v4153 = vmul.f32 %v3125, %v3190
        %v4154 = vmul.f32 %v3126, %v3190
        %v4155 = vmul.f32 %v3127, %v3190
        %v4156 = vmul.f32 %v3128, %v3190
        %v4157 = vmul.f32 %v3129, %v3190
        %v4158 = vmul.f32 %v3130, %v3190
        %v4159 = vmul.f32 %v3131, %v3190
        %v4160 = vmul.f32 %v3132, %v3190
        %v4161 = vmul.f32 %v3133, %v3190
        %v4162 = vmul.f32 %v3134, %v3190
        %v4163 = vmul.f32 %v3135, %v3190
        %v4164 = vmul.f32 %v3136, %v3190
        %v4165 = vmul.f32 %v3137, %v3190
        %v4166 = vmul.f32 %v3138, %v3190
        %v4167 = vmul.f32 %v3139, %v3190
        %v4168 = vmul.f32 %v3140, %v3190
        %v4169 = vmul.f32 %v3141, %v3190
        %v4170 = vmul.f32 %v3142, %v3190
        %v4171 = vmul.f32 %v3143, %v3190
        %v4172 = vmul.f32 %v3144, %v3190
        %v4173 = vmul.f32 %v3145, %v3190
        %v4174 = vmul.f32 %v3146, %v3190
        %v4175 = vmul.f32 %v3147, %v3190
        %v4176 = vmul.f32 %v3148, %v3190
        %v4177 = vmul.f32 %v3149, %v3190
        %v4178 = vmul.f32 %v3150, %v3190
        %v4179 = vmul.f32 %v3151, %v3190
        %v4180 = vmul.f32 %v3152, %v3190
        %v4181 = vmul.f32 %v3153, %v3190
        %v4182 = vmul.f32 %v3154, %v3190
        %v4183 = vmul.f32 %v3155, %v3190
        %v4184 = vmul.f32 %v3156, %v3190
        %v4185 = vmul.f32 %v3157, %v3190
        %v4186 = vmul.f32 %v3158, %v3190
        %v4187 = vmul.f32 %v3159, %v3190
        %v4188 = vmul.f32 %v3160, %v3190
        %v4189 = vmul.f32 %v3161, %v3190
        %v4190 = vmul.f32 %v3162, %v3190
        %v4191 = vmul.f32 %v3163, %v3190
        %v4192 = vmul.f32 %v3164, %v3190
        %v4193 = vmul.f32 %v3165, %v3190
        %v4194 = vmul.f32 %v3166, %v3190
        %v4195 = vmul.f32 %v3167, %v3190
        %v4196 = vmul.f32 %v3168, %v3190
        %v4197 = vmul.f32 %v3169, %v3190
        %v4198 = vmul.f32 %v3170, %v3190
        %v4199 = vmul.f32 %v3171, %v3190
        %v4200 = vmul.f32 %v3172, %v3190
        %v4201 = vmul.f32 %v3173, %v3190
        %v4202 = vmul.f32 %v3174, %v3190
        %v4203 = vmul.f32 %v3175, %v3190
        %v4204 = vmul.f32 %v3176, %v3190
        %v4205 = vmul.f32 %v3177, %v3190
        %v4206 = vmul.f32 %v3178, %v3190
        %v4207 = vmul.f32 %v3179, %v3190
        %v4208 = vmul.f32 %v3180, %v3190
        %v4209 = vmul.f32 %v3181, %v3190
        %v4210 = vmul.f32 %v3182, %v3190
        %v4211 = vmul.f32 %v3183, %v3190
        %v4212 = vmul.f32 %v3184, %v3190
        %v4213 = vmul.f32 %v3185, %v3190
        %v4214 = vmul.f32 %v3186, %v3190
        %v4215 = vmul.f32 %v3187, %v3190
        %vm4216 = vcmask 523264
        %4217 = vst.msk [vmem:[%s111] sm:$0xff] %vm4216, %v3192
        %4218 = vst.msk [vmem:[%s111 + $0x8] sm:$0xff] %vm4216, %v3193
        %4219 = vst.msk [vmem:[%s111 + $0x10] sm:$0xff] %vm4216, %v3194
        %4220 = vst.msk [vmem:[%s111 + $0x18] sm:$0xff] %vm4216, %v3195
        %4221 = vst.msk [vmem:[%s111 + $0x20] sm:$0xff] %vm4216, %v3196
        %4222 = vst.msk [vmem:[%s111 + $0x28] sm:$0xff] %vm4216, %v3197
        %4223 = vst.msk [vmem:[%s111 + $0x30] sm:$0xff] %vm4216, %v3198
        %4224 = vst.msk [vmem:[%s111 + $0x38] sm:$0xff] %vm4216, %v3199
        %4225 = vst.msk [vmem:[%s111 + $0x40] sm:$0xff] %vm4216, %v3200
        %4226 = vst.msk [vmem:[%s111 + $0x48] sm:$0xff] %vm4216, %v3201
        %4227 = vst.msk [vmem:[%s111 + $0x50] sm:$0xff] %vm4216, %v3202
        %4228 = vst.msk [vmem:[%s111 + $0x58] sm:$0xff] %vm4216, %v3203
        %4229 = vst.msk [vmem:[%s111 + $0x60] sm:$0xff] %vm4216, %v3204
        %4230 = vst.msk [vmem:[%s111 + $0x68] sm:$0xff] %vm4216, %v3205
        %4231 = vst.msk [vmem:[%s111 + $0x70] sm:$0xff] %vm4216, %v3206
        %4232 = vst.msk [vmem:[%s111 + $0x78] sm:$0xff] %vm4216, %v3207
        %4233 = vst.msk [vmem:[%s111 + $0x80] sm:$0xff] %vm4216, %v3208
        %4234 = vst.msk [vmem:[%s111 + $0x88] sm:$0xff] %vm4216, %v3209
        %4235 = vst.msk [vmem:[%s111 + $0x90] sm:$0xff] %vm4216, %v3210
        %4236 = vst.msk [vmem:[%s111 + $0x98] sm:$0xff] %vm4216, %v3211
        %4237 = vst.msk [vmem:[%s111 + $0xa0] sm:$0xff] %vm4216, %v3212
        %4238 = vst.msk [vmem:[%s111 + $0xa8] sm:$0xff] %vm4216, %v3213
        %4239 = vst.msk [vmem:[%s111 + $0xb0] sm:$0xff] %vm4216, %v3214
        %4240 = vst.msk [vmem:[%s111 + $0xb8] sm:$0xff] %vm4216, %v3215
        %4241 = vst.msk [vmem:[%s111 + $0xc0] sm:$0xff] %vm4216, %v3216
        %4242 = vst.msk [vmem:[%s111 + $0xc8] sm:$0xff] %vm4216, %v3217
        %4243 = vst.msk [vmem:[%s111 + $0xd0] sm:$0xff] %vm4216, %v3218
        %4244 = vst.msk [vmem:[%s111 + $0xd8] sm:$0xff] %vm4216, %v3219
        %4245 = vst.msk [vmem:[%s111 + $0xe0] sm:$0xff] %vm4216, %v3220
        %4246 = vst.msk [vmem:[%s111 + $0xe8] sm:$0xff] %vm4216, %v3221
        %4247 = vst.msk [vmem:[%s111 + $0xf0] sm:$0xff] %vm4216, %v3222
        %4248 = vst.msk [vmem:[%s111 + $0xf8] sm:$0xff] %vm4216, %v3223
        %4249 = vst.msk [vmem:[%s111 + $0x100] sm:$0xff] %vm4216, %v3224
        %4250 = vst.msk [vmem:[%s111 + $0x108] sm:$0xff] %vm4216, %v3225
        %4251 = vst.msk [vmem:[%s111 + $0x110] sm:$0xff] %vm4216, %v3226
        %4252 = vst.msk [vmem:[%s111 + $0x118] sm:$0xff] %vm4216, %v3227
        %4253 = vst.msk [vmem:[%s111 + $0x120] sm:$0xff] %vm4216, %v3228
        %4254 = vst.msk [vmem:[%s111 + $0x128] sm:$0xff] %vm4216, %v3229
        %4255 = vst.msk [vmem:[%s111 + $0x130] sm:$0xff] %vm4216, %v3230
        %4256 = vst.msk [vmem:[%s111 + $0x138] sm:$0xff] %vm4216, %v3231
        %4257 = vst.msk [vmem:[%s111 + $0x140] sm:$0xff] %vm4216, %v3232
        %4258 = vst.msk [vmem:[%s111 + $0x148] sm:$0xff] %vm4216, %v3233
        %4259 = vst.msk [vmem:[%s111 + $0x150] sm:$0xff] %vm4216, %v3234
        %4260 = vst.msk [vmem:[%s111 + $0x158] sm:$0xff] %vm4216, %v3235
        %4261 = vst.msk [vmem:[%s111 + $0x160] sm:$0xff] %vm4216, %v3236
        %4262 = vst.msk [vmem:[%s111 + $0x168] sm:$0xff] %vm4216, %v3237
        %4263 = vst.msk [vmem:[%s111 + $0x170] sm:$0xff] %vm4216, %v3238
        %4264 = vst.msk [vmem:[%s111 + $0x178] sm:$0xff] %vm4216, %v3239
        %4265 = vst.msk [vmem:[%s111 + $0x180] sm:$0xff] %vm4216, %v3240
        %4266 = vst.msk [vmem:[%s111 + $0x188] sm:$0xff] %vm4216, %v3241
        %4267 = vst.msk [vmem:[%s111 + $0x190] sm:$0xff] %vm4216, %v3242
        %4268 = vst.msk [vmem:[%s111 + $0x198] sm:$0xff] %vm4216, %v3243
        %4269 = vst.msk [vmem:[%s111 + $0x1a0] sm:$0xff] %vm4216, %v3244
        %4270 = vst.msk [vmem:[%s111 + $0x1a8] sm:$0xff] %vm4216, %v3245
        %4271 = vst.msk [vmem:[%s111 + $0x1b0] sm:$0xff] %vm4216, %v3246
        %4272 = vst.msk [vmem:[%s111 + $0x1b8] sm:$0xff] %vm4216, %v3247
        %4273 = vst.msk [vmem:[%s111 + $0x1c0] sm:$0xff] %vm4216, %v3248
        %4274 = vst.msk [vmem:[%s111 + $0x1c8] sm:$0xff] %vm4216, %v3249
        %4275 = vst.msk [vmem:[%s111 + $0x1d0] sm:$0xff] %vm4216, %v3250
        %4276 = vst.msk [vmem:[%s111 + $0x1d8] sm:$0xff] %vm4216, %v3251
        %4277 = vst.msk [vmem:[%s111 + $0x1e0] sm:$0xff] %vm4216, %v3252
        %4278 = vst.msk [vmem:[%s111 + $0x1e8] sm:$0xff] %vm4216, %v3253
        %4279 = vst.msk [vmem:[%s111 + $0x1f0] sm:$0xff] %vm4216, %v3254
        %4280 = vst.msk [vmem:[%s111 + $0x1f8] sm:$0xff] %vm4216, %v3255
        %4281 = vst.msk [vmem:[%s111 + $0x200] sm:$0xff] %vm4216, %v3256
        %4282 = vst.msk [vmem:[%s111 + $0x208] sm:$0xff] %vm4216, %v3257
        %4283 = vst.msk [vmem:[%s111 + $0x210] sm:$0xff] %vm4216, %v3258
        %4284 = vst.msk [vmem:[%s111 + $0x218] sm:$0xff] %vm4216, %v3259
        %4285 = vst.msk [vmem:[%s111 + $0x220] sm:$0xff] %vm4216, %v3260
        %4286 = vst.msk [vmem:[%s111 + $0x228] sm:$0xff] %vm4216, %v3261
        %4287 = vst.msk [vmem:[%s111 + $0x230] sm:$0xff] %vm4216, %v3262
        %4288 = vst.msk [vmem:[%s111 + $0x238] sm:$0xff] %vm4216, %v3263
        %4289 = vst.msk [vmem:[%s111 + $0x240] sm:$0xff] %vm4216, %v3264
        %4290 = vst.msk [vmem:[%s111 + $0x248] sm:$0xff] %vm4216, %v3265
        %4291 = vst.msk [vmem:[%s111 + $0x250] sm:$0xff] %vm4216, %v3266
        %4292 = vst.msk [vmem:[%s111 + $0x258] sm:$0xff] %vm4216, %v3267
        %4293 = vst.msk [vmem:[%s111 + $0x260] sm:$0xff] %vm4216, %v3268
        %4294 = vst.msk [vmem:[%s111 + $0x268] sm:$0xff] %vm4216, %v3269
        %4295 = vst.msk [vmem:[%s111 + $0x270] sm:$0xff] %vm4216, %v3270
        %4296 = vst.msk [vmem:[%s111 + $0x278] sm:$0xff] %vm4216, %v3271
        %4297 = vst.msk [vmem:[%s111 + $0x280] sm:$0xff] %vm4216, %v3272
        %4298 = vst.msk [vmem:[%s111 + $0x288] sm:$0xff] %vm4216, %v3273
        %4299 = vst.msk [vmem:[%s111 + $0x290] sm:$0xff] %vm4216, %v3274
        %4300 = vst.msk [vmem:[%s111 + $0x298] sm:$0xff] %vm4216, %v3275
        %4301 = vst.msk [vmem:[%s111 + $0x2a0] sm:$0xff] %vm4216, %v3276
        %4302 = vst.msk [vmem:[%s111 + $0x2a8] sm:$0xff] %vm4216, %v3277
        %4303 = vst.msk [vmem:[%s111 + $0x2b0] sm:$0xff] %vm4216, %v3278
        %4304 = vst.msk [vmem:[%s111 + $0x2b8] sm:$0xff] %vm4216, %v3279
        %4305 = vst.msk [vmem:[%s111 + $0x2c0] sm:$0xff] %vm4216, %v3280
        %4306 = vst.msk [vmem:[%s111 + $0x2c8] sm:$0xff] %vm4216, %v3281
        %4307 = vst.msk [vmem:[%s111 + $0x2d0] sm:$0xff] %vm4216, %v3282
        %4308 = vst.msk [vmem:[%s111 + $0x2d8] sm:$0xff] %vm4216, %v3283
        %4309 = vst.msk [vmem:[%s111 + $0x2e0] sm:$0xff] %vm4216, %v3284
        %4310 = vst.msk [vmem:[%s111 + $0x2e8] sm:$0xff] %vm4216, %v3285
        %4311 = vst.msk [vmem:[%s111 + $0x2f0] sm:$0xff] %vm4216, %v3286
        %4312 = vst.msk [vmem:[%s111 + $0x2f8] sm:$0xff] %vm4216, %v3287
        %4313 = vst.msk [vmem:[%s111 + $0x300] sm:$0xff] %vm4216, %v3288
        %4314 = vst.msk [vmem:[%s111 + $0x308] sm:$0xff] %vm4216, %v3289
        %4315 = vst.msk [vmem:[%s111 + $0x310] sm:$0xff] %vm4216, %v3290
        %4316 = vst.msk [vmem:[%s111 + $0x318] sm:$0xff] %vm4216, %v3291
        %4317 = vst.msk [vmem:[%s111 + $0x320] sm:$0xff] %vm4216, %v3292
        %4318 = vst.msk [vmem:[%s111 + $0x328] sm:$0xff] %vm4216, %v3293
        %4319 = vst.msk [vmem:[%s111 + $0x330] sm:$0xff] %vm4216, %v3294
        %4320 = vst.msk [vmem:[%s111 + $0x338] sm:$0xff] %vm4216, %v3295
        %4321 = vst.msk [vmem:[%s111 + $0x340] sm:$0xff] %vm4216, %v3296
        %4322 = vst.msk [vmem:[%s111 + $0x348] sm:$0xff] %vm4216, %v3297
        %4323 = vst.msk [vmem:[%s111 + $0x350] sm:$0xff] %vm4216, %v3298
        %4324 = vst.msk [vmem:[%s111 + $0x358] sm:$0xff] %vm4216, %v3299
        %4325 = vst.msk [vmem:[%s111 + $0x360] sm:$0xff] %vm4216, %v3300
        %4326 = vst.msk [vmem:[%s111 + $0x368] sm:$0xff] %vm4216, %v3301
        %4327 = vst.msk [vmem:[%s111 + $0x370] sm:$0xff] %vm4216, %v3302
        %4328 = vst.msk [vmem:[%s111 + $0x378] sm:$0xff] %vm4216, %v3303
        %4329 = vst.msk [vmem:[%s111 + $0x380] sm:$0xff] %vm4216, %v3304
        %4330 = vst.msk [vmem:[%s111 + $0x388] sm:$0xff] %vm4216, %v3305
        %4331 = vst.msk [vmem:[%s111 + $0x390] sm:$0xff] %vm4216, %v3306
        %4332 = vst.msk [vmem:[%s111 + $0x398] sm:$0xff] %vm4216, %v3307
        %4333 = vst.msk [vmem:[%s111 + $0x3a0] sm:$0xff] %vm4216, %v3308
        %4334 = vst.msk [vmem:[%s111 + $0x3a8] sm:$0xff] %vm4216, %v3309
        %4335 = vst.msk [vmem:[%s111 + $0x3b0] sm:$0xff] %vm4216, %v3310
        %4336 = vst.msk [vmem:[%s111 + $0x3b8] sm:$0xff] %vm4216, %v3311
        %4337 = vst.msk [vmem:[%s111 + $0x3c0] sm:$0xff] %vm4216, %v3312
        %4338 = vst.msk [vmem:[%s111 + $0x3c8] sm:$0xff] %vm4216, %v3313
        %4339 = vst.msk [vmem:[%s111 + $0x3d0] sm:$0xff] %vm4216, %v3314
        %4340 = vst.msk [vmem:[%s111 + $0x3d8] sm:$0xff] %vm4216, %v3315
        %4341 = vst.msk [vmem:[%s111 + $0x3e0] sm:$0xff] %vm4216, %v3316
        %4342 = vst.msk [vmem:[%s111 + $0x3e8] sm:$0xff] %vm4216, %v3317
        %4343 = vst.msk [vmem:[%s111 + $0x3f0] sm:$0xff] %vm4216, %v3318
        %4344 = vst.msk [vmem:[%s111 + $0x3f8] sm:$0xff] %vm4216, %v3319
        %4345 = vst.msk [vmem:[%s111 + $0x400] sm:$0xff] %vm4216, %v3320
        %4346 = vst.msk [vmem:[%s111 + $0x408] sm:$0xff] %vm4216, %v3321
        %4347 = vst.msk [vmem:[%s111 + $0x410] sm:$0xff] %vm4216, %v3322
        %4348 = vst.msk [vmem:[%s111 + $0x418] sm:$0xff] %vm4216, %v3323
        %4349 = vst.msk [vmem:[%s111 + $0x420] sm:$0xff] %vm4216, %v3324
        %4350 = vst.msk [vmem:[%s111 + $0x428] sm:$0xff] %vm4216, %v3325
        %4351 = vst.msk [vmem:[%s111 + $0x430] sm:$0xff] %vm4216, %v3326
        %4352 = vst.msk [vmem:[%s111 + $0x438] sm:$0xff] %vm4216, %v3327
        %4353 = vst.msk [vmem:[%s111 + $0x440] sm:$0xff] %vm4216, %v3328
        %4354 = vst.msk [vmem:[%s111 + $0x448] sm:$0xff] %vm4216, %v3329
        %4355 = vst.msk [vmem:[%s111 + $0x450] sm:$0xff] %vm4216, %v3330
        %4356 = vst.msk [vmem:[%s111 + $0x458] sm:$0xff] %vm4216, %v3331
        %4357 = vst.msk [vmem:[%s111 + $0x460] sm:$0xff] %vm4216, %v3332
        %4358 = vst.msk [vmem:[%s111 + $0x468] sm:$0xff] %vm4216, %v3333
        %4359 = vst.msk [vmem:[%s111 + $0x470] sm:$0xff] %vm4216, %v3334
        %4360 = vst.msk [vmem:[%s111 + $0x478] sm:$0xff] %vm4216, %v3335
        %4361 = vst.msk [vmem:[%s111 + $0x480] sm:$0xff] %vm4216, %v3336
        %4362 = vst.msk [vmem:[%s111 + $0x488] sm:$0xff] %vm4216, %v3337
        %4363 = vst.msk [vmem:[%s111 + $0x490] sm:$0xff] %vm4216, %v3338
        %4364 = vst.msk [vmem:[%s111 + $0x498] sm:$0xff] %vm4216, %v3339
        %4365 = vst.msk [vmem:[%s111 + $0x4a0] sm:$0xff] %vm4216, %v3340
        %4366 = vst.msk [vmem:[%s111 + $0x4a8] sm:$0xff] %vm4216, %v3341
        %4367 = vst.msk [vmem:[%s111 + $0x4b0] sm:$0xff] %vm4216, %v3342
        %4368 = vst.msk [vmem:[%s111 + $0x4b8] sm:$0xff] %vm4216, %v3343
        %4369 = vst.msk [vmem:[%s111 + $0x4c0] sm:$0xff] %vm4216, %v3344
        %4370 = vst.msk [vmem:[%s111 + $0x4c8] sm:$0xff] %vm4216, %v3345
        %4371 = vst.msk [vmem:[%s111 + $0x4d0] sm:$0xff] %vm4216, %v3346
        %4372 = vst.msk [vmem:[%s111 + $0x4d8] sm:$0xff] %vm4216, %v3347
        %4373 = vst.msk [vmem:[%s111 + $0x4e0] sm:$0xff] %vm4216, %v3348
        %4374 = vst.msk [vmem:[%s111 + $0x4e8] sm:$0xff] %vm4216, %v3349
        %4375 = vst.msk [vmem:[%s111 + $0x4f0] sm:$0xff] %vm4216, %v3350
        %4376 = vst.msk [vmem:[%s111 + $0x4f8] sm:$0xff] %vm4216, %v3351
        %4377 = vst.msk [vmem:[%s111 + $0x500] sm:$0xff] %vm4216, %v3352
        %4378 = vst.msk [vmem:[%s111 + $0x508] sm:$0xff] %vm4216, %v3353
        %4379 = vst.msk [vmem:[%s111 + $0x510] sm:$0xff] %vm4216, %v3354
        %4380 = vst.msk [vmem:[%s111 + $0x518] sm:$0xff] %vm4216, %v3355
        %4381 = vst.msk [vmem:[%s111 + $0x520] sm:$0xff] %vm4216, %v3356
        %4382 = vst.msk [vmem:[%s111 + $0x528] sm:$0xff] %vm4216, %v3357
        %4383 = vst.msk [vmem:[%s111 + $0x530] sm:$0xff] %vm4216, %v3358
        %4384 = vst.msk [vmem:[%s111 + $0x538] sm:$0xff] %vm4216, %v3359
        %4385 = vst.msk [vmem:[%s111 + $0x540] sm:$0xff] %vm4216, %v3360
        %4386 = vst.msk [vmem:[%s111 + $0x548] sm:$0xff] %vm4216, %v3361
        %4387 = vst.msk [vmem:[%s111 + $0x550] sm:$0xff] %vm4216, %v3362
        %4388 = vst.msk [vmem:[%s111 + $0x558] sm:$0xff] %vm4216, %v3363
        %4389 = vst.msk [vmem:[%s111 + $0x560] sm:$0xff] %vm4216, %v3364
        %4390 = vst.msk [vmem:[%s111 + $0x568] sm:$0xff] %vm4216, %v3365
        %4391 = vst.msk [vmem:[%s111 + $0x570] sm:$0xff] %vm4216, %v3366
        %4392 = vst.msk [vmem:[%s111 + $0x578] sm:$0xff] %vm4216, %v3367
        %4393 = vst.msk [vmem:[%s111 + $0x580] sm:$0xff] %vm4216, %v3368
        %4394 = vst.msk [vmem:[%s111 + $0x588] sm:$0xff] %vm4216, %v3369
        %4395 = vst.msk [vmem:[%s111 + $0x590] sm:$0xff] %vm4216, %v3370
        %4396 = vst.msk [vmem:[%s111 + $0x598] sm:$0xff] %vm4216, %v3371
        %4397 = vst.msk [vmem:[%s111 + $0x5a0] sm:$0xff] %vm4216, %v3372
        %4398 = vst.msk [vmem:[%s111 + $0x5a8] sm:$0xff] %vm4216, %v3373
        %4399 = vst.msk [vmem:[%s111 + $0x5b0] sm:$0xff] %vm4216, %v3374
        %4400 = vst.msk [vmem:[%s111 + $0x5b8] sm:$0xff] %vm4216, %v3375
        %4401 = vst.msk [vmem:[%s111 + $0x5c0] sm:$0xff] %vm4216, %v3376
        %4402 = vst.msk [vmem:[%s111 + $0x5c8] sm:$0xff] %vm4216, %v3377
        %4403 = vst.msk [vmem:[%s111 + $0x5d0] sm:$0xff] %vm4216, %v3378
        %4404 = vst.msk [vmem:[%s111 + $0x5d8] sm:$0xff] %vm4216, %v3379
        %4405 = vst.msk [vmem:[%s111 + $0x5e0] sm:$0xff] %vm4216, %v3380
        %4406 = vst.msk [vmem:[%s111 + $0x5e8] sm:$0xff] %vm4216, %v3381
        %4407 = vst.msk [vmem:[%s111 + $0x5f0] sm:$0xff] %vm4216, %v3382
        %4408 = vst.msk [vmem:[%s111 + $0x5f8] sm:$0xff] %vm4216, %v3383
        %4409 = vst.msk [vmem:[%s111 + $0x600] sm:$0xff] %vm4216, %v3384
        %4410 = vst.msk [vmem:[%s111 + $0x608] sm:$0xff] %vm4216, %v3385
        %4411 = vst.msk [vmem:[%s111 + $0x610] sm:$0xff] %vm4216, %v3386
        %4412 = vst.msk [vmem:[%s111 + $0x618] sm:$0xff] %vm4216, %v3387
        %4413 = vst.msk [vmem:[%s111 + $0x620] sm:$0xff] %vm4216, %v3388
        %4414 = vst.msk [vmem:[%s111 + $0x628] sm:$0xff] %vm4216, %v3389
        %4415 = vst.msk [vmem:[%s111 + $0x630] sm:$0xff] %vm4216, %v3390
        %4416 = vst.msk [vmem:[%s111 + $0x638] sm:$0xff] %vm4216, %v3391
        %4417 = vst.msk [vmem:[%s111 + $0x640] sm:$0xff] %vm4216, %v3392
        %4418 = vst.msk [vmem:[%s111 + $0x648] sm:$0xff] %vm4216, %v3393
        %4419 = vst.msk [vmem:[%s111 + $0x650] sm:$0xff] %vm4216, %v3394
        %4420 = vst.msk [vmem:[%s111 + $0x658] sm:$0xff] %vm4216, %v3395
        %4421 = vst.msk [vmem:[%s111 + $0x660] sm:$0xff] %vm4216, %v3396
        %4422 = vst.msk [vmem:[%s111 + $0x668] sm:$0xff] %vm4216, %v3397
        %4423 = vst.msk [vmem:[%s111 + $0x670] sm:$0xff] %vm4216, %v3398
        %4424 = vst.msk [vmem:[%s111 + $0x678] sm:$0xff] %vm4216, %v3399
        %4425 = vst.msk [vmem:[%s111 + $0x680] sm:$0xff] %vm4216, %v3400
        %4426 = vst.msk [vmem:[%s111 + $0x688] sm:$0xff] %vm4216, %v3401
        %4427 = vst.msk [vmem:[%s111 + $0x690] sm:$0xff] %vm4216, %v3402
        %4428 = vst.msk [vmem:[%s111 + $0x698] sm:$0xff] %vm4216, %v3403
        %4429 = vst.msk [vmem:[%s111 + $0x6a0] sm:$0xff] %vm4216, %v3404
        %4430 = vst.msk [vmem:[%s111 + $0x6a8] sm:$0xff] %vm4216, %v3405
        %4431 = vst.msk [vmem:[%s111 + $0x6b0] sm:$0xff] %vm4216, %v3406
        %4432 = vst.msk [vmem:[%s111 + $0x6b8] sm:$0xff] %vm4216, %v3407
        %4433 = vst.msk [vmem:[%s111 + $0x6c0] sm:$0xff] %vm4216, %v3408
        %4434 = vst.msk [vmem:[%s111 + $0x6c8] sm:$0xff] %vm4216, %v3409
        %4435 = vst.msk [vmem:[%s111 + $0x6d0] sm:$0xff] %vm4216, %v3410
        %4436 = vst.msk [vmem:[%s111 + $0x6d8] sm:$0xff] %vm4216, %v3411
        %4437 = vst.msk [vmem:[%s111 + $0x6e0] sm:$0xff] %vm4216, %v3412
        %4438 = vst.msk [vmem:[%s111 + $0x6e8] sm:$0xff] %vm4216, %v3413
        %4439 = vst.msk [vmem:[%s111 + $0x6f0] sm:$0xff] %vm4216, %v3414
        %4440 = vst.msk [vmem:[%s111 + $0x6f8] sm:$0xff] %vm4216, %v3415
        %4441 = vst.msk [vmem:[%s111 + $0x700] sm:$0xff] %vm4216, %v3416
        %4442 = vst.msk [vmem:[%s111 + $0x708] sm:$0xff] %vm4216, %v3417
        %4443 = vst.msk [vmem:[%s111 + $0x710] sm:$0xff] %vm4216, %v3418
        %4444 = vst.msk [vmem:[%s111 + $0x718] sm:$0xff] %vm4216, %v3419
        %4445 = vst.msk [vmem:[%s111 + $0x720] sm:$0xff] %vm4216, %v3420
        %4446 = vst.msk [vmem:[%s111 + $0x728] sm:$0xff] %vm4216, %v3421
        %4447 = vst.msk [vmem:[%s111 + $0x730] sm:$0xff] %vm4216, %v3422
        %4448 = vst.msk [vmem:[%s111 + $0x738] sm:$0xff] %vm4216, %v3423
        %4449 = vst.msk [vmem:[%s111 + $0x740] sm:$0xff] %vm4216, %v3424
        %4450 = vst.msk [vmem:[%s111 + $0x748] sm:$0xff] %vm4216, %v3425
        %4451 = vst.msk [vmem:[%s111 + $0x750] sm:$0xff] %vm4216, %v3426
        %4452 = vst.msk [vmem:[%s111 + $0x758] sm:$0xff] %vm4216, %v3427
        %4453 = vst.msk [vmem:[%s111 + $0x760] sm:$0xff] %vm4216, %v3428
        %4454 = vst.msk [vmem:[%s111 + $0x768] sm:$0xff] %vm4216, %v3429
        %4455 = vst.msk [vmem:[%s111 + $0x770] sm:$0xff] %vm4216, %v3430
        %4456 = vst.msk [vmem:[%s111 + $0x778] sm:$0xff] %vm4216, %v3431
        %4457 = vst.msk [vmem:[%s111 + $0x780] sm:$0xff] %vm4216, %v3432
        %4458 = vst.msk [vmem:[%s111 + $0x788] sm:$0xff] %vm4216, %v3433
        %4459 = vst.msk [vmem:[%s111 + $0x790] sm:$0xff] %vm4216, %v3434
        %4460 = vst.msk [vmem:[%s111 + $0x798] sm:$0xff] %vm4216, %v3435
        %4461 = vst.msk [vmem:[%s111 + $0x7a0] sm:$0xff] %vm4216, %v3436
        %4462 = vst.msk [vmem:[%s111 + $0x7a8] sm:$0xff] %vm4216, %v3437
        %4463 = vst.msk [vmem:[%s111 + $0x7b0] sm:$0xff] %vm4216, %v3438
        %4464 = vst.msk [vmem:[%s111 + $0x7b8] sm:$0xff] %vm4216, %v3439
        %4465 = vst.msk [vmem:[%s111 + $0x7c0] sm:$0xff] %vm4216, %v3440
        %4466 = vst.msk [vmem:[%s111 + $0x7c8] sm:$0xff] %vm4216, %v3441
        %4467 = vst.msk [vmem:[%s111 + $0x7d0] sm:$0xff] %vm4216, %v3442
        %4468 = vst.msk [vmem:[%s111 + $0x7d8] sm:$0xff] %vm4216, %v3443
        %4469 = vst.msk [vmem:[%s111 + $0x7e0] sm:$0xff] %vm4216, %v3444
        %4470 = vst.msk [vmem:[%s111 + $0x7e8] sm:$0xff] %vm4216, %v3445
        %4471 = vst.msk [vmem:[%s111 + $0x7f0] sm:$0xff] %vm4216, %v3446
        %4472 = vst.msk [vmem:[%s111 + $0x7f8] sm:$0xff] %vm4216, %v3447
        %4473 = vst.msk [vmem:[%s111 + $0x800] sm:$0xff] %vm4216, %v3448
        %4474 = vst.msk [vmem:[%s111 + $0x808] sm:$0xff] %vm4216, %v3449
        %4475 = vst.msk [vmem:[%s111 + $0x810] sm:$0xff] %vm4216, %v3450
        %4476 = vst.msk [vmem:[%s111 + $0x818] sm:$0xff] %vm4216, %v3451
        %4477 = vst.msk [vmem:[%s111 + $0x820] sm:$0xff] %vm4216, %v3452
        %4478 = vst.msk [vmem:[%s111 + $0x828] sm:$0xff] %vm4216, %v3453
        %4479 = vst.msk [vmem:[%s111 + $0x830] sm:$0xff] %vm4216, %v3454
        %4480 = vst.msk [vmem:[%s111 + $0x838] sm:$0xff] %vm4216, %v3455
        %4481 = vst.msk [vmem:[%s111 + $0x840] sm:$0xff] %vm4216, %v3456
        %4482 = vst.msk [vmem:[%s111 + $0x848] sm:$0xff] %vm4216, %v3457
        %4483 = vst.msk [vmem:[%s111 + $0x850] sm:$0xff] %vm4216, %v3458
        %4484 = vst.msk [vmem:[%s111 + $0x858] sm:$0xff] %vm4216, %v3459
        %4485 = vst.msk [vmem:[%s111 + $0x860] sm:$0xff] %vm4216, %v3460
        %4486 = vst.msk [vmem:[%s111 + $0x868] sm:$0xff] %vm4216, %v3461
        %4487 = vst.msk [vmem:[%s111 + $0x870] sm:$0xff] %vm4216, %v3462
        %4488 = vst.msk [vmem:[%s111 + $0x878] sm:$0xff] %vm4216, %v3463
        %4489 = vst.msk [vmem:[%s111 + $0x880] sm:$0xff] %vm4216, %v3464
        %4490 = vst.msk [vmem:[%s111 + $0x888] sm:$0xff] %vm4216, %v3465
        %4491 = vst.msk [vmem:[%s111 + $0x890] sm:$0xff] %vm4216, %v3466
        %4492 = vst.msk [vmem:[%s111 + $0x898] sm:$0xff] %vm4216, %v3467
        %4493 = vst.msk [vmem:[%s111 + $0x8a0] sm:$0xff] %vm4216, %v3468
        %4494 = vst.msk [vmem:[%s111 + $0x8a8] sm:$0xff] %vm4216, %v3469
        %4495 = vst.msk [vmem:[%s111 + $0x8b0] sm:$0xff] %vm4216, %v3470
        %4496 = vst.msk [vmem:[%s111 + $0x8b8] sm:$0xff] %vm4216, %v3471
        %4497 = vst.msk [vmem:[%s111 + $0x8c0] sm:$0xff] %vm4216, %v3472
        %4498 = vst.msk [vmem:[%s111 + $0x8c8] sm:$0xff] %vm4216, %v3473
        %4499 = vst.msk [vmem:[%s111 + $0x8d0] sm:$0xff] %vm4216, %v3474
        %4500 = vst.msk [vmem:[%s111 + $0x8d8] sm:$0xff] %vm4216, %v3475
        %4501 = vst.msk [vmem:[%s111 + $0x8e0] sm:$0xff] %vm4216, %v3476
        %4502 = vst.msk [vmem:[%s111 + $0x8e8] sm:$0xff] %vm4216, %v3477
        %4503 = vst.msk [vmem:[%s111 + $0x8f0] sm:$0xff] %vm4216, %v3478
        %4504 = vst.msk [vmem:[%s111 + $0x8f8] sm:$0xff] %vm4216, %v3479
        %4505 = vst.msk [vmem:[%s111 + $0x900] sm:$0xff] %vm4216, %v3480
        %4506 = vst.msk [vmem:[%s111 + $0x908] sm:$0xff] %vm4216, %v3481
        %4507 = vst.msk [vmem:[%s111 + $0x910] sm:$0xff] %vm4216, %v3482
        %4508 = vst.msk [vmem:[%s111 + $0x918] sm:$0xff] %vm4216, %v3483
        %4509 = vst.msk [vmem:[%s111 + $0x920] sm:$0xff] %vm4216, %v3484
        %4510 = vst.msk [vmem:[%s111 + $0x928] sm:$0xff] %vm4216, %v3485
        %4511 = vst.msk [vmem:[%s111 + $0x930] sm:$0xff] %vm4216, %v3486
        %4512 = vst.msk [vmem:[%s111 + $0x938] sm:$0xff] %vm4216, %v3487
        %4513 = vst.msk [vmem:[%s111 + $0x940] sm:$0xff] %vm4216, %v3488
        %4514 = vst.msk [vmem:[%s111 + $0x948] sm:$0xff] %vm4216, %v3489
        %4515 = vst.msk [vmem:[%s111 + $0x950] sm:$0xff] %vm4216, %v3490
        %4516 = vst.msk [vmem:[%s111 + $0x958] sm:$0xff] %vm4216, %v3491
        %4517 = vst.msk [vmem:[%s111 + $0x960] sm:$0xff] %vm4216, %v3492
        %4518 = vst.msk [vmem:[%s111 + $0x968] sm:$0xff] %vm4216, %v3493
        %4519 = vst.msk [vmem:[%s111 + $0x970] sm:$0xff] %vm4216, %v3494
        %4520 = vst.msk [vmem:[%s111 + $0x978] sm:$0xff] %vm4216, %v3495
        %4521 = vst.msk [vmem:[%s111 + $0x980] sm:$0xff] %vm4216, %v3496
        %4522 = vst.msk [vmem:[%s111 + $0x988] sm:$0xff] %vm4216, %v3497
        %4523 = vst.msk [vmem:[%s111 + $0x990] sm:$0xff] %vm4216, %v3498
        %4524 = vst.msk [vmem:[%s111 + $0x998] sm:$0xff] %vm4216, %v3499
        %4525 = vst.msk [vmem:[%s111 + $0x9a0] sm:$0xff] %vm4216, %v3500
        %4526 = vst.msk [vmem:[%s111 + $0x9a8] sm:$0xff] %vm4216, %v3501
        %4527 = vst.msk [vmem:[%s111 + $0x9b0] sm:$0xff] %vm4216, %v3502
        %4528 = vst.msk [vmem:[%s111 + $0x9b8] sm:$0xff] %vm4216, %v3503
        %4529 = vst.msk [vmem:[%s111 + $0x9c0] sm:$0xff] %vm4216, %v3504
        %4530 = vst.msk [vmem:[%s111 + $0x9c8] sm:$0xff] %vm4216, %v3505
        %4531 = vst.msk [vmem:[%s111 + $0x9d0] sm:$0xff] %vm4216, %v3506
        %4532 = vst.msk [vmem:[%s111 + $0x9d8] sm:$0xff] %vm4216, %v3507
        %4533 = vst.msk [vmem:[%s111 + $0x9e0] sm:$0xff] %vm4216, %v3508
        %4534 = vst.msk [vmem:[%s111 + $0x9e8] sm:$0xff] %vm4216, %v3509
        %4535 = vst.msk [vmem:[%s111 + $0x9f0] sm:$0xff] %vm4216, %v3510
        %4536 = vst.msk [vmem:[%s111 + $0x9f8] sm:$0xff] %vm4216, %v3511
        %4537 = vst.msk [vmem:[%s111 + $0xa00] sm:$0xff] %vm4216, %v3512
        %4538 = vst.msk [vmem:[%s111 + $0xa08] sm:$0xff] %vm4216, %v3513
        %4539 = vst.msk [vmem:[%s111 + $0xa10] sm:$0xff] %vm4216, %v3514
        %4540 = vst.msk [vmem:[%s111 + $0xa18] sm:$0xff] %vm4216, %v3515
        %4541 = vst.msk [vmem:[%s111 + $0xa20] sm:$0xff] %vm4216, %v3516
        %4542 = vst.msk [vmem:[%s111 + $0xa28] sm:$0xff] %vm4216, %v3517
        %4543 = vst.msk [vmem:[%s111 + $0xa30] sm:$0xff] %vm4216, %v3518
        %4544 = vst.msk [vmem:[%s111 + $0xa38] sm:$0xff] %vm4216, %v3519
        %4545 = vst.msk [vmem:[%s111 + $0xa40] sm:$0xff] %vm4216, %v3520
        %4546 = vst.msk [vmem:[%s111 + $0xa48] sm:$0xff] %vm4216, %v3521
        %4547 = vst.msk [vmem:[%s111 + $0xa50] sm:$0xff] %vm4216, %v3522
        %4548 = vst.msk [vmem:[%s111 + $0xa58] sm:$0xff] %vm4216, %v3523
        %4549 = vst.msk [vmem:[%s111 + $0xa60] sm:$0xff] %vm4216, %v3524
        %4550 = vst.msk [vmem:[%s111 + $0xa68] sm:$0xff] %vm4216, %v3525
        %4551 = vst.msk [vmem:[%s111 + $0xa70] sm:$0xff] %vm4216, %v3526
        %4552 = vst.msk [vmem:[%s111 + $0xa78] sm:$0xff] %vm4216, %v3527
        %4553 = vst.msk [vmem:[%s111 + $0xa80] sm:$0xff] %vm4216, %v3528
        %4554 = vst.msk [vmem:[%s111 + $0xa88] sm:$0xff] %vm4216, %v3529
        %4555 = vst.msk [vmem:[%s111 + $0xa90] sm:$0xff] %vm4216, %v3530
        %4556 = vst.msk [vmem:[%s111 + $0xa98] sm:$0xff] %vm4216, %v3531
        %4557 = vst.msk [vmem:[%s111 + $0xaa0] sm:$0xff] %vm4216, %v3532
        %4558 = vst.msk [vmem:[%s111 + $0xaa8] sm:$0xff] %vm4216, %v3533
        %4559 = vst.msk [vmem:[%s111 + $0xab0] sm:$0xff] %vm4216, %v3534
        %4560 = vst.msk [vmem:[%s111 + $0xab8] sm:$0xff] %vm4216, %v3535
        %4561 = vst.msk [vmem:[%s111 + $0xac0] sm:$0xff] %vm4216, %v3536
        %4562 = vst.msk [vmem:[%s111 + $0xac8] sm:$0xff] %vm4216, %v3537
        %4563 = vst.msk [vmem:[%s111 + $0xad0] sm:$0xff] %vm4216, %v3538
        %4564 = vst.msk [vmem:[%s111 + $0xad8] sm:$0xff] %vm4216, %v3539
        %4565 = vst.msk [vmem:[%s111 + $0xae0] sm:$0xff] %vm4216, %v3540
        %4566 = vst.msk [vmem:[%s111 + $0xae8] sm:$0xff] %vm4216, %v3541
        %4567 = vst.msk [vmem:[%s111 + $0xaf0] sm:$0xff] %vm4216, %v3542
        %4568 = vst.msk [vmem:[%s111 + $0xaf8] sm:$0xff] %vm4216, %v3543
        %4569 = vst.msk [vmem:[%s111 + $0xb00] sm:$0xff] %vm4216, %v3544
        %4570 = vst.msk [vmem:[%s111 + $0xb08] sm:$0xff] %vm4216, %v3545
        %4571 = vst.msk [vmem:[%s111 + $0xb10] sm:$0xff] %vm4216, %v3546
        %4572 = vst.msk [vmem:[%s111 + $0xb18] sm:$0xff] %vm4216, %v3547
        %4573 = vst.msk [vmem:[%s111 + $0xb20] sm:$0xff] %vm4216, %v3548
        %4574 = vst.msk [vmem:[%s111 + $0xb28] sm:$0xff] %vm4216, %v3549
        %4575 = vst.msk [vmem:[%s111 + $0xb30] sm:$0xff] %vm4216, %v3550
        %4576 = vst.msk [vmem:[%s111 + $0xb38] sm:$0xff] %vm4216, %v3551
        %4577 = vst.msk [vmem:[%s111 + $0xb40] sm:$0xff] %vm4216, %v3552
        %4578 = vst.msk [vmem:[%s111 + $0xb48] sm:$0xff] %vm4216, %v3553
        %4579 = vst.msk [vmem:[%s111 + $0xb50] sm:$0xff] %vm4216, %v3554
        %4580 = vst.msk [vmem:[%s111 + $0xb58] sm:$0xff] %vm4216, %v3555
        %4581 = vst.msk [vmem:[%s111 + $0xb60] sm:$0xff] %vm4216, %v3556
        %4582 = vst.msk [vmem:[%s111 + $0xb68] sm:$0xff] %vm4216, %v3557
        %4583 = vst.msk [vmem:[%s111 + $0xb70] sm:$0xff] %vm4216, %v3558
        %4584 = vst.msk [vmem:[%s111 + $0xb78] sm:$0xff] %vm4216, %v3559
        %4585 = vst.msk [vmem:[%s111 + $0xb80] sm:$0xff] %vm4216, %v3560
        %4586 = vst.msk [vmem:[%s111 + $0xb88] sm:$0xff] %vm4216, %v3561
        %4587 = vst.msk [vmem:[%s111 + $0xb90] sm:$0xff] %vm4216, %v3562
        %4588 = vst.msk [vmem:[%s111 + $0xb98] sm:$0xff] %vm4216, %v3563
        %4589 = vst.msk [vmem:[%s111 + $0xba0] sm:$0xff] %vm4216, %v3564
        %4590 = vst.msk [vmem:[%s111 + $0xba8] sm:$0xff] %vm4216, %v3565
        %4591 = vst.msk [vmem:[%s111 + $0xbb0] sm:$0xff] %vm4216, %v3566
        %4592 = vst.msk [vmem:[%s111 + $0xbb8] sm:$0xff] %vm4216, %v3567
        %4593 = vst.msk [vmem:[%s111 + $0xbc0] sm:$0xff] %vm4216, %v3568
        %4594 = vst.msk [vmem:[%s111 + $0xbc8] sm:$0xff] %vm4216, %v3569
        %4595 = vst.msk [vmem:[%s111 + $0xbd0] sm:$0xff] %vm4216, %v3570
        %4596 = vst.msk [vmem:[%s111 + $0xbd8] sm:$0xff] %vm4216, %v3571
        %4597 = vst.msk [vmem:[%s111 + $0xbe0] sm:$0xff] %vm4216, %v3572
        %4598 = vst.msk [vmem:[%s111 + $0xbe8] sm:$0xff] %vm4216, %v3573
        %4599 = vst.msk [vmem:[%s111 + $0xbf0] sm:$0xff] %vm4216, %v3574
        %4600 = vst.msk [vmem:[%s111 + $0xbf8] sm:$0xff] %vm4216, %v3575
        %4601 = vst.msk [vmem:[%s111 + $0xc00] sm:$0xff] %vm4216, %v3576
        %4602 = vst.msk [vmem:[%s111 + $0xc08] sm:$0xff] %vm4216, %v3577
        %4603 = vst.msk [vmem:[%s111 + $0xc10] sm:$0xff] %vm4216, %v3578
        %4604 = vst.msk [vmem:[%s111 + $0xc18] sm:$0xff] %vm4216, %v3579
        %4605 = vst.msk [vmem:[%s111 + $0xc20] sm:$0xff] %vm4216, %v3580
        %4606 = vst.msk [vmem:[%s111 + $0xc28] sm:$0xff] %vm4216, %v3581
        %4607 = vst.msk [vmem:[%s111 + $0xc30] sm:$0xff] %vm4216, %v3582
        %4608 = vst.msk [vmem:[%s111 + $0xc38] sm:$0xff] %vm4216, %v3583
        %4609 = vst.msk [vmem:[%s111 + $0xc40] sm:$0xff] %vm4216, %v3584
        %4610 = vst.msk [vmem:[%s111 + $0xc48] sm:$0xff] %vm4216, %v3585
        %4611 = vst.msk [vmem:[%s111 + $0xc50] sm:$0xff] %vm4216, %v3586
        %4612 = vst.msk [vmem:[%s111 + $0xc58] sm:$0xff] %vm4216, %v3587
        %4613 = vst.msk [vmem:[%s111 + $0xc60] sm:$0xff] %vm4216, %v3588
        %4614 = vst.msk [vmem:[%s111 + $0xc68] sm:$0xff] %vm4216, %v3589
        %4615 = vst.msk [vmem:[%s111 + $0xc70] sm:$0xff] %vm4216, %v3590
        %4616 = vst.msk [vmem:[%s111 + $0xc78] sm:$0xff] %vm4216, %v3591
        %4617 = vst.msk [vmem:[%s111 + $0xc80] sm:$0xff] %vm4216, %v3592
        %4618 = vst.msk [vmem:[%s111 + $0xc88] sm:$0xff] %vm4216, %v3593
        %4619 = vst.msk [vmem:[%s111 + $0xc90] sm:$0xff] %vm4216, %v3594
        %4620 = vst.msk [vmem:[%s111 + $0xc98] sm:$0xff] %vm4216, %v3595
        %4621 = vst.msk [vmem:[%s111 + $0xca0] sm:$0xff] %vm4216, %v3596
        %4622 = vst.msk [vmem:[%s111 + $0xca8] sm:$0xff] %vm4216, %v3597
        %4623 = vst.msk [vmem:[%s111 + $0xcb0] sm:$0xff] %vm4216, %v3598
        %4624 = vst.msk [vmem:[%s111 + $0xcb8] sm:$0xff] %vm4216, %v3599
        %4625 = vst.msk [vmem:[%s111 + $0xcc0] sm:$0xff] %vm4216, %v3600
        %4626 = vst.msk [vmem:[%s111 + $0xcc8] sm:$0xff] %vm4216, %v3601
        %4627 = vst.msk [vmem:[%s111 + $0xcd0] sm:$0xff] %vm4216, %v3602
        %4628 = vst.msk [vmem:[%s111 + $0xcd8] sm:$0xff] %vm4216, %v3603
        %4629 = vst.msk [vmem:[%s111 + $0xce0] sm:$0xff] %vm4216, %v3604
        %4630 = vst.msk [vmem:[%s111 + $0xce8] sm:$0xff] %vm4216, %v3605
        %4631 = vst.msk [vmem:[%s111 + $0xcf0] sm:$0xff] %vm4216, %v3606
        %4632 = vst.msk [vmem:[%s111 + $0xcf8] sm:$0xff] %vm4216, %v3607
        %4633 = vst.msk [vmem:[%s111 + $0xd00] sm:$0xff] %vm4216, %v3608
        %4634 = vst.msk [vmem:[%s111 + $0xd08] sm:$0xff] %vm4216, %v3609
        %4635 = vst.msk [vmem:[%s111 + $0xd10] sm:$0xff] %vm4216, %v3610
        %4636 = vst.msk [vmem:[%s111 + $0xd18] sm:$0xff] %vm4216, %v3611
        %4637 = vst.msk [vmem:[%s111 + $0xd20] sm:$0xff] %vm4216, %v3612
        %4638 = vst.msk [vmem:[%s111 + $0xd28] sm:$0xff] %vm4216, %v3613
        %4639 = vst.msk [vmem:[%s111 + $0xd30] sm:$0xff] %vm4216, %v3614
        %4640 = vst.msk [vmem:[%s111 + $0xd38] sm:$0xff] %vm4216, %v3615
        %4641 = vst.msk [vmem:[%s111 + $0xd40] sm:$0xff] %vm4216, %v3616
        %4642 = vst.msk [vmem:[%s111 + $0xd48] sm:$0xff] %vm4216, %v3617
        %4643 = vst.msk [vmem:[%s111 + $0xd50] sm:$0xff] %vm4216, %v3618
        %4644 = vst.msk [vmem:[%s111 + $0xd58] sm:$0xff] %vm4216, %v3619
        %4645 = vst.msk [vmem:[%s111 + $0xd60] sm:$0xff] %vm4216, %v3620
        %4646 = vst.msk [vmem:[%s111 + $0xd68] sm:$0xff] %vm4216, %v3621
        %4647 = vst.msk [vmem:[%s111 + $0xd70] sm:$0xff] %vm4216, %v3622
        %4648 = vst.msk [vmem:[%s111 + $0xd78] sm:$0xff] %vm4216, %v3623
        %4649 = vst.msk [vmem:[%s111 + $0xd80] sm:$0xff] %vm4216, %v3624
        %4650 = vst.msk [vmem:[%s111 + $0xd88] sm:$0xff] %vm4216, %v3625
        %4651 = vst.msk [vmem:[%s111 + $0xd90] sm:$0xff] %vm4216, %v3626
        %4652 = vst.msk [vmem:[%s111 + $0xd98] sm:$0xff] %vm4216, %v3627
        %4653 = vst.msk [vmem:[%s111 + $0xda0] sm:$0xff] %vm4216, %v3628
        %4654 = vst.msk [vmem:[%s111 + $0xda8] sm:$0xff] %vm4216, %v3629
        %4655 = vst.msk [vmem:[%s111 + $0xdb0] sm:$0xff] %vm4216, %v3630
        %4656 = vst.msk [vmem:[%s111 + $0xdb8] sm:$0xff] %vm4216, %v3631
        %4657 = vst.msk [vmem:[%s111 + $0xdc0] sm:$0xff] %vm4216, %v3632
        %4658 = vst.msk [vmem:[%s111 + $0xdc8] sm:$0xff] %vm4216, %v3633
        %4659 = vst.msk [vmem:[%s111 + $0xdd0] sm:$0xff] %vm4216, %v3634
        %4660 = vst.msk [vmem:[%s111 + $0xdd8] sm:$0xff] %vm4216, %v3635
        %4661 = vst.msk [vmem:[%s111 + $0xde0] sm:$0xff] %vm4216, %v3636
        %4662 = vst.msk [vmem:[%s111 + $0xde8] sm:$0xff] %vm4216, %v3637
        %4663 = vst.msk [vmem:[%s111 + $0xdf0] sm:$0xff] %vm4216, %v3638
        %4664 = vst.msk [vmem:[%s111 + $0xdf8] sm:$0xff] %vm4216, %v3639
        %4665 = vst.msk [vmem:[%s111 + $0xe00] sm:$0xff] %vm4216, %v3640
        %4666 = vst.msk [vmem:[%s111 + $0xe08] sm:$0xff] %vm4216, %v3641
        %4667 = vst.msk [vmem:[%s111 + $0xe10] sm:$0xff] %vm4216, %v3642
        %4668 = vst.msk [vmem:[%s111 + $0xe18] sm:$0xff] %vm4216, %v3643
        %4669 = vst.msk [vmem:[%s111 + $0xe20] sm:$0xff] %vm4216, %v3644
        %4670 = vst.msk [vmem:[%s111 + $0xe28] sm:$0xff] %vm4216, %v3645
        %4671 = vst.msk [vmem:[%s111 + $0xe30] sm:$0xff] %vm4216, %v3646
        %4672 = vst.msk [vmem:[%s111 + $0xe38] sm:$0xff] %vm4216, %v3647
        %4673 = vst.msk [vmem:[%s111 + $0xe40] sm:$0xff] %vm4216, %v3648
        %4674 = vst.msk [vmem:[%s111 + $0xe48] sm:$0xff] %vm4216, %v3649
        %4675 = vst.msk [vmem:[%s111 + $0xe50] sm:$0xff] %vm4216, %v3650
        %4676 = vst.msk [vmem:[%s111 + $0xe58] sm:$0xff] %vm4216, %v3651
        %4677 = vst.msk [vmem:[%s111 + $0xe60] sm:$0xff] %vm4216, %v3652
        %4678 = vst.msk [vmem:[%s111 + $0xe68] sm:$0xff] %vm4216, %v3653
        %4679 = vst.msk [vmem:[%s111 + $0xe70] sm:$0xff] %vm4216, %v3654
        %4680 = vst.msk [vmem:[%s111 + $0xe78] sm:$0xff] %vm4216, %v3655
        %4681 = vst.msk [vmem:[%s111 + $0xe80] sm:$0xff] %vm4216, %v3656
        %4682 = vst.msk [vmem:[%s111 + $0xe88] sm:$0xff] %vm4216, %v3657
        %4683 = vst.msk [vmem:[%s111 + $0xe90] sm:$0xff] %vm4216, %v3658
        %4684 = vst.msk [vmem:[%s111 + $0xe98] sm:$0xff] %vm4216, %v3659
        %4685 = vst.msk [vmem:[%s111 + $0xea0] sm:$0xff] %vm4216, %v3660
        %4686 = vst.msk [vmem:[%s111 + $0xea8] sm:$0xff] %vm4216, %v3661
        %4687 = vst.msk [vmem:[%s111 + $0xeb0] sm:$0xff] %vm4216, %v3662
        %4688 = vst.msk [vmem:[%s111 + $0xeb8] sm:$0xff] %vm4216, %v3663
        %4689 = vst.msk [vmem:[%s111 + $0xec0] sm:$0xff] %vm4216, %v3664
        %4690 = vst.msk [vmem:[%s111 + $0xec8] sm:$0xff] %vm4216, %v3665
        %4691 = vst.msk [vmem:[%s111 + $0xed0] sm:$0xff] %vm4216, %v3666
        %4692 = vst.msk [vmem:[%s111 + $0xed8] sm:$0xff] %vm4216, %v3667
        %4693 = vst.msk [vmem:[%s111 + $0xee0] sm:$0xff] %vm4216, %v3668
        %4694 = vst.msk [vmem:[%s111 + $0xee8] sm:$0xff] %vm4216, %v3669
        %4695 = vst.msk [vmem:[%s111 + $0xef0] sm:$0xff] %vm4216, %v3670
        %4696 = vst.msk [vmem:[%s111 + $0xef8] sm:$0xff] %vm4216, %v3671
        %4697 = vst.msk [vmem:[%s111 + $0xf00] sm:$0xff] %vm4216, %v3672
        %4698 = vst.msk [vmem:[%s111 + $0xf08] sm:$0xff] %vm4216, %v3673
        %4699 = vst.msk [vmem:[%s111 + $0xf10] sm:$0xff] %vm4216, %v3674
        %4700 = vst.msk [vmem:[%s111 + $0xf18] sm:$0xff] %vm4216, %v3675
        %4701 = vst.msk [vmem:[%s111 + $0xf20] sm:$0xff] %vm4216, %v3676
        %4702 = vst.msk [vmem:[%s111 + $0xf28] sm:$0xff] %vm4216, %v3677
        %4703 = vst.msk [vmem:[%s111 + $0xf30] sm:$0xff] %vm4216, %v3678
        %4704 = vst.msk [vmem:[%s111 + $0xf38] sm:$0xff] %vm4216, %v3679
        %4705 = vst.msk [vmem:[%s111 + $0xf40] sm:$0xff] %vm4216, %v3680
        %4706 = vst.msk [vmem:[%s111 + $0xf48] sm:$0xff] %vm4216, %v3681
        %4707 = vst.msk [vmem:[%s111 + $0xf50] sm:$0xff] %vm4216, %v3682
        %4708 = vst.msk [vmem:[%s111 + $0xf58] sm:$0xff] %vm4216, %v3683
        %4709 = vst.msk [vmem:[%s111 + $0xf60] sm:$0xff] %vm4216, %v3684
        %4710 = vst.msk [vmem:[%s111 + $0xf68] sm:$0xff] %vm4216, %v3685
        %4711 = vst.msk [vmem:[%s111 + $0xf70] sm:$0xff] %vm4216, %v3686
        %4712 = vst.msk [vmem:[%s111 + $0xf78] sm:$0xff] %vm4216, %v3687
        %4713 = vst.msk [vmem:[%s111 + $0xf80] sm:$0xff] %vm4216, %v3688
        %4714 = vst.msk [vmem:[%s111 + $0xf88] sm:$0xff] %vm4216, %v3689
        %4715 = vst.msk [vmem:[%s111 + $0xf90] sm:$0xff] %vm4216, %v3690
        %4716 = vst.msk [vmem:[%s111 + $0xf98] sm:$0xff] %vm4216, %v3691
        %4717 = vst.msk [vmem:[%s111 + $0xfa0] sm:$0xff] %vm4216, %v3692
        %4718 = vst.msk [vmem:[%s111 + $0xfa8] sm:$0xff] %vm4216, %v3693
        %4719 = vst.msk [vmem:[%s111 + $0xfb0] sm:$0xff] %vm4216, %v3694
        %4720 = vst.msk [vmem:[%s111 + $0xfb8] sm:$0xff] %vm4216, %v3695
        %4721 = vst.msk [vmem:[%s111 + $0xfc0] sm:$0xff] %vm4216, %v3696
        %4722 = vst.msk [vmem:[%s111 + $0xfc8] sm:$0xff] %vm4216, %v3697
        %4723 = vst.msk [vmem:[%s111 + $0xfd0] sm:$0xff] %vm4216, %v3698
        %4724 = vst.msk [vmem:[%s111 + $0xfd8] sm:$0xff] %vm4216, %v3699
        %4725 = vst.msk [vmem:[%s111 + $0xfe0] sm:$0xff] %vm4216, %v3700
        %4726 = vst.msk [vmem:[%s111 + $0xfe8] sm:$0xff] %vm4216, %v3701
        %4727 = vst.msk [vmem:[%s111 + $0xff0] sm:$0xff] %vm4216, %v3702
        %4728 = vst.msk [vmem:[%s111 + $0xff8] sm:$0xff] %vm4216, %v3703
        %4729 = vst.msk [vmem:[%s111 + $0x1000] sm:$0xff] %vm4216, %v3704
        %4730 = vst.msk [vmem:[%s111 + $0x1008] sm:$0xff] %vm4216, %v3705
        %4731 = vst.msk [vmem:[%s111 + $0x1010] sm:$0xff] %vm4216, %v3706
        %4732 = vst.msk [vmem:[%s111 + $0x1018] sm:$0xff] %vm4216, %v3707
        %4733 = vst.msk [vmem:[%s111 + $0x1020] sm:$0xff] %vm4216, %v3708
        %4734 = vst.msk [vmem:[%s111 + $0x1028] sm:$0xff] %vm4216, %v3709
        %4735 = vst.msk [vmem:[%s111 + $0x1030] sm:$0xff] %vm4216, %v3710
        %4736 = vst.msk [vmem:[%s111 + $0x1038] sm:$0xff] %vm4216, %v3711
        %4737 = vst.msk [vmem:[%s111 + $0x1040] sm:$0xff] %vm4216, %v3712
        %4738 = vst.msk [vmem:[%s111 + $0x1048] sm:$0xff] %vm4216, %v3713
        %4739 = vst.msk [vmem:[%s111 + $0x1050] sm:$0xff] %vm4216, %v3714
        %4740 = vst.msk [vmem:[%s111 + $0x1058] sm:$0xff] %vm4216, %v3715
        %4741 = vst.msk [vmem:[%s111 + $0x1060] sm:$0xff] %vm4216, %v3716
        %4742 = vst.msk [vmem:[%s111 + $0x1068] sm:$0xff] %vm4216, %v3717
        %4743 = vst.msk [vmem:[%s111 + $0x1070] sm:$0xff] %vm4216, %v3718
        %4744 = vst.msk [vmem:[%s111 + $0x1078] sm:$0xff] %vm4216, %v3719
        %4745 = vst.msk [vmem:[%s111 + $0x1080] sm:$0xff] %vm4216, %v3720
        %4746 = vst.msk [vmem:[%s111 + $0x1088] sm:$0xff] %vm4216, %v3721
        %4747 = vst.msk [vmem:[%s111 + $0x1090] sm:$0xff] %vm4216, %v3722
        %4748 = vst.msk [vmem:[%s111 + $0x1098] sm:$0xff] %vm4216, %v3723
        %4749 = vst.msk [vmem:[%s111 + $0x10a0] sm:$0xff] %vm4216, %v3724
        %4750 = vst.msk [vmem:[%s111 + $0x10a8] sm:$0xff] %vm4216, %v3725
        %4751 = vst.msk [vmem:[%s111 + $0x10b0] sm:$0xff] %vm4216, %v3726
        %4752 = vst.msk [vmem:[%s111 + $0x10b8] sm:$0xff] %vm4216, %v3727
        %4753 = vst.msk [vmem:[%s111 + $0x10c0] sm:$0xff] %vm4216, %v3728
        %4754 = vst.msk [vmem:[%s111 + $0x10c8] sm:$0xff] %vm4216, %v3729
        %4755 = vst.msk [vmem:[%s111 + $0x10d0] sm:$0xff] %vm4216, %v3730
        %4756 = vst.msk [vmem:[%s111 + $0x10d8] sm:$0xff] %vm4216, %v3731
        %4757 = vst.msk [vmem:[%s111 + $0x10e0] sm:$0xff] %vm4216, %v3732
        %4758 = vst.msk [vmem:[%s111 + $0x10e8] sm:$0xff] %vm4216, %v3733
        %4759 = vst.msk [vmem:[%s111 + $0x10f0] sm:$0xff] %vm4216, %v3734
        %4760 = vst.msk [vmem:[%s111 + $0x10f8] sm:$0xff] %vm4216, %v3735
        %4761 = vst.msk [vmem:[%s111 + $0x1100] sm:$0xff] %vm4216, %v3736
        %4762 = vst.msk [vmem:[%s111 + $0x1108] sm:$0xff] %vm4216, %v3737
        %4763 = vst.msk [vmem:[%s111 + $0x1110] sm:$0xff] %vm4216, %v3738
        %4764 = vst.msk [vmem:[%s111 + $0x1118] sm:$0xff] %vm4216, %v3739
        %4765 = vst.msk [vmem:[%s111 + $0x1120] sm:$0xff] %vm4216, %v3740
        %4766 = vst.msk [vmem:[%s111 + $0x1128] sm:$0xff] %vm4216, %v3741
        %4767 = vst.msk [vmem:[%s111 + $0x1130] sm:$0xff] %vm4216, %v3742
        %4768 = vst.msk [vmem:[%s111 + $0x1138] sm:$0xff] %vm4216, %v3743
        %4769 = vst.msk [vmem:[%s111 + $0x1140] sm:$0xff] %vm4216, %v3744
        %4770 = vst.msk [vmem:[%s111 + $0x1148] sm:$0xff] %vm4216, %v3745
        %4771 = vst.msk [vmem:[%s111 + $0x1150] sm:$0xff] %vm4216, %v3746
        %4772 = vst.msk [vmem:[%s111 + $0x1158] sm:$0xff] %vm4216, %v3747
        %4773 = vst.msk [vmem:[%s111 + $0x1160] sm:$0xff] %vm4216, %v3748
        %4774 = vst.msk [vmem:[%s111 + $0x1168] sm:$0xff] %vm4216, %v3749
        %4775 = vst.msk [vmem:[%s111 + $0x1170] sm:$0xff] %vm4216, %v3750
        %4776 = vst.msk [vmem:[%s111 + $0x1178] sm:$0xff] %vm4216, %v3751
        %4777 = vst.msk [vmem:[%s111 + $0x1180] sm:$0xff] %vm4216, %v3752
        %4778 = vst.msk [vmem:[%s111 + $0x1188] sm:$0xff] %vm4216, %v3753
        %4779 = vst.msk [vmem:[%s111 + $0x1190] sm:$0xff] %vm4216, %v3754
        %4780 = vst.msk [vmem:[%s111 + $0x1198] sm:$0xff] %vm4216, %v3755
        %4781 = vst.msk [vmem:[%s111 + $0x11a0] sm:$0xff] %vm4216, %v3756
        %4782 = vst.msk [vmem:[%s111 + $0x11a8] sm:$0xff] %vm4216, %v3757
        %4783 = vst.msk [vmem:[%s111 + $0x11b0] sm:$0xff] %vm4216, %v3758
        %4784 = vst.msk [vmem:[%s111 + $0x11b8] sm:$0xff] %vm4216, %v3759
        %4785 = vst.msk [vmem:[%s111 + $0x11c0] sm:$0xff] %vm4216, %v3760
        %4786 = vst.msk [vmem:[%s111 + $0x11c8] sm:$0xff] %vm4216, %v3761
        %4787 = vst.msk [vmem:[%s111 + $0x11d0] sm:$0xff] %vm4216, %v3762
        %4788 = vst.msk [vmem:[%s111 + $0x11d8] sm:$0xff] %vm4216, %v3763
        %4789 = vst.msk [vmem:[%s111 + $0x11e0] sm:$0xff] %vm4216, %v3764
        %4790 = vst.msk [vmem:[%s111 + $0x11e8] sm:$0xff] %vm4216, %v3765
        %4791 = vst.msk [vmem:[%s111 + $0x11f0] sm:$0xff] %vm4216, %v3766
        %4792 = vst.msk [vmem:[%s111 + $0x11f8] sm:$0xff] %vm4216, %v3767
        %4793 = vst.msk [vmem:[%s111 + $0x1200] sm:$0xff] %vm4216, %v3768
        %4794 = vst.msk [vmem:[%s111 + $0x1208] sm:$0xff] %vm4216, %v3769
        %4795 = vst.msk [vmem:[%s111 + $0x1210] sm:$0xff] %vm4216, %v3770
        %4796 = vst.msk [vmem:[%s111 + $0x1218] sm:$0xff] %vm4216, %v3771
        %4797 = vst.msk [vmem:[%s111 + $0x1220] sm:$0xff] %vm4216, %v3772
        %4798 = vst.msk [vmem:[%s111 + $0x1228] sm:$0xff] %vm4216, %v3773
        %4799 = vst.msk [vmem:[%s111 + $0x1230] sm:$0xff] %vm4216, %v3774
        %4800 = vst.msk [vmem:[%s111 + $0x1238] sm:$0xff] %vm4216, %v3775
        %4801 = vst.msk [vmem:[%s111 + $0x1240] sm:$0xff] %vm4216, %v3776
        %4802 = vst.msk [vmem:[%s111 + $0x1248] sm:$0xff] %vm4216, %v3777
        %4803 = vst.msk [vmem:[%s111 + $0x1250] sm:$0xff] %vm4216, %v3778
        %4804 = vst.msk [vmem:[%s111 + $0x1258] sm:$0xff] %vm4216, %v3779
        %4805 = vst.msk [vmem:[%s111 + $0x1260] sm:$0xff] %vm4216, %v3780
        %4806 = vst.msk [vmem:[%s111 + $0x1268] sm:$0xff] %vm4216, %v3781
        %4807 = vst.msk [vmem:[%s111 + $0x1270] sm:$0xff] %vm4216, %v3782
        %4808 = vst.msk [vmem:[%s111 + $0x1278] sm:$0xff] %vm4216, %v3783
        %4809 = vst.msk [vmem:[%s111 + $0x1280] sm:$0xff] %vm4216, %v3784
        %4810 = vst.msk [vmem:[%s111 + $0x1288] sm:$0xff] %vm4216, %v3785
        %4811 = vst.msk [vmem:[%s111 + $0x1290] sm:$0xff] %vm4216, %v3786
        %4812 = vst.msk [vmem:[%s111 + $0x1298] sm:$0xff] %vm4216, %v3787
        %4813 = vst.msk [vmem:[%s111 + $0x12a0] sm:$0xff] %vm4216, %v3788
        %4814 = vst.msk [vmem:[%s111 + $0x12a8] sm:$0xff] %vm4216, %v3789
        %4815 = vst.msk [vmem:[%s111 + $0x12b0] sm:$0xff] %vm4216, %v3790
        %4816 = vst.msk [vmem:[%s111 + $0x12b8] sm:$0xff] %vm4216, %v3791
        %4817 = vst.msk [vmem:[%s111 + $0x12c0] sm:$0xff] %vm4216, %v3792
        %4818 = vst.msk [vmem:[%s111 + $0x12c8] sm:$0xff] %vm4216, %v3793
        %4819 = vst.msk [vmem:[%s111 + $0x12d0] sm:$0xff] %vm4216, %v3794
        %4820 = vst.msk [vmem:[%s111 + $0x12d8] sm:$0xff] %vm4216, %v3795
        %4821 = vst.msk [vmem:[%s111 + $0x12e0] sm:$0xff] %vm4216, %v3796
        %4822 = vst.msk [vmem:[%s111 + $0x12e8] sm:$0xff] %vm4216, %v3797
        %4823 = vst.msk [vmem:[%s111 + $0x12f0] sm:$0xff] %vm4216, %v3798
        %4824 = vst.msk [vmem:[%s111 + $0x12f8] sm:$0xff] %vm4216, %v3799
        %4825 = vst.msk [vmem:[%s111 + $0x1300] sm:$0xff] %vm4216, %v3800
        %4826 = vst.msk [vmem:[%s111 + $0x1308] sm:$0xff] %vm4216, %v3801
        %4827 = vst.msk [vmem:[%s111 + $0x1310] sm:$0xff] %vm4216, %v3802
        %4828 = vst.msk [vmem:[%s111 + $0x1318] sm:$0xff] %vm4216, %v3803
        %4829 = vst.msk [vmem:[%s111 + $0x1320] sm:$0xff] %vm4216, %v3804
        %4830 = vst.msk [vmem:[%s111 + $0x1328] sm:$0xff] %vm4216, %v3805
        %4831 = vst.msk [vmem:[%s111 + $0x1330] sm:$0xff] %vm4216, %v3806
        %4832 = vst.msk [vmem:[%s111 + $0x1338] sm:$0xff] %vm4216, %v3807
        %4833 = vst.msk [vmem:[%s111 + $0x1340] sm:$0xff] %vm4216, %v3808
        %4834 = vst.msk [vmem:[%s111 + $0x1348] sm:$0xff] %vm4216, %v3809
        %4835 = vst.msk [vmem:[%s111 + $0x1350] sm:$0xff] %vm4216, %v3810
        %4836 = vst.msk [vmem:[%s111 + $0x1358] sm:$0xff] %vm4216, %v3811
        %4837 = vst.msk [vmem:[%s111 + $0x1360] sm:$0xff] %vm4216, %v3812
        %4838 = vst.msk [vmem:[%s111 + $0x1368] sm:$0xff] %vm4216, %v3813
        %4839 = vst.msk [vmem:[%s111 + $0x1370] sm:$0xff] %vm4216, %v3814
        %4840 = vst.msk [vmem:[%s111 + $0x1378] sm:$0xff] %vm4216, %v3815
        %4841 = vst.msk [vmem:[%s111 + $0x1380] sm:$0xff] %vm4216, %v3816
        %4842 = vst.msk [vmem:[%s111 + $0x1388] sm:$0xff] %vm4216, %v3817
        %4843 = vst.msk [vmem:[%s111 + $0x1390] sm:$0xff] %vm4216, %v3818
        %4844 = vst.msk [vmem:[%s111 + $0x1398] sm:$0xff] %vm4216, %v3819
        %4845 = vst.msk [vmem:[%s111 + $0x13a0] sm:$0xff] %vm4216, %v3820
        %4846 = vst.msk [vmem:[%s111 + $0x13a8] sm:$0xff] %vm4216, %v3821
        %4847 = vst.msk [vmem:[%s111 + $0x13b0] sm:$0xff] %vm4216, %v3822
        %4848 = vst.msk [vmem:[%s111 + $0x13b8] sm:$0xff] %vm4216, %v3823
        %4849 = vst.msk [vmem:[%s111 + $0x13c0] sm:$0xff] %vm4216, %v3824
        %4850 = vst.msk [vmem:[%s111 + $0x13c8] sm:$0xff] %vm4216, %v3825
        %4851 = vst.msk [vmem:[%s111 + $0x13d0] sm:$0xff] %vm4216, %v3826
        %4852 = vst.msk [vmem:[%s111 + $0x13d8] sm:$0xff] %vm4216, %v3827
        %4853 = vst.msk [vmem:[%s111 + $0x13e0] sm:$0xff] %vm4216, %v3828
        %4854 = vst.msk [vmem:[%s111 + $0x13e8] sm:$0xff] %vm4216, %v3829
        %4855 = vst.msk [vmem:[%s111 + $0x13f0] sm:$0xff] %vm4216, %v3830
        %4856 = vst.msk [vmem:[%s111 + $0x13f8] sm:$0xff] %vm4216, %v3831
        %4857 = vst.msk [vmem:[%s111 + $0x1400] sm:$0xff] %vm4216, %v3832
        %4858 = vst.msk [vmem:[%s111 + $0x1408] sm:$0xff] %vm4216, %v3833
        %4859 = vst.msk [vmem:[%s111 + $0x1410] sm:$0xff] %vm4216, %v3834
        %4860 = vst.msk [vmem:[%s111 + $0x1418] sm:$0xff] %vm4216, %v3835
        %4861 = vst.msk [vmem:[%s111 + $0x1420] sm:$0xff] %vm4216, %v3836
        %4862 = vst.msk [vmem:[%s111 + $0x1428] sm:$0xff] %vm4216, %v3837
        %4863 = vst.msk [vmem:[%s111 + $0x1430] sm:$0xff] %vm4216, %v3838
        %4864 = vst.msk [vmem:[%s111 + $0x1438] sm:$0xff] %vm4216, %v3839
        %4865 = vst.msk [vmem:[%s111 + $0x1440] sm:$0xff] %vm4216, %v3840
        %4866 = vst.msk [vmem:[%s111 + $0x1448] sm:$0xff] %vm4216, %v3841
        %4867 = vst.msk [vmem:[%s111 + $0x1450] sm:$0xff] %vm4216, %v3842
        %4868 = vst.msk [vmem:[%s111 + $0x1458] sm:$0xff] %vm4216, %v3843
        %4869 = vst.msk [vmem:[%s111 + $0x1460] sm:$0xff] %vm4216, %v3844
        %4870 = vst.msk [vmem:[%s111 + $0x1468] sm:$0xff] %vm4216, %v3845
        %4871 = vst.msk [vmem:[%s111 + $0x1470] sm:$0xff] %vm4216, %v3846
        %4872 = vst.msk [vmem:[%s111 + $0x1478] sm:$0xff] %vm4216, %v3847
        %4873 = vst.msk [vmem:[%s111 + $0x1480] sm:$0xff] %vm4216, %v3848
        %4874 = vst.msk [vmem:[%s111 + $0x1488] sm:$0xff] %vm4216, %v3849
        %4875 = vst.msk [vmem:[%s111 + $0x1490] sm:$0xff] %vm4216, %v3850
        %4876 = vst.msk [vmem:[%s111 + $0x1498] sm:$0xff] %vm4216, %v3851
        %4877 = vst.msk [vmem:[%s111 + $0x14a0] sm:$0xff] %vm4216, %v3852
        %4878 = vst.msk [vmem:[%s111 + $0x14a8] sm:$0xff] %vm4216, %v3853
        %4879 = vst.msk [vmem:[%s111 + $0x14b0] sm:$0xff] %vm4216, %v3854
        %4880 = vst.msk [vmem:[%s111 + $0x14b8] sm:$0xff] %vm4216, %v3855
        %4881 = vst.msk [vmem:[%s111 + $0x14c0] sm:$0xff] %vm4216, %v3856
        %4882 = vst.msk [vmem:[%s111 + $0x14c8] sm:$0xff] %vm4216, %v3857
        %4883 = vst.msk [vmem:[%s111 + $0x14d0] sm:$0xff] %vm4216, %v3858
        %4884 = vst.msk [vmem:[%s111 + $0x14d8] sm:$0xff] %vm4216, %v3859
        %4885 = vst.msk [vmem:[%s111 + $0x14e0] sm:$0xff] %vm4216, %v3860
        %4886 = vst.msk [vmem:[%s111 + $0x14e8] sm:$0xff] %vm4216, %v3861
        %4887 = vst.msk [vmem:[%s111 + $0x14f0] sm:$0xff] %vm4216, %v3862
        %4888 = vst.msk [vmem:[%s111 + $0x14f8] sm:$0xff] %vm4216, %v3863
        %4889 = vst.msk [vmem:[%s111 + $0x1500] sm:$0xff] %vm4216, %v3864
        %4890 = vst.msk [vmem:[%s111 + $0x1508] sm:$0xff] %vm4216, %v3865
        %4891 = vst.msk [vmem:[%s111 + $0x1510] sm:$0xff] %vm4216, %v3866
        %4892 = vst.msk [vmem:[%s111 + $0x1518] sm:$0xff] %vm4216, %v3867
        %4893 = vst.msk [vmem:[%s111 + $0x1520] sm:$0xff] %vm4216, %v3868
        %4894 = vst.msk [vmem:[%s111 + $0x1528] sm:$0xff] %vm4216, %v3869
        %4895 = vst.msk [vmem:[%s111 + $0x1530] sm:$0xff] %vm4216, %v3870
        %4896 = vst.msk [vmem:[%s111 + $0x1538] sm:$0xff] %vm4216, %v3871
        %4897 = vst.msk [vmem:[%s111 + $0x1540] sm:$0xff] %vm4216, %v3872
        %4898 = vst.msk [vmem:[%s111 + $0x1548] sm:$0xff] %vm4216, %v3873
        %4899 = vst.msk [vmem:[%s111 + $0x1550] sm:$0xff] %vm4216, %v3874
        %4900 = vst.msk [vmem:[%s111 + $0x1558] sm:$0xff] %vm4216, %v3875
        %4901 = vst.msk [vmem:[%s111 + $0x1560] sm:$0xff] %vm4216, %v3876
        %4902 = vst.msk [vmem:[%s111 + $0x1568] sm:$0xff] %vm4216, %v3877
        %4903 = vst.msk [vmem:[%s111 + $0x1570] sm:$0xff] %vm4216, %v3878
        %4904 = vst.msk [vmem:[%s111 + $0x1578] sm:$0xff] %vm4216, %v3879
        %4905 = vst.msk [vmem:[%s111 + $0x1580] sm:$0xff] %vm4216, %v3880
        %4906 = vst.msk [vmem:[%s111 + $0x1588] sm:$0xff] %vm4216, %v3881
        %4907 = vst.msk [vmem:[%s111 + $0x1590] sm:$0xff] %vm4216, %v3882
        %4908 = vst.msk [vmem:[%s111 + $0x1598] sm:$0xff] %vm4216, %v3883
        %4909 = vst.msk [vmem:[%s111 + $0x15a0] sm:$0xff] %vm4216, %v3884
        %4910 = vst.msk [vmem:[%s111 + $0x15a8] sm:$0xff] %vm4216, %v3885
        %4911 = vst.msk [vmem:[%s111 + $0x15b0] sm:$0xff] %vm4216, %v3886
        %4912 = vst.msk [vmem:[%s111 + $0x15b8] sm:$0xff] %vm4216, %v3887
        %4913 = vst.msk [vmem:[%s111 + $0x15c0] sm:$0xff] %vm4216, %v3888
        %4914 = vst.msk [vmem:[%s111 + $0x15c8] sm:$0xff] %vm4216, %v3889
        %4915 = vst.msk [vmem:[%s111 + $0x15d0] sm:$0xff] %vm4216, %v3890
        %4916 = vst.msk [vmem:[%s111 + $0x15d8] sm:$0xff] %vm4216, %v3891
        %4917 = vst.msk [vmem:[%s111 + $0x15e0] sm:$0xff] %vm4216, %v3892
        %4918 = vst.msk [vmem:[%s111 + $0x15e8] sm:$0xff] %vm4216, %v3893
        %4919 = vst.msk [vmem:[%s111 + $0x15f0] sm:$0xff] %vm4216, %v3894
        %4920 = vst.msk [vmem:[%s111 + $0x15f8] sm:$0xff] %vm4216, %v3895
        %4921 = vst.msk [vmem:[%s111 + $0x1600] sm:$0xff] %vm4216, %v3896
        %4922 = vst.msk [vmem:[%s111 + $0x1608] sm:$0xff] %vm4216, %v3897
        %4923 = vst.msk [vmem:[%s111 + $0x1610] sm:$0xff] %vm4216, %v3898
        %4924 = vst.msk [vmem:[%s111 + $0x1618] sm:$0xff] %vm4216, %v3899
        %4925 = vst.msk [vmem:[%s111 + $0x1620] sm:$0xff] %vm4216, %v3900
        %4926 = vst.msk [vmem:[%s111 + $0x1628] sm:$0xff] %vm4216, %v3901
        %4927 = vst.msk [vmem:[%s111 + $0x1630] sm:$0xff] %vm4216, %v3902
        %4928 = vst.msk [vmem:[%s111 + $0x1638] sm:$0xff] %vm4216, %v3903
        %4929 = vst.msk [vmem:[%s111 + $0x1640] sm:$0xff] %vm4216, %v3904
        %4930 = vst.msk [vmem:[%s111 + $0x1648] sm:$0xff] %vm4216, %v3905
        %4931 = vst.msk [vmem:[%s111 + $0x1650] sm:$0xff] %vm4216, %v3906
        %4932 = vst.msk [vmem:[%s111 + $0x1658] sm:$0xff] %vm4216, %v3907
        %4933 = vst.msk [vmem:[%s111 + $0x1660] sm:$0xff] %vm4216, %v3908
        %4934 = vst.msk [vmem:[%s111 + $0x1668] sm:$0xff] %vm4216, %v3909
        %4935 = vst.msk [vmem:[%s111 + $0x1670] sm:$0xff] %vm4216, %v3910
        %4936 = vst.msk [vmem:[%s111 + $0x1678] sm:$0xff] %vm4216, %v3911
        %4937 = vst.msk [vmem:[%s111 + $0x1680] sm:$0xff] %vm4216, %v3912
        %4938 = vst.msk [vmem:[%s111 + $0x1688] sm:$0xff] %vm4216, %v3913
        %4939 = vst.msk [vmem:[%s111 + $0x1690] sm:$0xff] %vm4216, %v3914
        %4940 = vst.msk [vmem:[%s111 + $0x1698] sm:$0xff] %vm4216, %v3915
        %4941 = vst.msk [vmem:[%s111 + $0x16a0] sm:$0xff] %vm4216, %v3916
        %4942 = vst.msk [vmem:[%s111 + $0x16a8] sm:$0xff] %vm4216, %v3917
        %4943 = vst.msk [vmem:[%s111 + $0x16b0] sm:$0xff] %vm4216, %v3918
        %4944 = vst.msk [vmem:[%s111 + $0x16b8] sm:$0xff] %vm4216, %v3919
        %4945 = vst.msk [vmem:[%s111 + $0x16c0] sm:$0xff] %vm4216, %v3920
        %4946 = vst.msk [vmem:[%s111 + $0x16c8] sm:$0xff] %vm4216, %v3921
        %4947 = vst.msk [vmem:[%s111 + $0x16d0] sm:$0xff] %vm4216, %v3922
        %4948 = vst.msk [vmem:[%s111 + $0x16d8] sm:$0xff] %vm4216, %v3923
        %4949 = vst.msk [vmem:[%s111 + $0x16e0] sm:$0xff] %vm4216, %v3924
        %4950 = vst.msk [vmem:[%s111 + $0x16e8] sm:$0xff] %vm4216, %v3925
        %4951 = vst.msk [vmem:[%s111 + $0x16f0] sm:$0xff] %vm4216, %v3926
        %4952 = vst.msk [vmem:[%s111 + $0x16f8] sm:$0xff] %vm4216, %v3927
        %4953 = vst.msk [vmem:[%s111 + $0x1700] sm:$0xff] %vm4216, %v3928
        %4954 = vst.msk [vmem:[%s111 + $0x1708] sm:$0xff] %vm4216, %v3929
        %4955 = vst.msk [vmem:[%s111 + $0x1710] sm:$0xff] %vm4216, %v3930
        %4956 = vst.msk [vmem:[%s111 + $0x1718] sm:$0xff] %vm4216, %v3931
        %4957 = vst.msk [vmem:[%s111 + $0x1720] sm:$0xff] %vm4216, %v3932
        %4958 = vst.msk [vmem:[%s111 + $0x1728] sm:$0xff] %vm4216, %v3933
        %4959 = vst.msk [vmem:[%s111 + $0x1730] sm:$0xff] %vm4216, %v3934
        %4960 = vst.msk [vmem:[%s111 + $0x1738] sm:$0xff] %vm4216, %v3935
        %4961 = vst.msk [vmem:[%s111 + $0x1740] sm:$0xff] %vm4216, %v3936
        %4962 = vst.msk [vmem:[%s111 + $0x1748] sm:$0xff] %vm4216, %v3937
        %4963 = vst.msk [vmem:[%s111 + $0x1750] sm:$0xff] %vm4216, %v3938
        %4964 = vst.msk [vmem:[%s111 + $0x1758] sm:$0xff] %vm4216, %v3939
        %4965 = vst.msk [vmem:[%s111 + $0x1760] sm:$0xff] %vm4216, %v3940
        %4966 = vst.msk [vmem:[%s111 + $0x1768] sm:$0xff] %vm4216, %v3941
        %4967 = vst.msk [vmem:[%s111 + $0x1770] sm:$0xff] %vm4216, %v3942
        %4968 = vst.msk [vmem:[%s111 + $0x1778] sm:$0xff] %vm4216, %v3943
        %4969 = vst.msk [vmem:[%s111 + $0x1780] sm:$0xff] %vm4216, %v3944
        %4970 = vst.msk [vmem:[%s111 + $0x1788] sm:$0xff] %vm4216, %v3945
        %4971 = vst.msk [vmem:[%s111 + $0x1790] sm:$0xff] %vm4216, %v3946
        %4972 = vst.msk [vmem:[%s111 + $0x1798] sm:$0xff] %vm4216, %v3947
        %4973 = vst.msk [vmem:[%s111 + $0x17a0] sm:$0xff] %vm4216, %v3948
        %4974 = vst.msk [vmem:[%s111 + $0x17a8] sm:$0xff] %vm4216, %v3949
        %4975 = vst.msk [vmem:[%s111 + $0x17b0] sm:$0xff] %vm4216, %v3950
        %4976 = vst.msk [vmem:[%s111 + $0x17b8] sm:$0xff] %vm4216, %v3951
        %4977 = vst.msk [vmem:[%s111 + $0x17c0] sm:$0xff] %vm4216, %v3952
        %4978 = vst.msk [vmem:[%s111 + $0x17c8] sm:$0xff] %vm4216, %v3953
        %4979 = vst.msk [vmem:[%s111 + $0x17d0] sm:$0xff] %vm4216, %v3954
        %4980 = vst.msk [vmem:[%s111 + $0x17d8] sm:$0xff] %vm4216, %v3955
        %4981 = vst.msk [vmem:[%s111 + $0x17e0] sm:$0xff] %vm4216, %v3956
        %4982 = vst.msk [vmem:[%s111 + $0x17e8] sm:$0xff] %vm4216, %v3957
        %4983 = vst.msk [vmem:[%s111 + $0x17f0] sm:$0xff] %vm4216, %v3958
        %4984 = vst.msk [vmem:[%s111 + $0x17f8] sm:$0xff] %vm4216, %v3959
        %4985 = vst.msk [vmem:[%s111 + $0x1800] sm:$0xff] %vm4216, %v3960
        %4986 = vst.msk [vmem:[%s111 + $0x1808] sm:$0xff] %vm4216, %v3961
        %4987 = vst.msk [vmem:[%s111 + $0x1810] sm:$0xff] %vm4216, %v3962
        %4988 = vst.msk [vmem:[%s111 + $0x1818] sm:$0xff] %vm4216, %v3963
        %4989 = vst.msk [vmem:[%s111 + $0x1820] sm:$0xff] %vm4216, %v3964
        %4990 = vst.msk [vmem:[%s111 + $0x1828] sm:$0xff] %vm4216, %v3965
        %4991 = vst.msk [vmem:[%s111 + $0x1830] sm:$0xff] %vm4216, %v3966
        %4992 = vst.msk [vmem:[%s111 + $0x1838] sm:$0xff] %vm4216, %v3967
        %4993 = vst.msk [vmem:[%s111 + $0x1840] sm:$0xff] %vm4216, %v3968
        %4994 = vst.msk [vmem:[%s111 + $0x1848] sm:$0xff] %vm4216, %v3969
        %4995 = vst.msk [vmem:[%s111 + $0x1850] sm:$0xff] %vm4216, %v3970
        %4996 = vst.msk [vmem:[%s111 + $0x1858] sm:$0xff] %vm4216, %v3971
        %4997 = vst.msk [vmem:[%s111 + $0x1860] sm:$0xff] %vm4216, %v3972
        %4998 = vst.msk [vmem:[%s111 + $0x1868] sm:$0xff] %vm4216, %v3973
        %4999 = vst.msk [vmem:[%s111 + $0x1870] sm:$0xff] %vm4216, %v3974
        %5000 = vst.msk [vmem:[%s111 + $0x1878] sm:$0xff] %vm4216, %v3975
        %5001 = vst.msk [vmem:[%s111 + $0x1880] sm:$0xff] %vm4216, %v3976
        %5002 = vst.msk [vmem:[%s111 + $0x1888] sm:$0xff] %vm4216, %v3977
        %5003 = vst.msk [vmem:[%s111 + $0x1890] sm:$0xff] %vm4216, %v3978
        %5004 = vst.msk [vmem:[%s111 + $0x1898] sm:$0xff] %vm4216, %v3979
        %5005 = vst.msk [vmem:[%s111 + $0x18a0] sm:$0xff] %vm4216, %v3980
        %5006 = vst.msk [vmem:[%s111 + $0x18a8] sm:$0xff] %vm4216, %v3981
        %5007 = vst.msk [vmem:[%s111 + $0x18b0] sm:$0xff] %vm4216, %v3982
        %5008 = vst.msk [vmem:[%s111 + $0x18b8] sm:$0xff] %vm4216, %v3983
        %5009 = vst.msk [vmem:[%s111 + $0x18c0] sm:$0xff] %vm4216, %v3984
        %5010 = vst.msk [vmem:[%s111 + $0x18c8] sm:$0xff] %vm4216, %v3985
        %5011 = vst.msk [vmem:[%s111 + $0x18d0] sm:$0xff] %vm4216, %v3986
        %5012 = vst.msk [vmem:[%s111 + $0x18d8] sm:$0xff] %vm4216, %v3987
        %5013 = vst.msk [vmem:[%s111 + $0x18e0] sm:$0xff] %vm4216, %v3988
        %5014 = vst.msk [vmem:[%s111 + $0x18e8] sm:$0xff] %vm4216, %v3989
        %5015 = vst.msk [vmem:[%s111 + $0x18f0] sm:$0xff] %vm4216, %v3990
        %5016 = vst.msk [vmem:[%s111 + $0x18f8] sm:$0xff] %vm4216, %v3991
        %5017 = vst.msk [vmem:[%s111 + $0x1900] sm:$0xff] %vm4216, %v3992
        %5018 = vst.msk [vmem:[%s111 + $0x1908] sm:$0xff] %vm4216, %v3993
        %5019 = vst.msk [vmem:[%s111 + $0x1910] sm:$0xff] %vm4216, %v3994
        %5020 = vst.msk [vmem:[%s111 + $0x1918] sm:$0xff] %vm4216, %v3995
        %5021 = vst.msk [vmem:[%s111 + $0x1920] sm:$0xff] %vm4216, %v3996
        %5022 = vst.msk [vmem:[%s111 + $0x1928] sm:$0xff] %vm4216, %v3997
        %5023 = vst.msk [vmem:[%s111 + $0x1930] sm:$0xff] %vm4216, %v3998
        %5024 = vst.msk [vmem:[%s111 + $0x1938] sm:$0xff] %vm4216, %v3999
        %5025 = vst.msk [vmem:[%s111 + $0x1940] sm:$0xff] %vm4216, %v4000
        %5026 = vst.msk [vmem:[%s111 + $0x1948] sm:$0xff] %vm4216, %v4001
        %5027 = vst.msk [vmem:[%s111 + $0x1950] sm:$0xff] %vm4216, %v4002
        %5028 = vst.msk [vmem:[%s111 + $0x1958] sm:$0xff] %vm4216, %v4003
        %5029 = vst.msk [vmem:[%s111 + $0x1960] sm:$0xff] %vm4216, %v4004
        %5030 = vst.msk [vmem:[%s111 + $0x1968] sm:$0xff] %vm4216, %v4005
        %5031 = vst.msk [vmem:[%s111 + $0x1970] sm:$0xff] %vm4216, %v4006
        %5032 = vst.msk [vmem:[%s111 + $0x1978] sm:$0xff] %vm4216, %v4007
        %5033 = vst.msk [vmem:[%s111 + $0x1980] sm:$0xff] %vm4216, %v4008
        %5034 = vst.msk [vmem:[%s111 + $0x1988] sm:$0xff] %vm4216, %v4009
        %5035 = vst.msk [vmem:[%s111 + $0x1990] sm:$0xff] %vm4216, %v4010
        %5036 = vst.msk [vmem:[%s111 + $0x1998] sm:$0xff] %vm4216, %v4011
        %5037 = vst.msk [vmem:[%s111 + $0x19a0] sm:$0xff] %vm4216, %v4012
        %5038 = vst.msk [vmem:[%s111 + $0x19a8] sm:$0xff] %vm4216, %v4013
        %5039 = vst.msk [vmem:[%s111 + $0x19b0] sm:$0xff] %vm4216, %v4014
        %5040 = vst.msk [vmem:[%s111 + $0x19b8] sm:$0xff] %vm4216, %v4015
        %5041 = vst.msk [vmem:[%s111 + $0x19c0] sm:$0xff] %vm4216, %v4016
        %5042 = vst.msk [vmem:[%s111 + $0x19c8] sm:$0xff] %vm4216, %v4017
        %5043 = vst.msk [vmem:[%s111 + $0x19d0] sm:$0xff] %vm4216, %v4018
        %5044 = vst.msk [vmem:[%s111 + $0x19d8] sm:$0xff] %vm4216, %v4019
        %5045 = vst.msk [vmem:[%s111 + $0x19e0] sm:$0xff] %vm4216, %v4020
        %5046 = vst.msk [vmem:[%s111 + $0x19e8] sm:$0xff] %vm4216, %v4021
        %5047 = vst.msk [vmem:[%s111 + $0x19f0] sm:$0xff] %vm4216, %v4022
        %5048 = vst.msk [vmem:[%s111 + $0x19f8] sm:$0xff] %vm4216, %v4023
        %5049 = vst.msk [vmem:[%s111 + $0x1a00] sm:$0xff] %vm4216, %v4024
        %5050 = vst.msk [vmem:[%s111 + $0x1a08] sm:$0xff] %vm4216, %v4025
        %5051 = vst.msk [vmem:[%s111 + $0x1a10] sm:$0xff] %vm4216, %v4026
        %5052 = vst.msk [vmem:[%s111 + $0x1a18] sm:$0xff] %vm4216, %v4027
        %5053 = vst.msk [vmem:[%s111 + $0x1a20] sm:$0xff] %vm4216, %v4028
        %5054 = vst.msk [vmem:[%s111 + $0x1a28] sm:$0xff] %vm4216, %v4029
        %5055 = vst.msk [vmem:[%s111 + $0x1a30] sm:$0xff] %vm4216, %v4030
        %5056 = vst.msk [vmem:[%s111 + $0x1a38] sm:$0xff] %vm4216, %v4031
        %5057 = vst.msk [vmem:[%s111 + $0x1a40] sm:$0xff] %vm4216, %v4032
        %5058 = vst.msk [vmem:[%s111 + $0x1a48] sm:$0xff] %vm4216, %v4033
        %5059 = vst.msk [vmem:[%s111 + $0x1a50] sm:$0xff] %vm4216, %v4034
        %5060 = vst.msk [vmem:[%s111 + $0x1a58] sm:$0xff] %vm4216, %v4035
        %5061 = vst.msk [vmem:[%s111 + $0x1a60] sm:$0xff] %vm4216, %v4036
        %5062 = vst.msk [vmem:[%s111 + $0x1a68] sm:$0xff] %vm4216, %v4037
        %5063 = vst.msk [vmem:[%s111 + $0x1a70] sm:$0xff] %vm4216, %v4038
        %5064 = vst.msk [vmem:[%s111 + $0x1a78] sm:$0xff] %vm4216, %v4039
        %5065 = vst.msk [vmem:[%s111 + $0x1a80] sm:$0xff] %vm4216, %v4040
        %5066 = vst.msk [vmem:[%s111 + $0x1a88] sm:$0xff] %vm4216, %v4041
        %5067 = vst.msk [vmem:[%s111 + $0x1a90] sm:$0xff] %vm4216, %v4042
        %5068 = vst.msk [vmem:[%s111 + $0x1a98] sm:$0xff] %vm4216, %v4043
        %5069 = vst.msk [vmem:[%s111 + $0x1aa0] sm:$0xff] %vm4216, %v4044
        %5070 = vst.msk [vmem:[%s111 + $0x1aa8] sm:$0xff] %vm4216, %v4045
        %5071 = vst.msk [vmem:[%s111 + $0x1ab0] sm:$0xff] %vm4216, %v4046
        %5072 = vst.msk [vmem:[%s111 + $0x1ab8] sm:$0xff] %vm4216, %v4047
        %5073 = vst.msk [vmem:[%s111 + $0x1ac0] sm:$0xff] %vm4216, %v4048
        %5074 = vst.msk [vmem:[%s111 + $0x1ac8] sm:$0xff] %vm4216, %v4049
        %5075 = vst.msk [vmem:[%s111 + $0x1ad0] sm:$0xff] %vm4216, %v4050
        %5076 = vst.msk [vmem:[%s111 + $0x1ad8] sm:$0xff] %vm4216, %v4051
        %5077 = vst.msk [vmem:[%s111 + $0x1ae0] sm:$0xff] %vm4216, %v4052
        %5078 = vst.msk [vmem:[%s111 + $0x1ae8] sm:$0xff] %vm4216, %v4053
        %5079 = vst.msk [vmem:[%s111 + $0x1af0] sm:$0xff] %vm4216, %v4054
        %5080 = vst.msk [vmem:[%s111 + $0x1af8] sm:$0xff] %vm4216, %v4055
        %5081 = vst.msk [vmem:[%s111 + $0x1b00] sm:$0xff] %vm4216, %v4056
        %5082 = vst.msk [vmem:[%s111 + $0x1b08] sm:$0xff] %vm4216, %v4057
        %5083 = vst.msk [vmem:[%s111 + $0x1b10] sm:$0xff] %vm4216, %v4058
        %5084 = vst.msk [vmem:[%s111 + $0x1b18] sm:$0xff] %vm4216, %v4059
        %5085 = vst.msk [vmem:[%s111 + $0x1b20] sm:$0xff] %vm4216, %v4060
        %5086 = vst.msk [vmem:[%s111 + $0x1b28] sm:$0xff] %vm4216, %v4061
        %5087 = vst.msk [vmem:[%s111 + $0x1b30] sm:$0xff] %vm4216, %v4062
        %5088 = vst.msk [vmem:[%s111 + $0x1b38] sm:$0xff] %vm4216, %v4063
        %5089 = vst.msk [vmem:[%s111 + $0x1b40] sm:$0xff] %vm4216, %v4064
        %5090 = vst.msk [vmem:[%s111 + $0x1b48] sm:$0xff] %vm4216, %v4065
        %5091 = vst.msk [vmem:[%s111 + $0x1b50] sm:$0xff] %vm4216, %v4066
        %5092 = vst.msk [vmem:[%s111 + $0x1b58] sm:$0xff] %vm4216, %v4067
        %5093 = vst.msk [vmem:[%s111 + $0x1b60] sm:$0xff] %vm4216, %v4068
        %5094 = vst.msk [vmem:[%s111 + $0x1b68] sm:$0xff] %vm4216, %v4069
        %5095 = vst.msk [vmem:[%s111 + $0x1b70] sm:$0xff] %vm4216, %v4070
        %5096 = vst.msk [vmem:[%s111 + $0x1b78] sm:$0xff] %vm4216, %v4071
        %5097 = vst.msk [vmem:[%s111 + $0x1b80] sm:$0xff] %vm4216, %v4072
        %5098 = vst.msk [vmem:[%s111 + $0x1b88] sm:$0xff] %vm4216, %v4073
        %5099 = vst.msk [vmem:[%s111 + $0x1b90] sm:$0xff] %vm4216, %v4074
        %5100 = vst.msk [vmem:[%s111 + $0x1b98] sm:$0xff] %vm4216, %v4075
        %5101 = vst.msk [vmem:[%s111 + $0x1ba0] sm:$0xff] %vm4216, %v4076
        %5102 = vst.msk [vmem:[%s111 + $0x1ba8] sm:$0xff] %vm4216, %v4077
        %5103 = vst.msk [vmem:[%s111 + $0x1bb0] sm:$0xff] %vm4216, %v4078
        %5104 = vst.msk [vmem:[%s111 + $0x1bb8] sm:$0xff] %vm4216, %v4079
        %5105 = vst.msk [vmem:[%s111 + $0x1bc0] sm:$0xff] %vm4216, %v4080
        %5106 = vst.msk [vmem:[%s111 + $0x1bc8] sm:$0xff] %vm4216, %v4081
        %5107 = vst.msk [vmem:[%s111 + $0x1bd0] sm:$0xff] %vm4216, %v4082
        %5108 = vst.msk [vmem:[%s111 + $0x1bd8] sm:$0xff] %vm4216, %v4083
        %5109 = vst.msk [vmem:[%s111 + $0x1be0] sm:$0xff] %vm4216, %v4084
        %5110 = vst.msk [vmem:[%s111 + $0x1be8] sm:$0xff] %vm4216, %v4085
        %5111 = vst.msk [vmem:[%s111 + $0x1bf0] sm:$0xff] %vm4216, %v4086
        %5112 = vst.msk [vmem:[%s111 + $0x1bf8] sm:$0xff] %vm4216, %v4087
        %5113 = vst.msk [vmem:[%s111 + $0x1c00] sm:$0xff] %vm4216, %v4088
        %5114 = vst.msk [vmem:[%s111 + $0x1c08] sm:$0xff] %vm4216, %v4089
        %5115 = vst.msk [vmem:[%s111 + $0x1c10] sm:$0xff] %vm4216, %v4090
        %5116 = vst.msk [vmem:[%s111 + $0x1c18] sm:$0xff] %vm4216, %v4091
        %5117 = vst.msk [vmem:[%s111 + $0x1c20] sm:$0xff] %vm4216, %v4092
        %5118 = vst.msk [vmem:[%s111 + $0x1c28] sm:$0xff] %vm4216, %v4093
        %5119 = vst.msk [vmem:[%s111 + $0x1c30] sm:$0xff] %vm4216, %v4094
        %5120 = vst.msk [vmem:[%s111 + $0x1c38] sm:$0xff] %vm4216, %v4095
        %5121 = vst.msk [vmem:[%s111 + $0x1c40] sm:$0xff] %vm4216, %v4096
        %5122 = vst.msk [vmem:[%s111 + $0x1c48] sm:$0xff] %vm4216, %v4097
        %5123 = vst.msk [vmem:[%s111 + $0x1c50] sm:$0xff] %vm4216, %v4098
        %5124 = vst.msk [vmem:[%s111 + $0x1c58] sm:$0xff] %vm4216, %v4099
        %5125 = vst.msk [vmem:[%s111 + $0x1c60] sm:$0xff] %vm4216, %v4100
        %5126 = vst.msk [vmem:[%s111 + $0x1c68] sm:$0xff] %vm4216, %v4101
        %5127 = vst.msk [vmem:[%s111 + $0x1c70] sm:$0xff] %vm4216, %v4102
        %5128 = vst.msk [vmem:[%s111 + $0x1c78] sm:$0xff] %vm4216, %v4103
        %5129 = vst.msk [vmem:[%s111 + $0x1c80] sm:$0xff] %vm4216, %v4104
        %5130 = vst.msk [vmem:[%s111 + $0x1c88] sm:$0xff] %vm4216, %v4105
        %5131 = vst.msk [vmem:[%s111 + $0x1c90] sm:$0xff] %vm4216, %v4106
        %5132 = vst.msk [vmem:[%s111 + $0x1c98] sm:$0xff] %vm4216, %v4107
        %5133 = vst.msk [vmem:[%s111 + $0x1ca0] sm:$0xff] %vm4216, %v4108
        %5134 = vst.msk [vmem:[%s111 + $0x1ca8] sm:$0xff] %vm4216, %v4109
        %5135 = vst.msk [vmem:[%s111 + $0x1cb0] sm:$0xff] %vm4216, %v4110
        %5136 = vst.msk [vmem:[%s111 + $0x1cb8] sm:$0xff] %vm4216, %v4111
        %5137 = vst.msk [vmem:[%s111 + $0x1cc0] sm:$0xff] %vm4216, %v4112
        %5138 = vst.msk [vmem:[%s111 + $0x1cc8] sm:$0xff] %vm4216, %v4113
        %5139 = vst.msk [vmem:[%s111 + $0x1cd0] sm:$0xff] %vm4216, %v4114
        %5140 = vst.msk [vmem:[%s111 + $0x1cd8] sm:$0xff] %vm4216, %v4115
        %5141 = vst.msk [vmem:[%s111 + $0x1ce0] sm:$0xff] %vm4216, %v4116
        %5142 = vst.msk [vmem:[%s111 + $0x1ce8] sm:$0xff] %vm4216, %v4117
        %5143 = vst.msk [vmem:[%s111 + $0x1cf0] sm:$0xff] %vm4216, %v4118
        %5144 = vst.msk [vmem:[%s111 + $0x1cf8] sm:$0xff] %vm4216, %v4119
        %5145 = vst.msk [vmem:[%s111 + $0x1d00] sm:$0xff] %vm4216, %v4120
        %5146 = vst.msk [vmem:[%s111 + $0x1d08] sm:$0xff] %vm4216, %v4121
        %5147 = vst.msk [vmem:[%s111 + $0x1d10] sm:$0xff] %vm4216, %v4122
        %5148 = vst.msk [vmem:[%s111 + $0x1d18] sm:$0xff] %vm4216, %v4123
        %5149 = vst.msk [vmem:[%s111 + $0x1d20] sm:$0xff] %vm4216, %v4124
        %5150 = vst.msk [vmem:[%s111 + $0x1d28] sm:$0xff] %vm4216, %v4125
        %5151 = vst.msk [vmem:[%s111 + $0x1d30] sm:$0xff] %vm4216, %v4126
        %5152 = vst.msk [vmem:[%s111 + $0x1d38] sm:$0xff] %vm4216, %v4127
        %5153 = vst.msk [vmem:[%s111 + $0x1d40] sm:$0xff] %vm4216, %v4128
        %5154 = vst.msk [vmem:[%s111 + $0x1d48] sm:$0xff] %vm4216, %v4129
        %5155 = vst.msk [vmem:[%s111 + $0x1d50] sm:$0xff] %vm4216, %v4130
        %5156 = vst.msk [vmem:[%s111 + $0x1d58] sm:$0xff] %vm4216, %v4131
        %5157 = vst.msk [vmem:[%s111 + $0x1d60] sm:$0xff] %vm4216, %v4132
        %5158 = vst.msk [vmem:[%s111 + $0x1d68] sm:$0xff] %vm4216, %v4133
        %5159 = vst.msk [vmem:[%s111 + $0x1d70] sm:$0xff] %vm4216, %v4134
        %5160 = vst.msk [vmem:[%s111 + $0x1d78] sm:$0xff] %vm4216, %v4135
        %5161 = vst.msk [vmem:[%s111 + $0x1d80] sm:$0xff] %vm4216, %v4136
        %5162 = vst.msk [vmem:[%s111 + $0x1d88] sm:$0xff] %vm4216, %v4137
        %5163 = vst.msk [vmem:[%s111 + $0x1d90] sm:$0xff] %vm4216, %v4138
        %5164 = vst.msk [vmem:[%s111 + $0x1d98] sm:$0xff] %vm4216, %v4139
        %5165 = vst.msk [vmem:[%s111 + $0x1da0] sm:$0xff] %vm4216, %v4140
        %5166 = vst.msk [vmem:[%s111 + $0x1da8] sm:$0xff] %vm4216, %v4141
        %5167 = vst.msk [vmem:[%s111 + $0x1db0] sm:$0xff] %vm4216, %v4142
        %5168 = vst.msk [vmem:[%s111 + $0x1db8] sm:$0xff] %vm4216, %v4143
        %5169 = vst.msk [vmem:[%s111 + $0x1dc0] sm:$0xff] %vm4216, %v4144
        %5170 = vst.msk [vmem:[%s111 + $0x1dc8] sm:$0xff] %vm4216, %v4145
        %5171 = vst.msk [vmem:[%s111 + $0x1dd0] sm:$0xff] %vm4216, %v4146
        %5172 = vst.msk [vmem:[%s111 + $0x1dd8] sm:$0xff] %vm4216, %v4147
        %5173 = vst.msk [vmem:[%s111 + $0x1de0] sm:$0xff] %vm4216, %v4148
        %5174 = vst.msk [vmem:[%s111 + $0x1de8] sm:$0xff] %vm4216, %v4149
        %5175 = vst.msk [vmem:[%s111 + $0x1df0] sm:$0xff] %vm4216, %v4150
        %5176 = vst.msk [vmem:[%s111 + $0x1df8] sm:$0xff] %vm4216, %v4151
        %5177 = vst.msk [vmem:[%s111 + $0x1e00] sm:$0xff] %vm4216, %v4152
        %5178 = vst.msk [vmem:[%s111 + $0x1e08] sm:$0xff] %vm4216, %v4153
        %5179 = vst.msk [vmem:[%s111 + $0x1e10] sm:$0xff] %vm4216, %v4154
        %5180 = vst.msk [vmem:[%s111 + $0x1e18] sm:$0xff] %vm4216, %v4155
        %5181 = vst.msk [vmem:[%s111 + $0x1e20] sm:$0xff] %vm4216, %v4156
        %5182 = vst.msk [vmem:[%s111 + $0x1e28] sm:$0xff] %vm4216, %v4157
        %5183 = vst.msk [vmem:[%s111 + $0x1e30] sm:$0xff] %vm4216, %v4158
        %5184 = vst.msk [vmem:[%s111 + $0x1e38] sm:$0xff] %vm4216, %v4159
        %5185 = vst.msk [vmem:[%s111 + $0x1e40] sm:$0xff] %vm4216, %v4160
        %5186 = vst.msk [vmem:[%s111 + $0x1e48] sm:$0xff] %vm4216, %v4161
        %5187 = vst.msk [vmem:[%s111 + $0x1e50] sm:$0xff] %vm4216, %v4162
        %5188 = vst.msk [vmem:[%s111 + $0x1e58] sm:$0xff] %vm4216, %v4163
        %5189 = vst.msk [vmem:[%s111 + $0x1e60] sm:$0xff] %vm4216, %v4164
        %5190 = vst.msk [vmem:[%s111 + $0x1e68] sm:$0xff] %vm4216, %v4165
        %5191 = vst.msk [vmem:[%s111 + $0x1e70] sm:$0xff] %vm4216, %v4166
        %5192 = vst.msk [vmem:[%s111 + $0x1e78] sm:$0xff] %vm4216, %v4167
        %5193 = vst.msk [vmem:[%s111 + $0x1e80] sm:$0xff] %vm4216, %v4168
        %5194 = vst.msk [vmem:[%s111 + $0x1e88] sm:$0xff] %vm4216, %v4169
        %5195 = vst.msk [vmem:[%s111 + $0x1e90] sm:$0xff] %vm4216, %v4170
        %5196 = vst.msk [vmem:[%s111 + $0x1e98] sm:$0xff] %vm4216, %v4171
        %5197 = vst.msk [vmem:[%s111 + $0x1ea0] sm:$0xff] %vm4216, %v4172
        %5198 = vst.msk [vmem:[%s111 + $0x1ea8] sm:$0xff] %vm4216, %v4173
        %5199 = vst.msk [vmem:[%s111 + $0x1eb0] sm:$0xff] %vm4216, %v4174
        %5200 = vst.msk [vmem:[%s111 + $0x1eb8] sm:$0xff] %vm4216, %v4175
        %5201 = vst.msk [vmem:[%s111 + $0x1ec0] sm:$0xff] %vm4216, %v4176
        %5202 = vst.msk [vmem:[%s111 + $0x1ec8] sm:$0xff] %vm4216, %v4177
        %5203 = vst.msk [vmem:[%s111 + $0x1ed0] sm:$0xff] %vm4216, %v4178
        %5204 = vst.msk [vmem:[%s111 + $0x1ed8] sm:$0xff] %vm4216, %v4179
        %5205 = vst.msk [vmem:[%s111 + $0x1ee0] sm:$0xff] %vm4216, %v4180
        %5206 = vst.msk [vmem:[%s111 + $0x1ee8] sm:$0xff] %vm4216, %v4181
        %5207 = vst.msk [vmem:[%s111 + $0x1ef0] sm:$0xff] %vm4216, %v4182
        %5208 = vst.msk [vmem:[%s111 + $0x1ef8] sm:$0xff] %vm4216, %v4183
        %5209 = vst.msk [vmem:[%s111 + $0x1f00] sm:$0xff] %vm4216, %v4184
        %5210 = vst.msk [vmem:[%s111 + $0x1f08] sm:$0xff] %vm4216, %v4185
        %5211 = vst.msk [vmem:[%s111 + $0x1f10] sm:$0xff] %vm4216, %v4186
        %5212 = vst.msk [vmem:[%s111 + $0x1f18] sm:$0xff] %vm4216, %v4187
        %5213 = vst.msk [vmem:[%s111 + $0x1f20] sm:$0xff] %vm4216, %v4188
        %5214 = vst.msk [vmem:[%s111 + $0x1f28] sm:$0xff] %vm4216, %v4189
        %5215 = vst.msk [vmem:[%s111 + $0x1f30] sm:$0xff] %vm4216, %v4190
        %5216 = vst.msk [vmem:[%s111 + $0x1f38] sm:$0xff] %vm4216, %v4191
        %5217 = vst.msk [vmem:[%s111 + $0x1f40] sm:$0xff] %vm4216, %v4192
        %5218 = vst.msk [vmem:[%s111 + $0x1f48] sm:$0xff] %vm4216, %v4193
        %5219 = vst.msk [vmem:[%s111 + $0x1f50] sm:$0xff] %vm4216, %v4194
        %5220 = vst.msk [vmem:[%s111 + $0x1f58] sm:$0xff] %vm4216, %v4195
        %5221 = vst.msk [vmem:[%s111 + $0x1f60] sm:$0xff] %vm4216, %v4196
        %5222 = vst.msk [vmem:[%s111 + $0x1f68] sm:$0xff] %vm4216, %v4197
        %5223 = vst.msk [vmem:[%s111 + $0x1f70] sm:$0xff] %vm4216, %v4198
        %5224 = vst.msk [vmem:[%s111 + $0x1f78] sm:$0xff] %vm4216, %v4199
        %5225 = vst.msk [vmem:[%s111 + $0x1f80] sm:$0xff] %vm4216, %v4200
        %5226 = vst.msk [vmem:[%s111 + $0x1f88] sm:$0xff] %vm4216, %v4201
        %5227 = vst.msk [vmem:[%s111 + $0x1f90] sm:$0xff] %vm4216, %v4202
        %5228 = vst.msk [vmem:[%s111 + $0x1f98] sm:$0xff] %vm4216, %v4203
        %5229 = vst.msk [vmem:[%s111 + $0x1fa0] sm:$0xff] %vm4216, %v4204
        %5230 = vst.msk [vmem:[%s111 + $0x1fa8] sm:$0xff] %vm4216, %v4205
        %5231 = vst.msk [vmem:[%s111 + $0x1fb0] sm:$0xff] %vm4216, %v4206
        %5232 = vst.msk [vmem:[%s111 + $0x1fb8] sm:$0xff] %vm4216, %v4207
        %5233 = vst.msk [vmem:[%s111 + $0x1fc0] sm:$0xff] %vm4216, %v4208
        %5234 = vst.msk [vmem:[%s111 + $0x1fc8] sm:$0xff] %vm4216, %v4209
        %5235 = vst.msk [vmem:[%s111 + $0x1fd0] sm:$0xff] %vm4216, %v4210
        %5236 = vst.msk [vmem:[%s111 + $0x1fd8] sm:$0xff] %vm4216, %v4211
        %5237 = vst.msk [vmem:[%s111 + $0x1fe0] sm:$0xff] %vm4216, %v4212
        %5238 = vst.msk [vmem:[%s111 + $0x1fe8] sm:$0xff] %vm4216, %v4213
        %5239 = vst.msk [vmem:[%s111 + $0x1ff0] sm:$0xff] %vm4216, %v4214
        %5240 = vst.msk [vmem:[%s111 + $0x1ff8] sm:$0xff] %vm4216, %v4215
        %s5241 = smul.u32 1024, %s13
        %p5242 = scmp.lt.s32.totalorder %s5241, 8191
        %s5243 = scalar_select %p5242, %s5241, 8191
        %s5244 = smul.addr %s5243, 8
        %s5245 = scalar_lea.vmem %s1, %s5244
        // Predicated region
        $region29: #{tpu_custom_call.1} parent=23 // pred_check
          %p5246 = pneg %p52
        $region30: #{tpu_custom_call.1} parent=23 // pred_check_branch
          %5248 = sbr.rel (%p5246) target = $region32
        $region31: #{tpu_custom_call.1} parent=23 // pred_region
          %s5249 = smul.u32 1024, %s13
        $region32: #{tpu_custom_call.1} parent=23 // pred_fallthru
          _
      $region24: #{tpu_custom_call.1} parent=5 // pred_fallthru
        _
      %p5250 = scmp.le.s32.totalorder 2, %s8
      // Predicated region
      $region33: #{tpu_custom_call.1} parent=5 // pred_check
        %p5251 = pneg %p5250
      $region34: #{tpu_custom_call.1} parent=5 // pred_check_branch
        %5253 = sbr.rel (%p5251) target = $region36
      $region35: #{tpu_custom_call.1} parent=5 // pred_region
        %s5254 = ssub.s32 %s8, 2
        // Predicated region
        $region37: #{tpu_custom_call.1} parent=35 // pred_check
          %p5255 = pneg %p58
        $region38: #{tpu_custom_call.1} parent=35 // pred_check_branch
          %5257 = sbr.rel (%p5255) target = $region40
        $region39: #{tpu_custom_call.1} parent=35 // pred_region
          %s5258 = smul.u32 1024, %s14
          %p5259 = scmp.lt.s32.totalorder %s5258, 8191
          %s5260 = scalar_select %p5259, %s5258, 8191
          %s5261 = smul.addr %s5260, 8
          %s5262 = scalar_lea.vmem %s1, %s5261
        $region40: #{tpu_custom_call.1} parent=35 // pred_fallthru
          _
      $region36: #{tpu_custom_call.1} parent=5 // pred_fallthru
        _
    $region6: #{tpu_custom_call.1} parent=1 // loop_footer
      %s12 = sadd.s32 1, %s8
    $region7: #{tpu_custom_call.1} parent=1 // loop_footer_branch
      %7 = sbr.rel target = $region3
    $region8: #{tpu_custom_call.1} parent=1 // loop_exit
      _
    %5263 = vsyncpa [#allocation3], 1
    %s5264 = scalar_lea.sflag [#allocation3], 1
    %5265 = vsyncpa %s5264, 1

</llo_original>
